<compile_context>
chip_gen: v5e
topology: v5e:2x2
jax: 0.10.0
libtpu: 0.0.40
codegen_flags: <defaults>
</compile_context>

<pallas_src>
import jax
import jax.numpy as jnp
from jax import lax
from jax.experimental import pallas as pl
from jax.experimental.pallas import tpu as pltpu


KSIZE = 4
BN_EPS = 1e-5
STRIDES = (1, 2, 2, 2, 2)
PADS = (0, 1, 1, 1, 1)


# ----------------------------- tiling helpers -----------------------------

def _choose_tile(n, pref):
    """Largest tile <= pref (halving) that divides n, else the full dim."""
    if n <= pref:
        return n
    t = pref
    while t >= 8:
        if n % t == 0:
            return t
        t //= 2
    return n


def _row_tile(rows, width, itemsize=4, budget=2 * 1024 * 1024):
    pref = budget // max(1, width * itemsize)
    pref = max(8, min(1024, pref))
    pref -= pref % 8
    return _choose_tile(rows, pref)


# ----------------------------- Pallas kernels -----------------------------

def _matmul_kernel(a_ref, b_ref, o_ref, acc_ref):
    @pl.when(pl.program_id(2) == 0)
    def _():
        acc_ref[...] = jnp.zeros_like(acc_ref)

    acc_ref[...] += jnp.dot(a_ref[...], b_ref[...],
                            preferred_element_type=jnp.float32)
    o_ref[...] = acc_ref[...].astype(o_ref.dtype)


def pallas_matmul(a, b):
    """(M, K) bf16 @ (K, N) bf16 -> (M, N) f32 on the MXU, f32 accumulation."""
    M, K = a.shape
    K2, N = b.shape
    assert K == K2
    Mp = ((M + 7) // 8) * 8
    if Mp != M:
        a = jnp.pad(a, ((0, Mp - M), (0, 0)))
    tm = _choose_tile(Mp, 512)
    tn = _choose_tile(N, 512)
    tk = _choose_tile(K, 1024)
    out = pl.pallas_call(
        _matmul_kernel,
        out_shape=jax.ShapeDtypeStruct((Mp, N), jnp.float32),
        grid_spec=pltpu.PrefetchScalarGridSpec(
            num_scalar_prefetch=0,
            grid=(Mp // tm, N // tn, K // tk),
            in_specs=[pl.BlockSpec((tm, tk), lambda i, j, k: (i, k)),
                      pl.BlockSpec((tk, tn), lambda i, j, k: (k, j))],
            out_specs=pl.BlockSpec((tm, tn), lambda i, j, k: (i, j)),
            scratch_shapes=[pltpu.VMEM((tm, tn), jnp.float32)]),
        compiler_params=pltpu.CompilerParams(
            dimension_semantics=("parallel", "parallel", "arbitrary")),
    )(a, b)
    return out[:M] if Mp != M else out


def _bn_partial_kernel(y_ref, sum_ref, sq_ref):
    y = y_ref[...]
    sum_ref[...] = jnp.sum(y, axis=0, keepdims=True)
    sq_ref[...] = jnp.sum(y * y, axis=0, keepdims=True)


def pallas_bn_partials(yd):
    """Per-row-tile partial sum / sum-of-squares; fully parallel grid."""
    n, c = yd.shape
    tr = _row_tile(n, c)
    nb = n // tr
    return pl.pallas_call(
        _bn_partial_kernel,
        out_shape=(jax.ShapeDtypeStruct((nb, 1, c), jnp.float32),
                   jax.ShapeDtypeStruct((nb, 1, c), jnp.float32)),
        grid_spec=pltpu.PrefetchScalarGridSpec(
            num_scalar_prefetch=0,
            grid=(nb,),
            in_specs=[pl.BlockSpec((tr, c), lambda i: (i, 0))],
            out_specs=(pl.BlockSpec((None, 1, c), lambda i: (i, 0, 0)),
                       pl.BlockSpec((None, 1, c), lambda i: (i, 0, 0)))),
        compiler_params=pltpu.CompilerParams(
            dimension_semantics=("parallel",)),
    )(yd)


def _scale_shift_relu_kernel(y_ref, scale_ref, shift_ref, o_ref):
    y = y_ref[...] * scale_ref[...] + shift_ref[...]
    o_ref[...] = jnp.maximum(y, 0.0).astype(o_ref.dtype)


def pallas_scale_shift_relu(yd, scale, shift):
    """Fused BN-apply (precomputed scale/shift) + ReLU + bf16 cast."""
    n, c = yd.shape
    tr = _row_tile(n, c)
    bcast = pl.BlockSpec((1, c), lambda i: (0, 0))
    return pl.pallas_call(
        _scale_shift_relu_kernel,
        out_shape=jax.ShapeDtypeStruct((n, c), jnp.bfloat16),
        grid_spec=pltpu.PrefetchScalarGridSpec(
            num_scalar_prefetch=0,
            grid=(n // tr,),
            in_specs=[pl.BlockSpec((tr, c), lambda i: (i, 0)), bcast, bcast],
            out_specs=pl.BlockSpec((tr, c), lambda i: (i, 0))),
        compiler_params=pltpu.CompilerParams(
            dimension_semantics=("parallel",)),
    )(yd, scale, shift)


def _tanh_kernel(y_ref, o_ref):
    o_ref[...] = jnp.tanh(y_ref[...])


def pallas_tanh(yd):
    n, c = yd.shape
    tr = _row_tile(n, c)
    return pl.pallas_call(
        _tanh_kernel,
        out_shape=jax.ShapeDtypeStruct((n, c), jnp.float32),
        grid_spec=pltpu.PrefetchScalarGridSpec(
            num_scalar_prefetch=0,
            grid=(n // tr,),
            in_specs=[pl.BlockSpec((tr, c), lambda i: (i, 0))],
            out_specs=pl.BlockSpec((tr, c), lambda i: (i, 0))),
        compiler_params=pltpu.CompilerParams(
            dimension_semantics=("parallel",)),
    )(yd)


# ------------------ ConvTranspose2d via col2im matmul ------------------

def _col2im(G, B, H, W, cout, stride, pad, k=KSIZE):
    """Overlap-add of the k*k taps: G (B*H*W, cout*k*k) -> y (B, Ho, Wo, cout).

    TODO(synk): this overlap-add / parity interleave is XLA glue (pure slicing
    plus 4 adds per output pixel); it could be fused with the BN partial-sum
    kernel into a single Pallas col2im pass.
    """
    G6 = G.reshape(B, H, W, cout, k, k)
    if k - 2 * pad == stride:
        # Ho == stride*H: decompose the output by (row, col) parity; every
        # parity plane is a sum of (k/stride)^2 shifted slices of (padded) G.
        PB = k
        Gp = jnp.pad(G6, ((0, 0), (PB, PB), (PB, PB), (0, 0), (0, 0), (0, 0)))
        planes = []
        for r in range(stride):
            row_pl = []
            for t in range(stride):
                acc = jnp.zeros((B, H, W, cout), G.dtype)
                for kh in range(k):
                    if (r + pad - kh) % stride:
                        continue
                    dh = (r + pad - kh) // stride
                    for kw in range(k):
                        if (t + pad - kw) % stride:
                            continue
                        dw = (t + pad - kw) // stride
                        acc = acc + Gp[:, PB + dh:PB + dh + H,
                                       PB + dw:PB + dw + W, :, kh, kw]
                row_pl.append(acc)
            planes.append(jnp.stack(row_pl, axis=0))
        P = jnp.stack(planes, axis=0)                     # (s, s, B, H, W, C)
        y = P.transpose(2, 3, 0, 4, 1, 5).reshape(B, stride * H, stride * W, cout)
    else:
        # first layer: 1x1 spatial input, stride 1, pad 0 -> pure reshape
        assert H == 1 and W == 1 and stride == 1 and pad == 0
        y = G6[:, 0, 0].transpose(0, 2, 3, 1)             # (B, k, k, cout)
    return y


def conv_transpose_layer(h_flat, w_mat, B, H, W, cout, stride, pad):
    G = pallas_matmul(h_flat, w_mat)                      # (B*H*W, cout*16) f32
    y = _col2im(G, B, H, W, cout, stride, pad)
    _, Ho, Wo, _ = y.shape
    return y.reshape(B * Ho * Wo, cout), Ho, Wo


# ------------------ BatchNorm(+ReLU) and Tanh wrappers ------------------

def batchnorm_relu(y_flat, gamma, beta):
    n, c = y_flat.shape
    r = 1
    if c % 128 != 0 and 128 % c == 0 and n % (128 // c) == 0:
        r = 128 // c                                      # lane-dense fold
    yd = y_flat.reshape(n // r, r * c)
    ps, pq = pallas_bn_partials(yd)
    s = ps.sum(axis=(0, 1)).reshape(r, c).sum(axis=0)     # tiny O(C) epilogue
    sq = pq.sum(axis=(0, 1)).reshape(r, c).sum(axis=0)
    mean = s / n
    var = sq / n - mean * mean                            # biased var (train BN)
    invstd = lax.rsqrt(var + BN_EPS)
    scale = gamma * invstd
    shift = beta - mean * scale
    scale_t = jnp.tile(scale, r).reshape(1, r * c)
    shift_t = jnp.tile(shift, r).reshape(1, r * c)
    out = pallas_scale_shift_relu(yd, scale_t, shift_t)
    return out.reshape(n, c)                              # bf16 activations


def tanh_out(y_flat):
    n, c = y_flat.shape
    total = n * c
    width = c
    for w in (2048, 1024, 512, 256, 128):                 # lane-dense reshape
        if total % w == 0 and (total // w) % 8 == 0:
            width = w
            break
    yd = y_flat.reshape(total // width, width)
    return pallas_tanh(yd).reshape(n, c)


# ------------------------- Generator module -------------------------

def init_generator_params(key, latent_size, base_size):
    chans = [latent_size, base_size * 8, base_size * 4,
             base_size * 2, base_size, 3]
    params, raw = [], []
    for li in range(5):
        key, wk = jax.random.split(key)
        cin, cout = chans[li], chans[li + 1]
        w = 0.05 * jax.random.normal(wk, (cin, cout, KSIZE, KSIZE), jnp.float32)
        gamma = jnp.ones((cout,), jnp.float32) if li < 4 else None
        beta = jnp.zeros((cout,), jnp.float32) if li < 4 else None
        params.append(dict(
            cin=cin, cout=cout,
            # hoisted weight re-layout: (Cin, Cout, k, k) -> (Cin, Cout*k*k) bf16
            w_mat=w.reshape(cin, cout * KSIZE * KSIZE).astype(jnp.bfloat16),
            gamma=gamma, beta=beta))
        raw.append((w, gamma, beta))
    return params, raw


def generator_forward(params, x):
    B, cin, H, W = x.shape
    assert (H, W) == (1, 1)
    h = x.reshape(B, cin).astype(jnp.bfloat16)            # flattened NHWC, bf16
    out = None
    for li, p in enumerate(params):
        y_flat, Ho, Wo = conv_transpose_layer(
            h, p["w_mat"], B, H, W, p["cout"], STRIDES[li], PADS[li])
        if li < len(params) - 1:
            h = batchnorm_relu(y_flat, p["gamma"], p["beta"])
        else:
            out = tanh_out(y_flat).reshape(B, Ho, Wo, p["cout"])
            out = out.transpose(0, 3, 1, 2)               # NCHW only at boundary
        H, W = Ho, Wo
    return out


# ------------------------- pure-JAX reference -------------------------

def _bf16_round(a):
    return a.astype(jnp.bfloat16).astype(jnp.float32)


def _ref_conv_transpose(x, w, stride, pad):
    """Definitional ConvTranspose2d (NCHW, PyTorch weight layout, bias=False)."""
    B, cin, H, W = x.shape
    cout, k = w.shape[1], w.shape[2]
    Ho = stride * (H - 1) + k - 2 * pad
    Wo = stride * (W - 1) + k - 2 * pad
    xw = jnp.einsum("bihw,iokl->bohwkl", x, w,
                    precision=lax.Precision.HIGHEST)
    full = jnp.zeros((B, cout, stride * (H - 1) + k, stride * (W - 1) + k),
                     jnp.float32)
    for kh in range(k):
        for kw in range(k):
            full = full.at[:, :, kh:kh + stride * (H - 1) + 1:stride,
                           kw:kw + stride * (W - 1) + 1:stride].add(
                               xw[..., kh, kw])
    return full[:, :, pad:pad + Ho, pad:pad + Wo]


def reference_forward(raw_params, x):
    h = x
    for li, (w, gamma, beta) in enumerate(raw_params):
        y = _ref_conv_transpose(_bf16_round(h), _bf16_round(w),
                                STRIDES[li], PADS[li])
        if li < len(raw_params) - 1:
            mean = jnp.mean(y, axis=(0, 2, 3), keepdims=True)
            var = jnp.mean(y * y, axis=(0, 2, 3), keepdims=True) - mean * mean
            yn = (y - mean) * lax.rsqrt(var + BN_EPS)
            yn = yn * gamma.reshape(1, -1, 1, 1) + beta.reshape(1, -1, 1, 1)
            h = _bf16_round(jnp.maximum(yn, 0.0))
        else:
            h = jnp.tanh(y)
    return h


if __name__ == "__main__":
    # Small shapes consistent with the module: latent_size=16, base_size=8.
    latent_size, base_size, batch = 16, 8, 2
    key = jax.random.PRNGKey(0)
    key, xk = jax.random.split(key)
    x = jax.random.normal(xk, (batch, latent_size, 1, 1), jnp.float32)

    params, raw = init_generator_params(key, latent_size, base_size)

    fwd = jax.jit(lambda inp: generator_forward(params, inp))
    out = jax.block_until_ready(fwd(x))

    assert out.shape == (batch, 3, 64, 64), out.shape
    assert bool(jnp.all(jnp.isfinite(out)))
    assert bool(jnp.all(jnp.abs(out) <= 1.0 + 1e-6))      # tanh range

    ref = reference_forward(raw, x)
    err = float(jnp.max(jnp.abs(out - ref)))
    assert err < 5e-2, f"mismatch vs pure-JAX reference: {err}"
    print("KERNEL_OK")
</pallas_src>

<mosaic_0001>
module attributes {stable_mosaic.version = 11 : i64} {
  func.func @_matmul_kernel(%arg0: i32, %arg1: i32, %arg2: i32, %arg3: memref<8x16xbf16, #tpu.memory_space<vmem>>, %arg4: memref<16x512xbf16, #tpu.memory_space<vmem>>, %arg5: memref<8x512xf32, #tpu.memory_space<vmem>>, %arg6: memref<8x512xf32, #tpu.memory_space<vmem>>) attributes {dimension_semantics = [#tpu.dimension_semantics<parallel>, #tpu.dimension_semantics<parallel>, #tpu.dimension_semantics<arbitrary>], iteration_bounds = array<i64: 1, 2, 1>, scalar_prefetch = 0 : i64, scratch_operands = 1 : i64, tpu.core_type = #tpu.core_type<tc>, window_params = [{transform_indices = @transform_0, window_bounds = array<i64: 8, 16>}, {transform_indices = @transform_1, window_bounds = array<i64: 16, 512>}, {transform_indices = @transform_2, window_bounds = array<i64: 8, 512>}]} {
    %c0_i32 = arith.constant 0 : i32
    %0 = arith.cmpi eq, %arg2, %c0_i32 : i32
    %1 = arith.extui %0 : i1 to i32
    %c0_i32_0 = arith.constant 0 : i32
    %2 = arith.cmpi ne, %1, %c0_i32_0 : i32
    scf.if %2 {
      %cst_12 = arith.constant 0.000000e+00 : f32
      %11 = vector.broadcast %cst_12 : f32 to vector<8x512xf32>
      %c0_13 = arith.constant 0 : index
      %c0_14 = arith.constant 0 : index
      %12 = vector.load %arg6[%c0_13, %c0_14] : memref<8x512xf32, #tpu.memory_space<vmem>>, vector<8x512xf32>
      tpu.vector_store %arg6[%c0_13, %c0_14], %11 {strides = array<i32>} : memref<8x512xf32, #tpu.memory_space<vmem>>, vector<8x512xf32>,
    } else {
    }
    %c0 = arith.constant 0 : index
    %c0_1 = arith.constant 0 : index
    %3 = vector.load %arg6[%c0, %c0_1] : memref<8x512xf32, #tpu.memory_space<vmem>>, vector<8x512xf32>
    %c0_2 = arith.constant 0 : index
    %c0_3 = arith.constant 0 : index
    %4 = vector.load %arg3[%c0_2, %c0_3] : memref<8x16xbf16, #tpu.memory_space<vmem>>, vector<8x16xbf16>
    %c0_4 = arith.constant 0 : index
    %c0_5 = arith.constant 0 : index
    %5 = vector.load %arg4[%c0_4, %c0_5] : memref<16x512xbf16, #tpu.memory_space<vmem>>, vector<16x512xbf16>
    %cst = arith.constant dense<0.000000e+00> : vector<8x512xf32>
    %6 = tpu.matmul %4, %5, %cst {dimension_numbers = #tpu.dot_dimension_numbers<[1], [0], [0], [1], [0, 0, 1, 1], [], []>} : vector<8x16xbf16>, vector<16x512xbf16>, vector<8x512xf32> -> vector<8x512xf32>
    %7 = arith.addf %3, %6 : vector<8x512xf32>
    %c0_6 = arith.constant 0 : index
    %c0_7 = arith.constant 0 : index
    %8 = vector.load %arg6[%c0_6, %c0_7] : memref<8x512xf32, #tpu.memory_space<vmem>>, vector<8x512xf32>
    tpu.vector_store %arg6[%c0_6, %c0_7], %7 {strides = array<i32>} : memref<8x512xf32, #tpu.memory_space<vmem>>, vector<8x512xf32>,
    %c0_8 = arith.constant 0 : index
    %c0_9 = arith.constant 0 : index
    %9 = vector.load %arg6[%c0_8, %c0_9] : memref<8x512xf32, #tpu.memory_space<vmem>>, vector<8x512xf32>
    %c0_10 = arith.constant 0 : index
    %c0_11 = arith.constant 0 : index
    %10 = vector.load %arg5[%c0_10, %c0_11] : memref<8x512xf32, #tpu.memory_space<vmem>>, vector<8x512xf32>
    tpu.vector_store %arg5[%c0_10, %c0_11], %9 {strides = array<i32>} : memref<8x512xf32, #tpu.memory_space<vmem>>, vector<8x512xf32>,
    return
  }
  func.func @transform_0(%arg0: i32, %arg1: i32, %arg2: i32) -> (i32, i32) {
    %c0_i32 = arith.constant 0 : i32
    return %arg0, %arg2 : i32, i32
  }
  func.func @transform_1(%arg0: i32, %arg1: i32, %arg2: i32) -> (i32, i32) {
    %c0_i32 = arith.constant 0 : i32
    return %arg2, %arg1 : i32, i32
  }
  func.func @transform_2(%arg0: i32, %arg1: i32, %arg2: i32) -> (i32, i32) {
    %c0_i32 = arith.constant 0 : i32
    return %arg0, %arg1 : i32, i32
  }
}

module attributes {stable_mosaic.version = 11 : i64} {
  func.func @_bn_partial_kernel(%arg0: i32, %arg1: memref<16x128xf32, #tpu.memory_space<vmem>>, %arg2: memref<1x1x128xf32, #tpu.memory_space<vmem>>, %arg3: memref<1x1x128xf32, #tpu.memory_space<vmem>>) attributes {dimension_semantics = [#tpu.dimension_semantics<parallel>], iteration_bounds = array<i64: 1>, scalar_prefetch = 0 : i64, scratch_operands = 0 : i64, tpu.core_type = #tpu.core_type<tc>, window_params = [{transform_indices = @transform_0, window_bounds = array<i64: 16, 128>}, {transform_indices = @transform_1, window_bounds = array<i64: 1, 1, 128>}, {transform_indices = @transform_2, window_bounds = array<i64: 1, 1, 128>}]} {
    %c0 = arith.constant 0 : index
    %c0_0 = arith.constant 0 : index
    %0 = vector.load %arg1[%c0, %c0_0] : memref<16x128xf32, #tpu.memory_space<vmem>>, vector<16x128xf32>
    %cst = arith.constant dense<0.000000e+00> : vector<128xf32>
    %1 = vector.multi_reduction <add>, %0, %cst [0] : vector<16x128xf32> to vector<128xf32>
    %2 = vector.shape_cast %1 : vector<128xf32> to vector<1x128xf32>
    %c0_1 = arith.constant 0 : index
    %c0_2 = arith.constant 0 : index
    %c0_3 = arith.constant 0 : index
    %3 = vector.load %arg2[%c0_1, %c0_2, %c0_3] : memref<1x1x128xf32, #tpu.memory_space<vmem>>, vector<1x1x128xf32>
    %4 = vector.shape_cast %3 : vector<1x1x128xf32> to vector<1x128xf32>
    %5 = vector.shape_cast %2 : vector<1x128xf32> to vector<1x1x128xf32>
    tpu.vector_store %arg2[%c0_1, %c0_2, %c0_3], %5 {strides = array<i32>} : memref<1x1x128xf32, #tpu.memory_space<vmem>>, vector<1x1x128xf32>,
    %6 = arith.mulf %0, %0 : vector<16x128xf32>
    %cst_4 = arith.constant dense<0.000000e+00> : vector<128xf32>
    %7 = vector.multi_reduction <add>, %6, %cst_4 [0] : vector<16x128xf32> to vector<128xf32>
    %8 = vector.shape_cast %7 : vector<128xf32> to vector<1x128xf32>
    %c0_5 = arith.constant 0 : index
    %c0_6 = arith.constant 0 : index
    %c0_7 = arith.constant 0 : index
    %9 = vector.load %arg3[%c0_5, %c0_6, %c0_7] : memref<1x1x128xf32, #tpu.memory_space<vmem>>, vector<1x1x128xf32>
    %10 = vector.shape_cast %9 : vector<1x1x128xf32> to vector<1x128xf32>
    %11 = vector.shape_cast %8 : vector<1x128xf32> to vector<1x1x128xf32>
    tpu.vector_store %arg3[%c0_5, %c0_6, %c0_7], %11 {strides = array<i32>} : memref<1x1x128xf32, #tpu.memory_space<vmem>>, vector<1x1x128xf32>,
    return
  }
  func.func @transform_0(%arg0: i32) -> (i32, i32) {
    %c0_i32 = arith.constant 0 : i32
    %c0_i32_0 = arith.constant 0 : i32
    return %arg0, %c0_i32 : i32, i32
  }
  func.func @transform_1(%arg0: i32) -> (i32, i32, i32) {
    %c0_i32 = arith.constant 0 : i32
    %c0_i32_0 = arith.constant 0 : i32
    %c0_i32_1 = arith.constant 0 : i32
    return %arg0, %c0_i32, %c0_i32_0 : i32, i32, i32
  }
  func.func @transform_2(%arg0: i32) -> (i32, i32, i32) {
    %c0_i32 = arith.constant 0 : i32
    %c0_i32_0 = arith.constant 0 : i32
    %c0_i32_1 = arith.constant 0 : i32
    return %arg0, %c0_i32, %c0_i32_0 : i32, i32, i32
  }
}

module attributes {stable_mosaic.version = 11 : i64} {
  func.func @_matmul_kernel(%arg0: i32, %arg1: i32, %arg2: i32, %arg3: memref<32x64xbf16, #tpu.memory_space<vmem>>, %arg4: memref<64x512xbf16, #tpu.memory_space<vmem>>, %arg5: memref<32x512xf32, #tpu.memory_space<vmem>>, %arg6: memref<32x512xf32, #tpu.memory_space<vmem>>) attributes {dimension_semantics = [#tpu.dimension_semantics<parallel>, #tpu.dimension_semantics<parallel>, #tpu.dimension_semantics<arbitrary>], iteration_bounds = array<i64: 1, 1, 1>, scalar_prefetch = 0 : i64, scratch_operands = 1 : i64, tpu.core_type = #tpu.core_type<tc>, window_params = [{transform_indices = @transform_0, window_bounds = array<i64: 32, 64>}, {transform_indices = @transform_1, window_bounds = array<i64: 64, 512>}, {transform_indices = @transform_2, window_bounds = array<i64: 32, 512>}]} {
    %c0_i32 = arith.constant 0 : i32
    %0 = arith.cmpi eq, %arg2, %c0_i32 : i32
    %1 = arith.extui %0 : i1 to i32
    %c0_i32_0 = arith.constant 0 : i32
    %2 = arith.cmpi ne, %1, %c0_i32_0 : i32
    scf.if %2 {
      %cst_12 = arith.constant 0.000000e+00 : f32
      %11 = vector.broadcast %cst_12 : f32 to vector<32x512xf32>
      %c0_13 = arith.constant 0 : index
      %c0_14 = arith.constant 0 : index
      %12 = vector.load %arg6[%c0_13, %c0_14] : memref<32x512xf32, #tpu.memory_space<vmem>>, vector<32x512xf32>
      tpu.vector_store %arg6[%c0_13, %c0_14], %11 {strides = array<i32>} : memref<32x512xf32, #tpu.memory_space<vmem>>, vector<32x512xf32>,
    } else {
    }
    %c0 = arith.constant 0 : index
    %c0_1 = arith.constant 0 : index
    %3 = vector.load %arg6[%c0, %c0_1] : memref<32x512xf32, #tpu.memory_space<vmem>>, vector<32x512xf32>
    %c0_2 = arith.constant 0 : index
    %c0_3 = arith.constant 0 : index
    %4 = vector.load %arg3[%c0_2, %c0_3] : memref<32x64xbf16, #tpu.memory_space<vmem>>, vector<32x64xbf16>
    %c0_4 = arith.constant 0 : index
    %c0_5 = arith.constant 0 : index
    %5 = vector.load %arg4[%c0_4, %c0_5] : memref<64x512xbf16, #tpu.memory_space<vmem>>, vector<64x512xbf16>
    %cst = arith.constant dense<0.000000e+00> : vector<32x512xf32>
    %6 = tpu.matmul %4, %5, %cst {dimension_numbers = #tpu.dot_dimension_numbers<[1], [0], [0], [1], [0, 0, 1, 1], [], []>} : vector<32x64xbf16>, vector<64x512xbf16>, vector<32x512xf32> -> vector<32x512xf32>
    %7 = arith.addf %3, %6 : vector<32x512xf32>
    %c0_6 = arith.constant 0 : index
    %c0_7 = arith.constant 0 : index
    %8 = vector.load %arg6[%c0_6, %c0_7] : memref<32x512xf32, #tpu.memory_space<vmem>>, vector<32x512xf32>
    tpu.vector_store %arg6[%c0_6, %c0_7], %7 {strides = array<i32>} : memref<32x512xf32, #tpu.memory_space<vmem>>, vector<32x512xf32>,
    %c0_8 = arith.constant 0 : index
    %c0_9 = arith.constant 0 : index
    %9 = vector.load %arg6[%c0_8, %c0_9] : memref<32x512xf32, #tpu.memory_space<vmem>>, vector<32x512xf32>
    %c0_10 = arith.constant 0 : index
    %c0_11 = arith.constant 0 : index
    %10 = vector.load %arg5[%c0_10, %c0_11] : memref<32x512xf32, #tpu.memory_space<vmem>>, vector<32x512xf32>
    tpu.vector_store %arg5[%c0_10, %c0_11], %9 {strides = array<i32>} : memref<32x512xf32, #tpu.memory_space<vmem>>, vector<32x512xf32>,
    return
  }
  func.func @transform_0(%arg0: i32, %arg1: i32, %arg2: i32) -> (i32, i32) {
    %c0_i32 = arith.constant 0 : i32
    return %arg0, %arg2 : i32, i32
  }
  func.func @transform_1(%arg0: i32, %arg1: i32, %arg2: i32) -> (i32, i32) {
    %c0_i32 = arith.constant 0 : i32
    return %arg2, %arg1 : i32, i32
  }
  func.func @transform_2(%arg0: i32, %arg1: i32, %arg2: i32) -> (i32, i32) {
    %c0_i32 = arith.constant 0 : i32
    return %arg0, %arg1 : i32, i32
  }
}

module attributes {stable_mosaic.version = 11 : i64} {
  func.func @_scale_shift_relu_kernel(%arg0: i32, %arg1: memref<16x128xf32, #tpu.memory_space<vmem>>, %arg2: memref<1x128xf32, #tpu.memory_space<vmem>>, %arg3: memref<1x128xf32, #tpu.memory_space<vmem>>, %arg4: memref<16x128xbf16, #tpu.memory_space<vmem>>) attributes {dimension_semantics = [#tpu.dimension_semantics<parallel>], iteration_bounds = array<i64: 1>, scalar_prefetch = 0 : i64, scratch_operands = 0 : i64, tpu.core_type = #tpu.core_type<tc>, window_params = [{transform_indices = @transform_0, window_bounds = array<i64: 16, 128>}, {pipeline_mode = #tpu.pipeline_mode<synchronous>, transform_indices = @transform_1, window_bounds = array<i64: 1, 128>}, {pipeline_mode = #tpu.pipeline_mode<synchronous>, transform_indices = @transform_2, window_bounds = array<i64: 1, 128>}, {transform_indices = @transform_3, window_bounds = array<i64: 16, 128>}]} {
    %c0 = arith.constant 0 : index
    %c0_0 = arith.constant 0 : index
    %0 = vector.load %arg1[%c0, %c0_0] : memref<16x128xf32, #tpu.memory_space<vmem>>, vector<16x128xf32>
    %c0_1 = arith.constant 0 : index
    %c0_2 = arith.constant 0 : index
    %1 = vector.load %arg2[%c0_1, %c0_2] : memref<1x128xf32, #tpu.memory_space<vmem>>, vector<1x128xf32>
    %2 = vector.broadcast %1 : vector<1x128xf32> to vector<16x128xf32>
    %3 = arith.mulf %0, %2 : vector<16x128xf32>
    %c0_3 = arith.constant 0 : index
    %c0_4 = arith.constant 0 : index
    %4 = vector.load %arg3[%c0_3, %c0_4] : memref<1x128xf32, #tpu.memory_space<vmem>>, vector<1x128xf32>
    %5 = vector.broadcast %4 : vector<1x128xf32> to vector<16x128xf32>
    %6 = arith.addf %3, %5 : vector<16x128xf32>
    %cst = arith.constant 0.000000e+00 : f32
    %7 = vector.broadcast %cst : f32 to vector<16x128xf32>
    %8 = arith.maximumf %6, %7 : vector<16x128xf32>
    %9 = arith.truncf %8 : vector<16x128xf32> to vector<16x128xbf16>
    %c0_5 = arith.constant 0 : index
    %c0_6 = arith.constant 0 : index
    %10 = vector.load %arg4[%c0_5, %c0_6] : memref<16x128xbf16, #tpu.memory_space<vmem>>, vector<16x128xbf16>
    tpu.vector_store %arg4[%c0_5, %c0_6], %9 {strides = array<i32>} : memref<16x128xbf16, #tpu.memory_space<vmem>>, vector<16x128xbf16>,
    return
  }
  func.func @transform_0(%arg0: i32) -> (i32, i32) {
    %c0_i32 = arith.constant 0 : i32
    %c0_i32_0 = arith.constant 0 : i32
    return %arg0, %c0_i32 : i32, i32
  }
  func.func @transform_1(%arg0: i32) -> (i32, i32) {
    %c0_i32 = arith.constant 0 : i32
    %c0_i32_0 = arith.constant 0 : i32
    %c0_i32_1 = arith.constant 0 : i32
    return %c0_i32, %c0_i32_0 : i32, i32
  }
  func.func @transform_2(%arg0: i32) -> (i32, i32) {
    %c0_i32 = arith.constant 0 : i32
    %c0_i32_0 = arith.constant 0 : i32
    %c0_i32_1 = arith.constant 0 : i32
    return %c0_i32, %c0_i32_0 : i32, i32
  }
  func.func @transform_3(%arg0: i32) -> (i32, i32) {
    %c0_i32 = arith.constant 0 : i32
    %c0_i32_0 = arith.constant 0 : i32
    return %arg0, %c0_i32 : i32, i32
  }
}

module attributes {stable_mosaic.version = 11 : i64} {
  func.func @_bn_partial_kernel(%arg0: i32, %arg1: memref<32x128xf32, #tpu.memory_space<vmem>>, %arg2: memref<1x1x128xf32, #tpu.memory_space<vmem>>, %arg3: memref<1x1x128xf32, #tpu.memory_space<vmem>>) attributes {dimension_semantics = [#tpu.dimension_semantics<parallel>], iteration_bounds = array<i64: 1>, scalar_prefetch = 0 : i64, scratch_operands = 0 : i64, tpu.core_type = #tpu.core_type<tc>, window_params = [{transform_indices = @transform_0, window_bounds = array<i64: 32, 128>}, {transform_indices = @transform_1, window_bounds = array<i64: 1, 1, 128>}, {transform_indices = @transform_2, window_bounds = array<i64: 1, 1, 128>}]} {
    %c0 = arith.constant 0 : index
    %c0_0 = arith.constant 0 : index
    %0 = vector.load %arg1[%c0, %c0_0] : memref<32x128xf32, #tpu.memory_space<vmem>>, vector<32x128xf32>
    %cst = arith.constant dense<0.000000e+00> : vector<128xf32>
    %1 = vector.multi_reduction <add>, %0, %cst [0] : vector<32x128xf32> to vector<128xf32>
    %2 = vector.shape_cast %1 : vector<128xf32> to vector<1x128xf32>
    %c0_1 = arith.constant 0 : index
    %c0_2 = arith.constant 0 : index
    %c0_3 = arith.constant 0 : index
    %3 = vector.load %arg2[%c0_1, %c0_2, %c0_3] : memref<1x1x128xf32, #tpu.memory_space<vmem>>, vector<1x1x128xf32>
    %4 = vector.shape_cast %3 : vector<1x1x128xf32> to vector<1x128xf32>
    %5 = vector.shape_cast %2 : vector<1x128xf32> to vector<1x1x128xf32>
    tpu.vector_store %arg2[%c0_1, %c0_2, %c0_3], %5 {strides = array<i32>} : memref<1x1x128xf32, #tpu.memory_space<vmem>>, vector<1x1x128xf32>,
    %6 = arith.mulf %0, %0 : vector<32x128xf32>
    %cst_4 = arith.constant dense<0.000000e+00> : vector<128xf32>
    %7 = vector.multi_reduction <add>, %6, %cst_4 [0] : vector<32x128xf32> to vector<128xf32>
    %8 = vector.shape_cast %7 : vector<128xf32> to vector<1x128xf32>
    %c0_5 = arith.constant 0 : index
    %c0_6 = arith.constant 0 : index
    %c0_7 = arith.constant 0 : index
    %9 = vector.load %arg3[%c0_5, %c0_6, %c0_7] : memref<1x1x128xf32, #tpu.memory_space<vmem>>, vector<1x1x128xf32>
    %10 = vector.shape_cast %9 : vector<1x1x128xf32> to vector<1x128xf32>
    %11 = vector.shape_cast %8 : vector<1x128xf32> to vector<1x1x128xf32>
    tpu.vector_store %arg3[%c0_5, %c0_6, %c0_7], %11 {strides = array<i32>} : memref<1x1x128xf32, #tpu.memory_space<vmem>>, vector<1x1x128xf32>,
    return
  }
  func.func @transform_0(%arg0: i32) -> (i32, i32) {
    %c0_i32 = arith.constant 0 : i32
    %c0_i32_0 = arith.constant 0 : i32
    return %arg0, %c0_i32 : i32, i32
  }
  func.func @transform_1(%arg0: i32) -> (i32, i32, i32) {
    %c0_i32 = arith.constant 0 : i32
    %c0_i32_0 = arith.constant 0 : i32
    %c0_i32_1 = arith.constant 0 : i32
    return %arg0, %c0_i32, %c0_i32_0 : i32, i32, i32
  }
  func.func @transform_2(%arg0: i32) -> (i32, i32, i32) {
    %c0_i32 = arith.constant 0 : i32
    %c0_i32_0 = arith.constant 0 : i32
    %c0_i32_1 = arith.constant 0 : i32
    return %arg0, %c0_i32, %c0_i32_0 : i32, i32, i32
  }
}

module attributes {stable_mosaic.version = 11 : i64} {
  func.func @_scale_shift_relu_kernel(%arg0: i32, %arg1: memref<32x128xf32, #tpu.memory_space<vmem>>, %arg2: memref<1x128xf32, #tpu.memory_space<vmem>>, %arg3: memref<1x128xf32, #tpu.memory_space<vmem>>, %arg4: memref<32x128xbf16, #tpu.memory_space<vmem>>) attributes {dimension_semantics = [#tpu.dimension_semantics<parallel>], iteration_bounds = array<i64: 1>, scalar_prefetch = 0 : i64, scratch_operands = 0 : i64, tpu.core_type = #tpu.core_type<tc>, window_params = [{transform_indices = @transform_0, window_bounds = array<i64: 32, 128>}, {pipeline_mode = #tpu.pipeline_mode<synchronous>, transform_indices = @transform_1, window_bounds = array<i64: 1, 128>}, {pipeline_mode = #tpu.pipeline_mode<synchronous>, transform_indices = @transform_2, window_bounds = array<i64: 1, 128>}, {transform_indices = @transform_3, window_bounds = array<i64: 32, 128>}]} {
    %c0 = arith.constant 0 : index
    %c0_0 = arith.constant 0 : index
    %0 = vector.load %arg1[%c0, %c0_0] : memref<32x128xf32, #tpu.memory_space<vmem>>, vector<32x128xf32>
    %c0_1 = arith.constant 0 : index
    %c0_2 = arith.constant 0 : index
    %1 = vector.load %arg2[%c0_1, %c0_2] : memref<1x128xf32, #tpu.memory_space<vmem>>, vector<1x128xf32>
    %2 = vector.broadcast %1 : vector<1x128xf32> to vector<32x128xf32>
    %3 = arith.mulf %0, %2 : vector<32x128xf32>
    %c0_3 = arith.constant 0 : index
    %c0_4 = arith.constant 0 : index
    %4 = vector.load %arg3[%c0_3, %c0_4] : memref<1x128xf32, #tpu.memory_space<vmem>>, vector<1x128xf32>
    %5 = vector.broadcast %4 : vector<1x128xf32> to vector<32x128xf32>
    %6 = arith.addf %3, %5 : vector<32x128xf32>
    %cst = arith.constant 0.000000e+00 : f32
    %7 = vector.broadcast %cst : f32 to vector<32x128xf32>
    %8 = arith.maximumf %6, %7 : vector<32x128xf32>
    %9 = arith.truncf %8 : vector<32x128xf32> to vector<32x128xbf16>
    %c0_5 = arith.constant 0 : index
    %c0_6 = arith.constant 0 : index
    %10 = vector.load %arg4[%c0_5, %c0_6] : memref<32x128xbf16, #tpu.memory_space<vmem>>, vector<32x128xbf16>
    tpu.vector_store %arg4[%c0_5, %c0_6], %9 {strides = array<i32>} : memref<32x128xbf16, #tpu.memory_space<vmem>>, vector<32x128xbf16>,
    return
  }
  func.func @transform_0(%arg0: i32) -> (i32, i32) {
    %c0_i32 = arith.constant 0 : i32
    %c0_i32_0 = arith.constant 0 : i32
    return %arg0, %c0_i32 : i32, i32
  }
  func.func @transform_1(%arg0: i32) -> (i32, i32) {
    %c0_i32 = arith.constant 0 : i32
    %c0_i32_0 = arith.constant 0 : i32
    %c0_i32_1 = arith.constant 0 : i32
    return %c0_i32, %c0_i32_0 : i32, i32
  }
  func.func @transform_2(%arg0: i32) -> (i32, i32) {
    %c0_i32 = arith.constant 0 : i32
    %c0_i32_0 = arith.constant 0 : i32
    %c0_i32_1 = arith.constant 0 : i32
    return %c0_i32, %c0_i32_0 : i32, i32
  }
  func.func @transform_3(%arg0: i32) -> (i32, i32) {
    %c0_i32 = arith.constant 0 : i32
    %c0_i32_0 = arith.constant 0 : i32
    return %arg0, %c0_i32 : i32, i32
  }
}

module attributes {stable_mosaic.version = 11 : i64} {
  func.func @_matmul_kernel(%arg0: i32, %arg1: i32, %arg2: i32, %arg3: memref<128x32xbf16, #tpu.memory_space<vmem>>, %arg4: memref<32x256xbf16, #tpu.memory_space<vmem>>, %arg5: memref<128x256xf32, #tpu.memory_space<vmem>>, %arg6: memref<128x256xf32, #tpu.memory_space<vmem>>) attributes {dimension_semantics = [#tpu.dimension_semantics<parallel>, #tpu.dimension_semantics<parallel>, #tpu.dimension_semantics<arbitrary>], iteration_bounds = array<i64: 1, 1, 1>, scalar_prefetch = 0 : i64, scratch_operands = 1 : i64, tpu.core_type = #tpu.core_type<tc>, window_params = [{transform_indices = @transform_0, window_bounds = array<i64: 128, 32>}, {transform_indices = @transform_1, window_bounds = array<i64: 32, 256>}, {transform_indices = @transform_2, window_bounds = array<i64: 128, 256>}]} {
    %c0_i32 = arith.constant 0 : i32
    %0 = arith.cmpi eq, %arg2, %c0_i32 : i32
    %1 = arith.extui %0 : i1 to i32
    %c0_i32_0 = arith.constant 0 : i32
    %2 = arith.cmpi ne, %1, %c0_i32_0 : i32
    scf.if %2 {
      %cst_12 = arith.constant 0.000000e+00 : f32
      %11 = vector.broadcast %cst_12 : f32 to vector<128x256xf32>
      %c0_13 = arith.constant 0 : index
      %c0_14 = arith.constant 0 : index
      %12 = vector.load %arg6[%c0_13, %c0_14] : memref<128x256xf32, #tpu.memory_space<vmem>>, vector<128x256xf32>
      tpu.vector_store %arg6[%c0_13, %c0_14], %11 {strides = array<i32>} : memref<128x256xf32, #tpu.memory_space<vmem>>, vector<128x256xf32>,
    } else {
    }
    %c0 = arith.constant 0 : index
    %c0_1 = arith.constant 0 : index
    %3 = vector.load %arg6[%c0, %c0_1] : memref<128x256xf32, #tpu.memory_space<vmem>>, vector<128x256xf32>
    %c0_2 = arith.constant 0 : index
    %c0_3 = arith.constant 0 : index
    %4 = vector.load %arg3[%c0_2, %c0_3] : memref<128x32xbf16, #tpu.memory_space<vmem>>, vector<128x32xbf16>
    %c0_4 = arith.constant 0 : index
    %c0_5 = arith.constant 0 : index
    %5 = vector.load %arg4[%c0_4, %c0_5] : memref<32x256xbf16, #tpu.memory_space<vmem>>, vector<32x256xbf16>
    %cst = arith.constant dense<0.000000e+00> : vector<128x256xf32>
    %6 = tpu.matmul %4, %5, %cst {dimension_numbers = #tpu.dot_dimension_numbers<[1], [0], [0], [1], [0, 0, 1, 1], [], []>} : vector<128x32xbf16>, vector<32x256xbf16>, vector<128x256xf32> -> vector<128x256xf32>
    %7 = arith.addf %3, %6 : vector<128x256xf32>
    %c0_6 = arith.constant 0 : index
    %c0_7 = arith.constant 0 : index
    %8 = vector.load %arg6[%c0_6, %c0_7] : memref<128x256xf32, #tpu.memory_space<vmem>>, vector<128x256xf32>
    tpu.vector_store %arg6[%c0_6, %c0_7], %7 {strides = array<i32>} : memref<128x256xf32, #tpu.memory_space<vmem>>, vector<128x256xf32>,
    %c0_8 = arith.constant 0 : index
    %c0_9 = arith.constant 0 : index
    %9 = vector.load %arg6[%c0_8, %c0_9] : memref<128x256xf32, #tpu.memory_space<vmem>>, vector<128x256xf32>
    %c0_10 = arith.constant 0 : index
    %c0_11 = arith.constant 0 : index
    %10 = vector.load %arg5[%c0_10, %c0_11] : memref<128x256xf32, #tpu.memory_space<vmem>>, vector<128x256xf32>
    tpu.vector_store %arg5[%c0_10, %c0_11], %9 {strides = array<i32>} : memref<128x256xf32, #tpu.memory_space<vmem>>, vector<128x256xf32>,
    return
  }
  func.func @transform_0(%arg0: i32, %arg1: i32, %arg2: i32) -> (i32, i32) {
    %c0_i32 = arith.constant 0 : i32
    return %arg0, %arg2 : i32, i32
  }
  func.func @transform_1(%arg0: i32, %arg1: i32, %arg2: i32) -> (i32, i32) {
    %c0_i32 = arith.constant 0 : i32
    return %arg2, %arg1 : i32, i32
  }
  func.func @transform_2(%arg0: i32, %arg1: i32, %arg2: i32) -> (i32, i32) {
    %c0_i32 = arith.constant 0 : i32
    return %arg0, %arg1 : i32, i32
  }
}

module attributes {stable_mosaic.version = 11 : i64} {
  func.func @_bn_partial_kernel(%arg0: i32, %arg1: memref<64x128xf32, #tpu.memory_space<vmem>>, %arg2: memref<1x1x128xf32, #tpu.memory_space<vmem>>, %arg3: memref<1x1x128xf32, #tpu.memory_space<vmem>>) attributes {dimension_semantics = [#tpu.dimension_semantics<parallel>], iteration_bounds = array<i64: 1>, scalar_prefetch = 0 : i64, scratch_operands = 0 : i64, tpu.core_type = #tpu.core_type<tc>, window_params = [{transform_indices = @transform_0, window_bounds = array<i64: 64, 128>}, {transform_indices = @transform_1, window_bounds = array<i64: 1, 1, 128>}, {transform_indices = @transform_2, window_bounds = array<i64: 1, 1, 128>}]} {
    %c0 = arith.constant 0 : index
    %c0_0 = arith.constant 0 : index
    %0 = vector.load %arg1[%c0, %c0_0] : memref<64x128xf32, #tpu.memory_space<vmem>>, vector<64x128xf32>
    %cst = arith.constant dense<0.000000e+00> : vector<128xf32>
    %1 = vector.multi_reduction <add>, %0, %cst [0] : vector<64x128xf32> to vector<128xf32>
    %2 = vector.shape_cast %1 : vector<128xf32> to vector<1x128xf32>
    %c0_1 = arith.constant 0 : index
    %c0_2 = arith.constant 0 : index
    %c0_3 = arith.constant 0 : index
    %3 = vector.load %arg2[%c0_1, %c0_2, %c0_3] : memref<1x1x128xf32, #tpu.memory_space<vmem>>, vector<1x1x128xf32>
    %4 = vector.shape_cast %3 : vector<1x1x128xf32> to vector<1x128xf32>
    %5 = vector.shape_cast %2 : vector<1x128xf32> to vector<1x1x128xf32>
    tpu.vector_store %arg2[%c0_1, %c0_2, %c0_3], %5 {strides = array<i32>} : memref<1x1x128xf32, #tpu.memory_space<vmem>>, vector<1x1x128xf32>,
    %6 = arith.mulf %0, %0 : vector<64x128xf32>
    %cst_4 = arith.constant dense<0.000000e+00> : vector<128xf32>
    %7 = vector.multi_reduction <add>, %6, %cst_4 [0] : vector<64x128xf32> to vector<128xf32>
    %8 = vector.shape_cast %7 : vector<128xf32> to vector<1x128xf32>
    %c0_5 = arith.constant 0 : index
    %c0_6 = arith.constant 0 : index
    %c0_7 = arith.constant 0 : index
    %9 = vector.load %arg3[%c0_5, %c0_6, %c0_7] : memref<1x1x128xf32, #tpu.memory_space<vmem>>, vector<1x1x128xf32>
    %10 = vector.shape_cast %9 : vector<1x1x128xf32> to vector<1x128xf32>
    %11 = vector.shape_cast %8 : vector<1x128xf32> to vector<1x1x128xf32>
    tpu.vector_store %arg3[%c0_5, %c0_6, %c0_7], %11 {strides = array<i32>} : memref<1x1x128xf32, #tpu.memory_space<vmem>>, vector<1x1x128xf32>,
    return
  }
  func.func @transform_0(%arg0: i32) -> (i32, i32) {
    %c0_i32 = arith.constant 0 : i32
    %c0_i32_0 = arith.constant 0 : i32
    return %arg0, %c0_i32 : i32, i32
  }
  func.func @transform_1(%arg0: i32) -> (i32, i32, i32) {
    %c0_i32 = arith.constant 0 : i32
    %c0_i32_0 = arith.constant 0 : i32
    %c0_i32_1 = arith.constant 0 : i32
    return %arg0, %c0_i32, %c0_i32_0 : i32, i32, i32
  }
  func.func @transform_2(%arg0: i32) -> (i32, i32, i32) {
    %c0_i32 = arith.constant 0 : i32
    %c0_i32_0 = arith.constant 0 : i32
    %c0_i32_1 = arith.constant 0 : i32
    return %arg0, %c0_i32, %c0_i32_0 : i32, i32, i32
  }
}

module attributes {stable_mosaic.version = 11 : i64} {
  func.func @_scale_shift_relu_kernel(%arg0: i32, %arg1: memref<64x128xf32, #tpu.memory_space<vmem>>, %arg2: memref<1x128xf32, #tpu.memory_space<vmem>>, %arg3: memref<1x128xf32, #tpu.memory_space<vmem>>, %arg4: memref<64x128xbf16, #tpu.memory_space<vmem>>) attributes {dimension_semantics = [#tpu.dimension_semantics<parallel>], iteration_bounds = array<i64: 1>, scalar_prefetch = 0 : i64, scratch_operands = 0 : i64, tpu.core_type = #tpu.core_type<tc>, window_params = [{transform_indices = @transform_0, window_bounds = array<i64: 64, 128>}, {pipeline_mode = #tpu.pipeline_mode<synchronous>, transform_indices = @transform_1, window_bounds = array<i64: 1, 128>}, {pipeline_mode = #tpu.pipeline_mode<synchronous>, transform_indices = @transform_2, window_bounds = array<i64: 1, 128>}, {transform_indices = @transform_3, window_bounds = array<i64: 64, 128>}]} {
    %c0 = arith.constant 0 : index
    %c0_0 = arith.constant 0 : index
    %0 = vector.load %arg1[%c0, %c0_0] : memref<64x128xf32, #tpu.memory_space<vmem>>, vector<64x128xf32>
    %c0_1 = arith.constant 0 : index
    %c0_2 = arith.constant 0 : index
    %1 = vector.load %arg2[%c0_1, %c0_2] : memref<1x128xf32, #tpu.memory_space<vmem>>, vector<1x128xf32>
    %2 = vector.broadcast %1 : vector<1x128xf32> to vector<64x128xf32>
    %3 = arith.mulf %0, %2 : vector<64x128xf32>
    %c0_3 = arith.constant 0 : index
    %c0_4 = arith.constant 0 : index
    %4 = vector.load %arg3[%c0_3, %c0_4] : memref<1x128xf32, #tpu.memory_space<vmem>>, vector<1x128xf32>
    %5 = vector.broadcast %4 : vector<1x128xf32> to vector<64x128xf32>
    %6 = arith.addf %3, %5 : vector<64x128xf32>
    %cst = arith.constant 0.000000e+00 : f32
    %7 = vector.broadcast %cst : f32 to vector<64x128xf32>
    %8 = arith.maximumf %6, %7 : vector<64x128xf32>
    %9 = arith.truncf %8 : vector<64x128xf32> to vector<64x128xbf16>
    %c0_5 = arith.constant 0 : index
    %c0_6 = arith.constant 0 : index
    %10 = vector.load %arg4[%c0_5, %c0_6] : memref<64x128xbf16, #tpu.memory_space<vmem>>, vector<64x128xbf16>
    tpu.vector_store %arg4[%c0_5, %c0_6], %9 {strides = array<i32>} : memref<64x128xbf16, #tpu.memory_space<vmem>>, vector<64x128xbf16>,
    return
  }
  func.func @transform_0(%arg0: i32) -> (i32, i32) {
    %c0_i32 = arith.constant 0 : i32
    %c0_i32_0 = arith.constant 0 : i32
    return %arg0, %c0_i32 : i32, i32
  }
  func.func @transform_1(%arg0: i32) -> (i32, i32) {
    %c0_i32 = arith.constant 0 : i32
    %c0_i32_0 = arith.constant 0 : i32
    %c0_i32_1 = arith.constant 0 : i32
    return %c0_i32, %c0_i32_0 : i32, i32
  }
  func.func @transform_2(%arg0: i32) -> (i32, i32) {
    %c0_i32 = arith.constant 0 : i32
    %c0_i32_0 = arith.constant 0 : i32
    %c0_i32_1 = arith.constant 0 : i32
    return %c0_i32, %c0_i32_0 : i32, i32
  }
  func.func @transform_3(%arg0: i32) -> (i32, i32) {
    %c0_i32 = arith.constant 0 : i32
    %c0_i32_0 = arith.constant 0 : i32
    return %arg0, %c0_i32 : i32, i32
  }
}

module attributes {stable_mosaic.version = 11 : i64} {
  func.func @_matmul_kernel(%arg0: i32, %arg1: i32, %arg2: i32, %arg3: memref<512x16xbf16, #tpu.memory_space<vmem>>, %arg4: memref<16x128xbf16, #tpu.memory_space<vmem>>, %arg5: memref<512x128xf32, #tpu.memory_space<vmem>>, %arg6: memref<512x128xf32, #tpu.memory_space<vmem>>) attributes {dimension_semantics = [#tpu.dimension_semantics<parallel>, #tpu.dimension_semantics<parallel>, #tpu.dimension_semantics<arbitrary>], iteration_bounds = array<i64: 1, 1, 1>, scalar_prefetch = 0 : i64, scratch_operands = 1 : i64, tpu.core_type = #tpu.core_type<tc>, window_params = [{transform_indices = @transform_0, window_bounds = array<i64: 512, 16>}, {transform_indices = @transform_1, window_bounds = array<i64: 16, 128>}, {transform_indices = @transform_2, window_bounds = array<i64: 512, 128>}]} {
    %c0_i32 = arith.constant 0 : i32
    %0 = arith.cmpi eq, %arg2, %c0_i32 : i32
    %1 = arith.extui %0 : i1 to i32
    %c0_i32_0 = arith.constant 0 : i32
    %2 = arith.cmpi ne, %1, %c0_i32_0 : i32
    scf.if %2 {
      %cst_12 = arith.constant 0.000000e+00 : f32
      %11 = vector.broadcast %cst_12 : f32 to vector<512x128xf32>
      %c0_13 = arith.constant 0 : index
      %c0_14 = arith.constant 0 : index
      %12 = vector.load %arg6[%c0_13, %c0_14] : memref<512x128xf32, #tpu.memory_space<vmem>>, vector<512x128xf32>
      tpu.vector_store %arg6[%c0_13, %c0_14], %11 {strides = array<i32>} : memref<512x128xf32, #tpu.memory_space<vmem>>, vector<512x128xf32>,
    } else {
    }
    %c0 = arith.constant 0 : index
    %c0_1 = arith.constant 0 : index
    %3 = vector.load %arg6[%c0, %c0_1] : memref<512x128xf32, #tpu.memory_space<vmem>>, vector<512x128xf32>
    %c0_2 = arith.constant 0 : index
    %c0_3 = arith.constant 0 : index
    %4 = vector.load %arg3[%c0_2, %c0_3] : memref<512x16xbf16, #tpu.memory_space<vmem>>, vector<512x16xbf16>
    %c0_4 = arith.constant 0 : index
    %c0_5 = arith.constant 0 : index
    %5 = vector.load %arg4[%c0_4, %c0_5] : memref<16x128xbf16, #tpu.memory_space<vmem>>, vector<16x128xbf16>
    %cst = arith.constant dense<0.000000e+00> : vector<512x128xf32>
    %6 = tpu.matmul %4, %5, %cst {dimension_numbers = #tpu.dot_dimension_numbers<[1], [0], [0], [1], [0, 0, 1, 1], [], []>} : vector<512x16xbf16>, vector<16x128xbf16>, vector<512x128xf32> -> vector<512x128xf32>
    %7 = arith.addf %3, %6 : vector<512x128xf32>
    %c0_6 = arith.constant 0 : index
    %c0_7 = arith.constant 0 : index
    %8 = vector.load %arg6[%c0_6, %c0_7] : memref<512x128xf32, #tpu.memory_space<vmem>>, vector<512x128xf32>
    tpu.vector_store %arg6[%c0_6, %c0_7], %7 {strides = array<i32>} : memref<512x128xf32, #tpu.memory_space<vmem>>, vector<512x128xf32>,
    %c0_8 = arith.constant 0 : index
    %c0_9 = arith.constant 0 : index
    %9 = vector.load %arg6[%c0_8, %c0_9] : memref<512x128xf32, #tpu.memory_space<vmem>>, vector<512x128xf32>
    %c0_10 = arith.constant 0 : index
    %c0_11 = arith.constant 0 : index
    %10 = vector.load %arg5[%c0_10, %c0_11] : memref<512x128xf32, #tpu.memory_space<vmem>>, vector<512x128xf32>
    tpu.vector_store %arg5[%c0_10, %c0_11], %9 {strides = array<i32>} : memref<512x128xf32, #tpu.memory_space<vmem>>, vector<512x128xf32>,
    return
  }
  func.func @transform_0(%arg0: i32, %arg1: i32, %arg2: i32) -> (i32, i32) {
    %c0_i32 = arith.constant 0 : i32
    return %arg0, %arg2 : i32, i32
  }
  func.func @transform_1(%arg0: i32, %arg1: i32, %arg2: i32) -> (i32, i32) {
    %c0_i32 = arith.constant 0 : i32
    return %arg2, %arg1 : i32, i32
  }
  func.func @transform_2(%arg0: i32, %arg1: i32, %arg2: i32) -> (i32, i32) {
    %c0_i32 = arith.constant 0 : i32
    return %arg0, %arg1 : i32, i32
  }
}

module attributes {stable_mosaic.version = 11 : i64} {
  func.func @_bn_partial_kernel(%arg0: i32, %arg1: memref<128x128xf32, #tpu.memory_space<vmem>>, %arg2: memref<1x1x128xf32, #tpu.memory_space<vmem>>, %arg3: memref<1x1x128xf32, #tpu.memory_space<vmem>>) attributes {dimension_semantics = [#tpu.dimension_semantics<parallel>], iteration_bounds = array<i64: 1>, scalar_prefetch = 0 : i64, scratch_operands = 0 : i64, tpu.core_type = #tpu.core_type<tc>, window_params = [{transform_indices = @transform_0, window_bounds = array<i64: 128, 128>}, {transform_indices = @transform_1, window_bounds = array<i64: 1, 1, 128>}, {transform_indices = @transform_2, window_bounds = array<i64: 1, 1, 128>}]} {
    %c0 = arith.constant 0 : index
    %c0_0 = arith.constant 0 : index
    %0 = vector.load %arg1[%c0, %c0_0] : memref<128x128xf32, #tpu.memory_space<vmem>>, vector<128x128xf32>
    %cst = arith.constant dense<0.000000e+00> : vector<128xf32>
    %1 = vector.multi_reduction <add>, %0, %cst [0] : vector<128x128xf32> to vector<128xf32>
    %2 = vector.shape_cast %1 : vector<128xf32> to vector<1x128xf32>
    %c0_1 = arith.constant 0 : index
    %c0_2 = arith.constant 0 : index
    %c0_3 = arith.constant 0 : index
    %3 = vector.load %arg2[%c0_1, %c0_2, %c0_3] : memref<1x1x128xf32, #tpu.memory_space<vmem>>, vector<1x1x128xf32>
    %4 = vector.shape_cast %3 : vector<1x1x128xf32> to vector<1x128xf32>
    %5 = vector.shape_cast %2 : vector<1x128xf32> to vector<1x1x128xf32>
    tpu.vector_store %arg2[%c0_1, %c0_2, %c0_3], %5 {strides = array<i32>} : memref<1x1x128xf32, #tpu.memory_space<vmem>>, vector<1x1x128xf32>,
    %6 = arith.mulf %0, %0 : vector<128x128xf32>
    %cst_4 = arith.constant dense<0.000000e+00> : vector<128xf32>
    %7 = vector.multi_reduction <add>, %6, %cst_4 [0] : vector<128x128xf32> to vector<128xf32>
    %8 = vector.shape_cast %7 : vector<128xf32> to vector<1x128xf32>
    %c0_5 = arith.constant 0 : index
    %c0_6 = arith.constant 0 : index
    %c0_7 = arith.constant 0 : index
    %9 = vector.load %arg3[%c0_5, %c0_6, %c0_7] : memref<1x1x128xf32, #tpu.memory_space<vmem>>, vector<1x1x128xf32>
    %10 = vector.shape_cast %9 : vector<1x1x128xf32> to vector<1x128xf32>
    %11 = vector.shape_cast %8 : vector<1x128xf32> to vector<1x1x128xf32>
    tpu.vector_store %arg3[%c0_5, %c0_6, %c0_7], %11 {strides = array<i32>} : memref<1x1x128xf32, #tpu.memory_space<vmem>>, vector<1x1x128xf32>,
    return
  }
  func.func @transform_0(%arg0: i32) -> (i32, i32) {
    %c0_i32 = arith.constant 0 : i32
    %c0_i32_0 = arith.constant 0 : i32
    return %arg0, %c0_i32 : i32, i32
  }
  func.func @transform_1(%arg0: i32) -> (i32, i32, i32) {
    %c0_i32 = arith.constant 0 : i32
    %c0_i32_0 = arith.constant 0 : i32
    %c0_i32_1 = arith.constant 0 : i32
    return %arg0, %c0_i32, %c0_i32_0 : i32, i32, i32
  }
  func.func @transform_2(%arg0: i32) -> (i32, i32, i32) {
    %c0_i32 = arith.constant 0 : i32
    %c0_i32_0 = arith.constant 0 : i32
    %c0_i32_1 = arith.constant 0 : i32
    return %arg0, %c0_i32, %c0_i32_0 : i32, i32, i32
  }
}

module attributes {stable_mosaic.version = 11 : i64} {
  func.func @_scale_shift_relu_kernel(%arg0: i32, %arg1: memref<128x128xf32, #tpu.memory_space<vmem>>, %arg2: memref<1x128xf32, #tpu.memory_space<vmem>>, %arg3: memref<1x128xf32, #tpu.memory_space<vmem>>, %arg4: memref<128x128xbf16, #tpu.memory_space<vmem>>) attributes {dimension_semantics = [#tpu.dimension_semantics<parallel>], iteration_bounds = array<i64: 1>, scalar_prefetch = 0 : i64, scratch_operands = 0 : i64, tpu.core_type = #tpu.core_type<tc>, window_params = [{transform_indices = @transform_0, window_bounds = array<i64: 128, 128>}, {pipeline_mode = #tpu.pipeline_mode<synchronous>, transform_indices = @transform_1, window_bounds = array<i64: 1, 128>}, {pipeline_mode = #tpu.pipeline_mode<synchronous>, transform_indices = @transform_2, window_bounds = array<i64: 1, 128>}, {transform_indices = @transform_3, window_bounds = array<i64: 128, 128>}]} {
    %c0 = arith.constant 0 : index
    %c0_0 = arith.constant 0 : index
    %0 = vector.load %arg1[%c0, %c0_0] : memref<128x128xf32, #tpu.memory_space<vmem>>, vector<128x128xf32>
    %c0_1 = arith.constant 0 : index
    %c0_2 = arith.constant 0 : index
    %1 = vector.load %arg2[%c0_1, %c0_2] : memref<1x128xf32, #tpu.memory_space<vmem>>, vector<1x128xf32>
    %2 = vector.broadcast %1 : vector<1x128xf32> to vector<128x128xf32>
    %3 = arith.mulf %0, %2 : vector<128x128xf32>
    %c0_3 = arith.constant 0 : index
    %c0_4 = arith.constant 0 : index
    %4 = vector.load %arg3[%c0_3, %c0_4] : memref<1x128xf32, #tpu.memory_space<vmem>>, vector<1x128xf32>
    %5 = vector.broadcast %4 : vector<1x128xf32> to vector<128x128xf32>
    %6 = arith.addf %3, %5 : vector<128x128xf32>
    %cst = arith.constant 0.000000e+00 : f32
    %7 = vector.broadcast %cst : f32 to vector<128x128xf32>
    %8 = arith.maximumf %6, %7 : vector<128x128xf32>
    %9 = arith.truncf %8 : vector<128x128xf32> to vector<128x128xbf16>
    %c0_5 = arith.constant 0 : index
    %c0_6 = arith.constant 0 : index
    %10 = vector.load %arg4[%c0_5, %c0_6] : memref<128x128xbf16, #tpu.memory_space<vmem>>, vector<128x128xbf16>
    tpu.vector_store %arg4[%c0_5, %c0_6], %9 {strides = array<i32>} : memref<128x128xbf16, #tpu.memory_space<vmem>>, vector<128x128xbf16>,
    return
  }
  func.func @transform_0(%arg0: i32) -> (i32, i32) {
    %c0_i32 = arith.constant 0 : i32
    %c0_i32_0 = arith.constant 0 : i32
    return %arg0, %c0_i32 : i32, i32
  }
  func.func @transform_1(%arg0: i32) -> (i32, i32) {
    %c0_i32 = arith.constant 0 : i32
    %c0_i32_0 = arith.constant 0 : i32
    %c0_i32_1 = arith.constant 0 : i32
    return %c0_i32, %c0_i32_0 : i32, i32
  }
  func.func @transform_2(%arg0: i32) -> (i32, i32) {
    %c0_i32 = arith.constant 0 : i32
    %c0_i32_0 = arith.constant 0 : i32
    %c0_i32_1 = arith.constant 0 : i32
    return %c0_i32, %c0_i32_0 : i32, i32
  }
  func.func @transform_3(%arg0: i32) -> (i32, i32) {
    %c0_i32 = arith.constant 0 : i32
    %c0_i32_0 = arith.constant 0 : i32
    return %arg0, %c0_i32 : i32, i32
  }
}

module attributes {stable_mosaic.version = 11 : i64} {
  func.func @_matmul_kernel(%arg0: i32, %arg1: i32, %arg2: i32, %arg3: memref<512x8xbf16, #tpu.memory_space<vmem>>, %arg4: memref<8x48xbf16, #tpu.memory_space<vmem>>, %arg5: memref<512x48xf32, #tpu.memory_space<vmem>>, %arg6: memref<512x48xf32, #tpu.memory_space<vmem>>) attributes {dimension_semantics = [#tpu.dimension_semantics<parallel>, #tpu.dimension_semantics<parallel>, #tpu.dimension_semantics<arbitrary>], iteration_bounds = array<i64: 4, 1, 1>, scalar_prefetch = 0 : i64, scratch_operands = 1 : i64, tpu.core_type = #tpu.core_type<tc>, window_params = [{transform_indices = @transform_0, window_bounds = array<i64: 512, 8>}, {transform_indices = @transform_1, window_bounds = array<i64: 8, 48>}, {transform_indices = @transform_2, window_bounds = array<i64: 512, 48>}]} {
    %c0_i32 = arith.constant 0 : i32
    %0 = arith.cmpi eq, %arg2, %c0_i32 : i32
    %1 = arith.extui %0 : i1 to i32
    %c0_i32_0 = arith.constant 0 : i32
    %2 = arith.cmpi ne, %1, %c0_i32_0 : i32
    scf.if %2 {
      %cst_12 = arith.constant 0.000000e+00 : f32
      %11 = vector.broadcast %cst_12 : f32 to vector<512x48xf32>
      %c0_13 = arith.constant 0 : index
      %c0_14 = arith.constant 0 : index
      %12 = vector.load %arg6[%c0_13, %c0_14] : memref<512x48xf32, #tpu.memory_space<vmem>>, vector<512x48xf32>
      tpu.vector_store %arg6[%c0_13, %c0_14], %11 {strides = array<i32>} : memref<512x48xf32, #tpu.memory_space<vmem>>, vector<512x48xf32>,
    } else {
    }
    %c0 = arith.constant 0 : index
    %c0_1 = arith.constant 0 : index
    %3 = vector.load %arg6[%c0, %c0_1] : memref<512x48xf32, #tpu.memory_space<vmem>>, vector<512x48xf32>
    %c0_2 = arith.constant 0 : index
    %c0_3 = arith.constant 0 : index
    %4 = vector.load %arg3[%c0_2, %c0_3] : memref<512x8xbf16, #tpu.memory_space<vmem>>, vector<512x8xbf16>
    %c0_4 = arith.constant 0 : index
    %c0_5 = arith.constant 0 : index
    %5 = vector.load %arg4[%c0_4, %c0_5] : memref<8x48xbf16, #tpu.memory_space<vmem>>, vector<8x48xbf16>
    %cst = arith.constant dense<0.000000e+00> : vector<512x48xf32>
    %6 = tpu.matmul %4, %5, %cst {dimension_numbers = #tpu.dot_dimension_numbers<[1], [0], [0], [1], [0, 0, 1, 1], [], []>} : vector<512x8xbf16>, vector<8x48xbf16>, vector<512x48xf32> -> vector<512x48xf32>
    %7 = arith.addf %3, %6 : vector<512x48xf32>
    %c0_6 = arith.constant 0 : index
    %c0_7 = arith.constant 0 : index
    %8 = vector.load %arg6[%c0_6, %c0_7] : memref<512x48xf32, #tpu.memory_space<vmem>>, vector<512x48xf32>
    tpu.vector_store %arg6[%c0_6, %c0_7], %7 {strides = array<i32>} : memref<512x48xf32, #tpu.memory_space<vmem>>, vector<512x48xf32>,
    %c0_8 = arith.constant 0 : index
    %c0_9 = arith.constant 0 : index
    %9 = vector.load %arg6[%c0_8, %c0_9] : memref<512x48xf32, #tpu.memory_space<vmem>>, vector<512x48xf32>
    %c0_10 = arith.constant 0 : index
    %c0_11 = arith.constant 0 : index
    %10 = vector.load %arg5[%c0_10, %c0_11] : memref<512x48xf32, #tpu.memory_space<vmem>>, vector<512x48xf32>
    tpu.vector_store %arg5[%c0_10, %c0_11], %9 {strides = array<i32>} : memref<512x48xf32, #tpu.memory_space<vmem>>, vector<512x48xf32>,
    return
  }
  func.func @transform_0(%arg0: i32, %arg1: i32, %arg2: i32) -> (i32, i32) {
    %c0_i32 = arith.constant 0 : i32
    return %arg0, %arg2 : i32, i32
  }
  func.func @transform_1(%arg0: i32, %arg1: i32, %arg2: i32) -> (i32, i32) {
    %c0_i32 = arith.constant 0 : i32
    return %arg2, %arg1 : i32, i32
  }
  func.func @transform_2(%arg0: i32, %arg1: i32, %arg2: i32) -> (i32, i32) {
    %c0_i32 = arith.constant 0 : i32
    return %arg0, %arg1 : i32, i32
  }
}

module attributes {stable_mosaic.version = 11 : i64} {
  func.func @_tanh_kernel(%arg0: i32, %arg1: memref<24x1024xf32, #tpu.memory_space<vmem>>, %arg2: memref<24x1024xf32, #tpu.memory_space<vmem>>) attributes {dimension_semantics = [#tpu.dimension_semantics<parallel>], iteration_bounds = array<i64: 1>, scalar_prefetch = 0 : i64, scratch_operands = 0 : i64, tpu.core_type = #tpu.core_type<tc>, window_params = [{transform_indices = @transform_0, window_bounds = array<i64: 24, 1024>}, {transform_indices = @transform_1, window_bounds = array<i64: 24, 1024>}]} {
    %c0 = arith.constant 0 : index
    %c0_0 = arith.constant 0 : index
    %0 = vector.load %arg1[%c0, %c0_0] : memref<24x1024xf32, #tpu.memory_space<vmem>>, vector<24x1024xf32>
    %1 = math.tanh %0 : vector<24x1024xf32>
    %c0_1 = arith.constant 0 : index
    %c0_2 = arith.constant 0 : index
    %2 = vector.load %arg2[%c0_1, %c0_2] : memref<24x1024xf32, #tpu.memory_space<vmem>>, vector<24x1024xf32>
    tpu.vector_store %arg2[%c0_1, %c0_2], %1 {strides = array<i32>} : memref<24x1024xf32, #tpu.memory_space<vmem>>, vector<24x1024xf32>,
    return
  }
  func.func @transform_0(%arg0: i32) -> (i32, i32) {
    %c0_i32 = arith.constant 0 : i32
    %c0_i32_0 = arith.constant 0 : i32
    return %arg0, %c0_i32 : i32, i32
  }
  func.func @transform_1(%arg0: i32) -> (i32, i32) {
    %c0_i32 = arith.constant 0 : i32
    %c0_i32_0 = arith.constant 0 : i32
    return %arg0, %c0_i32 : i32, i32
  }
}

</mosaic_0001>

<llo_original>
// kernel: tile.48
$region0: #{tile.48}
  #allocation0 [shape = 's32[1]{0}', space=sflag, size = 0x4, scoped, tag = 'scoped memory for tile.48']
  %s0 = inlined_call_operand.vmem [shape: f32[64], index: 0, kind: input, shape index: {}]
  %s1 = inlined_call_operand.vmem [shape: f32[2,64], index: 1, kind: output, shape index: {}]
  // Predicated region
  $region2: #{tile.48} parent=0 // pred_check
    _
  $region3: #{tile.48} parent=0 // pred_check_branch
    %3 = sbr.rel (0) target = $region5
  $region4: #{tile.48} parent=0 // pred_region
    _
  $region5: #{tile.48} parent=0 // pred_fallthru
    _
  %v4 = vld [vmem:[%s0] ss:$0 sm:$0xff]
  %5 = vst [vmem:[%s1] sm:$0x3] %v4

// kernel: tile.49
$region0: #{tile.49}
  %s0 = inlined_call_operand.vmem [shape: f32[2,64], index: 0, kind: input, shape index: {}]
  %s1 = inlined_call_operand.vmem [shape: f32[1,128], index: 1, kind: output, shape index: {}]
  $region1: #{tile.49} parent=0
    #allocation0 [shape = 'u8[4096]{0}', space=vmem, size = 0x1000, scoped, tag = 'scoped mem for output reshape']
    #allocation1 [shape = 'u8[4096]{0}', space=vmem, size = 0x1000, scoped, tag = 'scoped mem for input reshape']
    %s3 = ssub.s32 4, 1
    %v4 = vld [vmem:[%s0] sm:%s3]
    %5 = vst [vmem:[#allocation1] sm:%s3] %v4
    %v6 = vld [vmem:[#allocation1] sm:$0x1]
    %vm7 = vcmask 523264
    %8 = vst.msk [vmem:[#allocation0] sm:$0x1] %vm7, %v6
    %s9 = scalar_lea.vmem [#allocation1], 1
    %v10 = vld [vmem:[%s9] sm:$0x1]
    %11 = vrot.lane.b32.xlu0 %v10, 64
    %v12 = vpop.permute.xlu0 %11
    %vm13 = vcmask 1048064
    %14 = vst.msk [vmem:[#allocation0] sm:$0x1] %vm13, %v12
    %s16 = ssub.s32 2, 1
    %v17 = vld [vmem:[#allocation0] sm:%s16]
    %s19 = ssub.s32 2, 1
    %20 = vst [vmem:[%s1] sm:%s19] %v17

// kernel: _lambda_.14
$region0: #{_lambda_.14}
  #allocation0 [shape = 'u32[]', space=smem, size = 0x4, offset = 0x4, fixed_abs, tag = 'smem constant byte address 0x4 - core index']
  #allocation1 [shape = 'u32[72,128]{1,0:T(1,128)}', space=vmem, size = 0x9000, scoped, tag = 'internal scratch']
  #allocation2 [shape = 'f32[8,512]{1,0:T(8,128)}', space=vmem, size = 0x4000, scoped, tag = 'scratch operand']
  %s0 = inlined_call_operand.vmem [shape: bf16[8,16], index: 0, kind: input, shape index: {}]
  %s1 = inlined_call_operand.hbm [shape: bf16[16,1024], index: 1, kind: input, shape index: {}]
  %s2 = inlined_call_operand.vmem [shape: f32[8,1024], index: 2, kind: output, shape index: {}]
  %s3 = sld [smem:[#allocation0]]
  $region49: #{_lambda_.14} parent=0
    _
  %s5 = ssub.s32 1, %s3
  %s6 = scalar_select 0, %s5, %s3
  $region1: #{_lambda_.14} parent=0
    #allocation3 [shape = 'u8[32768]{0}', space=vmem, size = 0x8000, scoped, tag = 'input window, operand 1']
    #allocation4 [shape = 's32[2]{0}', space=sflag, size = 0x8, scoped, tag = 'scoped memory for _lambda_.14']
    %7 = vsyncpa [#allocation4], 0
    %s8 = scalar_lea.sflag [#allocation4], 1
    %9 = vsyncpa %s8, 0
    loop: start=0, step=1, limit=4
    $region2: #{_lambda_.14} parent=1 // loop_pre_header
      _
    $region3: #{_lambda_.14} parent=1 // loop_header
      %s11 = sphi 0, %s15
      %p12 = scmp.ge.s32.totalorder %s11, 4
      %s18 = sphi 0, %s37
      %s19 = sphi 0, %s33
      %s20 = sphi 0, %s29
      %s21 = sphi 0, %s18
      %s22 = sphi 0, %s19
      %s23 = sphi 0, %s20
      %s24 = sphi 0, %s21
      %s25 = sphi 0, %s22
      %s26 = sphi 0, %s23
      %s42 = sphi 0, %s44
      %s45 = sphi 0, %s42
      %s46 = sphi 0, %s45
      %s62 = sphi 0, %s46
      %s70 = sphi 0, %s72
      %s73 = sphi 0, %s70
      %s74 = sphi 0, %s73
      %s90 = sphi 0, %s74
      %s98 = sphi 0, %s100
      %s101 = sphi 0, %s98
      %s102 = sphi 0, %s101
      %s118 = sphi 0, %s102
    $region4: #{_lambda_.14} parent=1 // loop_header_branch
      %14 = sbr.rel (%p12) target = $region8
    $region5: #{_lambda_.14} parent=1 // loop_body
      %s16 = ssub.s32 %s11, 1
      %s17 = ssub.s32 %s11, 2
      %s27 = sadd.s32 1, %s20
      %p28 = scmp.ge.s32.totalorder %s27, 1
      %s29 = scalar_select %p28, 0, %s27
      %s30 = sadd.s32 1, %s19
      %s31 = scalar_select %p28, %s30, %s19
      %p32 = scmp.ge.s32.totalorder %s31, 2
      %s33 = scalar_select %p32, 0, %s31
      %s34 = sadd.s32 1, %s18
      %s35 = scalar_select %p32, %s34, %s18
      %p36 = scmp.ge.s32.totalorder %s35, 1
      %s37 = scalar_select %p36, 0, %s35
      %s38 = ssub.s32 %s18, %s37
      %s39 = ssub.s32 %s20, %s29
      %s40 = sor.u32 %s38, %s39
      %p41 = scmp.eq.s32.totalorder %s40, 0
      %s43 = sadd.s32 %s42, 1
      %s44 = scalar_select %p41, %s42, %s43
      %p47 = pneg %p41
      %p48 = scmp.eq.s32.totalorder %s11, 1
      %p49 = por %p47, %p48
      %p50 = scmp.ne.s32.totalorder %s42, %s45
      %p51 = scmp.eq.s32.totalorder %s11, 0
      %p52 = por %p50, %p51
      %p53 = scmp.ne.s32.totalorder %s42, %s45
      %p54 = scmp.eq.s32.totalorder %s16, 1
      %p55 = por %p53, %p54
      %p56 = scmp.ne.s32.totalorder %s45, %s46
      %p57 = scmp.eq.s32.totalorder %s16, 0
      %p58 = por %p56, %p57
      %p59 = scmp.ne.s32.totalorder %s45, %s46
      %p60 = scmp.eq.s32.totalorder %s17, 1
      %p61 = por %p59, %p60
      %p63 = scmp.ne.s32.totalorder %s46, %s62
      %p64 = scmp.eq.s32.totalorder %s17, 0
      %p65 = por %p63, %p64
      %s66 = ssub.s32 %s20, %s29
      %s67 = ssub.s32 %s19, %s33
      %s68 = sor.u32 %s66, %s67
      %p69 = scmp.eq.s32.totalorder %s68, 0
      %s71 = sadd.s32 %s70, 1
      %s72 = scalar_select %p69, %s70, %s71
      %p75 = pneg %p69
      %p76 = scmp.eq.s32.totalorder %s11, 1
      %p77 = por %p75, %p76
      %p78 = scmp.ne.s32.totalorder %s70, %s73
      %p79 = scmp.eq.s32.totalorder %s11, 0
      %p80 = por %p78, %p79
      %p81 = scmp.ne.s32.totalorder %s70, %s73
      %p82 = scmp.eq.s32.totalorder %s16, 1
      %p83 = por %p81, %p82
      %p84 = scmp.ne.s32.totalorder %s73, %s74
      %p85 = scmp.eq.s32.totalorder %s16, 0
      %p86 = por %p84, %p85
      %p87 = scmp.ne.s32.totalorder %s73, %s74
      %p88 = scmp.eq.s32.totalorder %s17, 1
      %p89 = por %p87, %p88
      %p91 = scmp.ne.s32.totalorder %s74, %s90
      %p92 = scmp.eq.s32.totalorder %s17, 0
      %p93 = por %p91, %p92
      %s94 = ssub.s32 %s18, %s37
      %s95 = ssub.s32 %s19, %s33
      %s96 = sor.u32 %s94, %s95
      %p97 = scmp.eq.s32.totalorder %s96, 0
      %s99 = sadd.s32 %s98, 1
      %s100 = scalar_select %p97, %s98, %s99
      %p103 = pneg %p97
      %p104 = scmp.eq.s32.totalorder %s11, 1
      %p105 = por %p103, %p104
      %p106 = scmp.ne.s32.totalorder %s98, %s101
      %p107 = scmp.eq.s32.totalorder %s11, 0
      %p108 = por %p106, %p107
      %p109 = scmp.ne.s32.totalorder %s98, %s101
      %p110 = scmp.eq.s32.totalorder %s16, 1
      %p111 = por %p109, %p110
      %p112 = scmp.ne.s32.totalorder %s101, %s102
      %p113 = scmp.eq.s32.totalorder %s16, 0
      %p114 = por %p112, %p113
      %p115 = scmp.ne.s32.totalorder %s101, %s102
      %p116 = scmp.eq.s32.totalorder %s17, 1
      %p117 = por %p115, %p116
      %p119 = scmp.ne.s32.totalorder %s102, %s118
      %p120 = scmp.eq.s32.totalorder %s17, 0
      %p121 = por %p119, %p120
      %p122 = scmp.le.s32.totalorder 1, %s11
      %p123 = scmp.lt.s32.totalorder %s11, 3
      %p124 = pnand %p122, %p123
      %p125 = pneg %p124
      // Predicated region
      $region9: #{_lambda_.14} parent=5 // pred_check
        _
      $region10: #{_lambda_.14} parent=5 // pred_check_branch
        %127 = sbr.rel (%p124) target = $region12
      $region11: #{_lambda_.14} parent=5 // pred_region
        %s128 = ssub.s32 %s11, 1
        // Predicated region
        $region13: #{_lambda_.14} parent=11 // pred_check
          %p129 = pneg %p58
        $region14: #{_lambda_.14} parent=11 // pred_check_branch
          %131 = sbr.rel (%p129) target = $region16
        $region15: #{_lambda_.14} parent=11 // pred_region
          %p132 = scmp.lt.s32.totalorder %s21, 0
          %s133 = scalar_select %p132, %s21, 0
          %p134 = scmp.lt.s32.totalorder %s23, 0
          %s135 = scalar_select %p134, %s23, 0
          %s136 = sadd.s32 %s135, %s133
          %s137 = smul.addr %s136, 4
          %s138 = scalar_lea.vmem %s0, %s137
        $region16: #{_lambda_.14} parent=11 // pred_fallthru
          _
      $region12: #{_lambda_.14} parent=5 // pred_fallthru
        _
      %p139 = scmp.lt.s32.totalorder %s11, 2
      // Predicated region
      $region17: #{_lambda_.14} parent=5 // pred_check
        %p140 = pneg %p139
      $region18: #{_lambda_.14} parent=5 // pred_check_branch
        %142 = sbr.rel (%p140) target = $region20
      $region19: #{_lambda_.14} parent=5 // pred_region
        // Predicated region
        $region21: #{_lambda_.14} parent=19 // pred_check
          %p143 = pneg %p80
        $region22: #{_lambda_.14} parent=19 // pred_check_branch
          %145 = sbr.rel (%p143) target = $region24
        $region23: #{_lambda_.14} parent=19 // pred_region
          %s146 = sand.u32 %s70, 1
          %s147 = scalar_lea.sflag [#allocation4], %s146
          %s148 = sand.u32 %s70, 1
          %s149 = smul.addr %s148, 32
          %s150 = scalar_lea.vmem [#allocation3], %s149
          %s151 = smul.u32 2, %s20
          %s152 = smul.u32 4, %s19
          %154 = vsyncadd %s147, 0
          %s155 = smul.addr %s151, 8
          %s156 = sadd.s32 %s152, %s155
          %s157 = smul.addr %s156, 4
          %s158 = scalar_lea.hbm %s1, %s157
          %s159 = sshll.u32 %s158, 4
          %s160 = int_to_ptr.hbm [resolvable:$true] %s159
          %s161 = sshll.u32 %s150, 4
          %s162 = int_to_ptr.vmem [resolvable:$true] %s161
          %167 = dma.hbm_to_vmem [thread:$0]  %s160, 512, %s162, %s147, 512, 256, 16
        $region24: #{_lambda_.14} parent=19 // pred_fallthru
          _
      $region20: #{_lambda_.14} parent=5 // pred_fallthru
        _
      %p168 = scmp.le.s32.totalorder 1, %s11
      %p169 = scmp.lt.s32.totalorder %s11, 3
      %p170 = pnand %p168, %p169
      %p171 = pneg %p170
      // Predicated region
      $region25: #{_lambda_.14} parent=5 // pred_check
        _
      $region26: #{_lambda_.14} parent=5 // pred_check_branch
        %173 = sbr.rel (%p170) target = $region28
      $region27: #{_lambda_.14} parent=5 // pred_region
        %s174 = ssub.s32 %s11, 1
        %s175 = sand.u32 %s73, 1
        %s176 = scalar_lea.sflag [#allocation4], %s175
        %s177 = sand.u32 %s73, 1
        %s178 = smul.addr %s177, 32
        %s179 = scalar_lea.vmem [#allocation3], %s178
        // Predicated region
        $region29: #{_lambda_.14} parent=27 // pred_check
          %p180 = pneg %p86
        $region30: #{_lambda_.14} parent=27 // pred_check_branch
          %182 = sbr.rel (%p180) target = $region32
        $region31: #{_lambda_.14} parent=27 // pred_region
          %184 = dma.done %s176, 512
        $region32: #{_lambda_.14} parent=27 // pred_fallthru
          _
        %p185 = scmp.lt.s32.totalorder %s21, 0
        %s186 = scalar_select %p185, %s21, 0
        %p187 = scmp.lt.s32.totalorder %s23, 0
        %s188 = scalar_select %p187, %s23, 0
        %s189 = sadd.s32 %s188, %s186
        %s190 = smul.addr %s189, 4
        %s191 = scalar_lea.vmem %s0, %s190
        %p192 = pneg %p58
        %p193 = pneg %p55
        %s194 = sand.u32 %s73, 1
        %s195 = scalar_lea.sflag [#allocation4], %s194
        %s196 = sand.u32 %s73, 1
        %s197 = smul.addr %s196, 32
        %s198 = scalar_lea.vmem [#allocation3], %s197
        %p199 = pneg %p86
        %p200 = pneg %p83
        %p201 = pneg %p114
        %p202 = pneg %p111
        %s203 = smul.u32 4, %s22
        %p204 = scmp.lt.s32.totalorder %s21, 0
        %s205 = scalar_select %p204, %s21, 0
        %p206 = scmp.lt.s32.totalorder %s203, 7
        %s207 = scalar_select %p206, %s203, 7
        %s208 = smul.addr %s205, 8
        %s209 = sadd.s32 %s207, %s208
        %s210 = smul.addr %s209, 8
        %s211 = scalar_lea.vmem %s2, %s210
        %p212 = scmp.lt.s32.totalorder %s21, 0
        %s213 = scalar_select %p212, %s21, 0
        %p214 = scmp.lt.s32.totalorder %s23, 0
        %s215 = scalar_select %p214, %s23, 0
        %s216 = sadd.s32 %s215, %s213
        %s217 = smul.addr %s216, 4
        %s218 = scalar_lea.vmem %s0, %s217
        %s219 = smul.u32 2, %s23
        %s220 = smul.u32 4, %s22
        %s221 = smul.u32 4, %s22
        %p222 = scmp.lt.s32.totalorder %s21, 0
        %s223 = scalar_select %p222, %s21, 0
        %p224 = scmp.lt.s32.totalorder %s221, 7
        %s225 = scalar_select %p224, %s221, 7
        %s226 = smul.addr %s223, 8
        %s227 = sadd.s32 %s225, %s226
        %s228 = smul.addr %s227, 8
        %s229 = scalar_lea.vmem %s2, %s228
        %s230 = smul.u32 4, %s22
        %p232 = scmp.eq.s32.totalorder %s23, 0
        // Predicated region
        $region33: #{_lambda_.14} parent=27 // pred_check
          %p233 = pneg %p232
        $region34: #{_lambda_.14} parent=27 // pred_check_branch
          %235 = sbr.rel (%p233) target = $region36
        $region35: #{_lambda_.14} parent=27 // pred_region
          %236 = vst [vmem:[#allocation2] sm:$0xff] 0.0
          %237 = vst [vmem:[#allocation2 + $0x8] sm:$0xff] 0.0
          %238 = vst [vmem:[#allocation2 + $0x10] sm:$0xff] 0.0
          %239 = vst [vmem:[#allocation2 + $0x18] sm:$0xff] 0.0
        $region36: #{_lambda_.14} parent=27 // pred_fallthru
          _
        %v240 = vld [vmem:[#allocation2] sm:$0xff]
        %v241 = vld [vmem:[#allocation2 + $0x8] sm:$0xff]
        %v242 = vld [vmem:[#allocation2 + $0x10] sm:$0xff]
        %v243 = vld [vmem:[#allocation2 + $0x18] sm:$0xff]
        %v244 = vld [vmem:[%s218] sm:$0xf]
        %v245 = vld [vmem:[%s179] sm:$0xff]
        %v246 = vld [vmem:[%s179 + $0x8] sm:$0xff]
        %v247 = vld [vmem:[%s179 + $0x10] sm:$0xff]
        %v248 = vld [vmem:[%s179 + $0x18] sm:$0xff]
        %v253 = vunpack.c.l.b16 %v245
        %v254 = vunpack.c.h.b16 %v245
        %v255 = vunpack.c.l.b16 %v246
        %v256 = vunpack.c.h.b16 %v246
        %v257 = vunpack.c.l.b16 %v247
        %v258 = vunpack.c.h.b16 %v247
        %v259 = vunpack.c.l.b16 %v248
        %v260 = vunpack.c.h.b16 %v248
        %v261 = vpack.c.b16 %v257, %v253
        %v262 = vpack.c.b16 %v258, %v254
        %v263 = vpack.c.b16 %v259, %v255
        %v264 = vpack.c.b16 %v260, %v256
        %vm269 = vcmask 130048
        %v271 = vsel %vm269, %v244, 0
        %273 = vmatpush.bf16.msra.mxu0 0
        %274 = vmatpush.bf16.msra.mxu0 0
        %275 = vmatpush.bf16.msra.mxu0 0
        %276 = vmatpush.bf16.msra.mxu0 0
        %277 = vmatpush.bf16.msra.mxu0 0
        %278 = vmatpush.bf16.msra.mxu0 0
        %279 = vmatpush.bf16.msra.mxu0 0
        %280 = vmatpush.bf16.msra.mxu0 %v261
        %281 = vmatmul.bf16.gmra.mxu0 %v271
        %v282 = vpop.f32.mrf.mxu0
        %v283 = vadd.f32 0.0, %v282
        %v284 = vpop.f32.mrf.mxu0
        %285 = vdwg.mxu0
        %286 = vmatpush.bf16.msra.mxu0 0
        %287 = vmatpush.bf16.msra.mxu0 0
        %288 = vmatpush.bf16.msra.mxu0 0
        %289 = vmatpush.bf16.msra.mxu0 0
        %290 = vmatpush.bf16.msra.mxu0 0
        %291 = vmatpush.bf16.msra.mxu0 0
        %292 = vmatpush.bf16.msra.mxu0 0
        %293 = vmatpush.bf16.msra.mxu0 %v262
        %294 = vmatmul.bf16.gmra.mxu0 %v271
        %v295 = vpop.f32.mrf.mxu0
        %v296 = vadd.f32 0.0, %v295
        %v297 = vpop.f32.mrf.mxu0
        %298 = vdwg.mxu0
        %299 = vmatpush.bf16.msra.mxu0 0
        %300 = vmatpush.bf16.msra.mxu0 0
        %301 = vmatpush.bf16.msra.mxu0 0
        %302 = vmatpush.bf16.msra.mxu0 0
        %303 = vmatpush.bf16.msra.mxu0 0
        %304 = vmatpush.bf16.msra.mxu0 0
        %305 = vmatpush.bf16.msra.mxu0 0
        %306 = vmatpush.bf16.msra.mxu0 %v263
        %307 = vmatmul.bf16.gmra.mxu0 %v271
        %v308 = vpop.f32.mrf.mxu0
        %v309 = vadd.f32 0.0, %v308
        %v310 = vpop.f32.mrf.mxu0
        %311 = vdwg.mxu0
        %312 = vmatpush.bf16.msra.mxu0 0
        %313 = vmatpush.bf16.msra.mxu0 0
        %314 = vmatpush.bf16.msra.mxu0 0
        %315 = vmatpush.bf16.msra.mxu0 0
        %316 = vmatpush.bf16.msra.mxu0 0
        %317 = vmatpush.bf16.msra.mxu0 0
        %318 = vmatpush.bf16.msra.mxu0 0
        %319 = vmatpush.bf16.msra.mxu0 %v264
        %320 = vmatmul.bf16.gmra.mxu0 %v271
        %v321 = vpop.f32.mrf.mxu0
        %v322 = vadd.f32 0.0, %v321
        %v323 = vpop.f32.mrf.mxu0
        %324 = vdwg.mxu0
        %v325 = vadd.f32 %v240, %v283
        %v326 = vadd.f32 %v241, %v296
        %v327 = vadd.f32 %v242, %v309
        %v328 = vadd.f32 %v243, %v322
        %329 = vst [vmem:[#allocation2] sm:$0xff] %v325
        %330 = vst [vmem:[#allocation2 + $0x8] sm:$0xff] %v326
        %331 = vst [vmem:[#allocation2 + $0x10] sm:$0xff] %v327
        %332 = vst [vmem:[#allocation2 + $0x18] sm:$0xff] %v328
        %v333 = vld [vmem:[#allocation2] sm:$0xff]
        %v334 = vld [vmem:[#allocation2 + $0x8] sm:$0xff]
        %v335 = vld [vmem:[#allocation2 + $0x10] sm:$0xff]
        %v336 = vld [vmem:[#allocation2 + $0x18] sm:$0xff]
        %337 = vst [vmem:[%s229] sm:$0xff] %v333
        %338 = vst [vmem:[%s229 + $0x8] sm:$0xff] %v334
        %339 = vst [vmem:[%s229 + $0x10] sm:$0xff] %v335
        %340 = vst [vmem:[%s229 + $0x18] sm:$0xff] %v336
        %s341 = smul.u32 4, %s22
        %p342 = scmp.lt.s32.totalorder %s21, 0
        %s343 = scalar_select %p342, %s21, 0
        %p344 = scmp.lt.s32.totalorder %s341, 7
        %s345 = scalar_select %p344, %s341, 7
        %s346 = smul.addr %s343, 8
        %s347 = sadd.s32 %s345, %s346
        %s348 = smul.addr %s347, 8
        %s349 = scalar_lea.vmem %s2, %s348
        // Predicated region
        $region37: #{_lambda_.14} parent=27 // pred_check
          %p350 = pneg %p111
        $region38: #{_lambda_.14} parent=27 // pred_check_branch
          %352 = sbr.rel (%p350) target = $region40
        $region39: #{_lambda_.14} parent=27 // pred_region
          %s353 = smul.u32 4, %s22
        $region40: #{_lambda_.14} parent=27 // pred_fallthru
          _
      $region28: #{_lambda_.14} parent=5 // pred_fallthru
        _
      %p354 = scmp.le.s32.totalorder 2, %s11
      // Predicated region
      $region41: #{_lambda_.14} parent=5 // pred_check
        %p355 = pneg %p354
      $region42: #{_lambda_.14} parent=5 // pred_check_branch
        %357 = sbr.rel (%p355) target = $region44
      $region43: #{_lambda_.14} parent=5 // pred_region
        %s358 = ssub.s32 %s11, 2
        // Predicated region
        $region45: #{_lambda_.14} parent=43 // pred_check
          %p359 = pneg %p117
        $region46: #{_lambda_.14} parent=43 // pred_check_branch
          %361 = sbr.rel (%p359) target = $region48
        $region47: #{_lambda_.14} parent=43 // pred_region
          %s362 = smul.u32 4, %s25
          %p363 = scmp.lt.s32.totalorder %s24, 0
          %s364 = scalar_select %p363, %s24, 0
          %p365 = scmp.lt.s32.totalorder %s362, 7
          %s366 = scalar_select %p365, %s362, 7
          %s367 = smul.addr %s364, 8
          %s368 = sadd.s32 %s366, %s367
          %s369 = smul.addr %s368, 8
          %s370 = scalar_lea.vmem %s2, %s369
        $region48: #{_lambda_.14} parent=43 // pred_fallthru
          _
      $region44: #{_lambda_.14} parent=5 // pred_fallthru
        _
    $region6: #{_lambda_.14} parent=1 // loop_footer
      %s15 = sadd.s32 1, %s11
    $region7: #{_lambda_.14} parent=1 // loop_footer_branch
      %10 = sbr.rel target = $region3
    $region8: #{_lambda_.14} parent=1 // loop_exit
      _
    %371 = vsyncpa [#allocation4], 1
    %s372 = scalar_lea.sflag [#allocation4], 1
    %373 = vsyncpa %s372, 1

// kernel: _lambda_.15
$region0: #{_lambda_.15}
  #allocation0 [shape = 'u32[]', space=smem, size = 0x4, offset = 0x4, fixed_abs, tag = 'smem constant byte address 0x4 - core index']
  #allocation1 [shape = 'u32[72,128]{1,0:T(1,128)}', space=vmem, size = 0x9000, scoped, tag = 'internal scratch']
  %s0 = inlined_call_operand.vmem [shape: f32[16,128], index: 0, kind: input, shape index: {}]
  %s1 = inlined_call_operand.vmem [shape: f32[1,1,128], index: 1, kind: output, shape index: {0}]
  %s2 = inlined_call_operand.vmem [shape: f32[1,1,128], index: 2, kind: output, shape index: {1}]
  %3 = xla_tuple %s1, %s2
  %s4 = sld [smem:[#allocation0]]
  $region22: #{_lambda_.15} parent=0
    _
  %s6 = ssub.s32 1, %s4
  %s7 = scalar_select 0, %s6, %s4
  // Predicated region
  $region2: #{_lambda_.15} parent=0 // pred_check
    _
  $region3: #{_lambda_.15} parent=0 // pred_check_branch
    %9 = sbr.rel (0) target = $region5
  $region4: #{_lambda_.15} parent=0 // pred_region
    _
  $region5: #{_lambda_.15} parent=0 // pred_fallthru
    _
  %v10 = vld [vmem:[%s0] sm:$0xff]
  %v11 = vld [vmem:[%s0 + $0x8] sm:$0xff]
  %v12 = vadd.f32 %v10, %v11
  %v13 = vrot.slane %v12, 4
  %v14 = vadd.f32 %v12, %v13
  %v15 = vrot.slane %v14, 2
  %v16 = vadd.f32 %v14, %v15
  %v17 = vrot.slane %v16, 1
  %v18 = vadd.f32 %v16, %v17
  %19 = vst [vmem:[%s1] sm:$0x1] %v18
  %v20 = vmul.f32 %v10, %v10
  %v21 = vmul.f32 %v11, %v11
  %v22 = vadd.f32 %v20, %v21
  %v23 = vrot.slane %v22, 4
  %v24 = vadd.f32 %v22, %v23
  %v25 = vrot.slane %v24, 2
  %v26 = vadd.f32 %v24, %v25
  %v27 = vrot.slane %v26, 1
  %v28 = vadd.f32 %v26, %v27
  %29 = vst [vmem:[%s2] sm:$0x1] %v28
  // Predicated region
  $region6: #{_lambda_.15} parent=0 // pred_check
    _
  $region7: #{_lambda_.15} parent=0 // pred_check_branch
    %31 = sbr.rel (0) target = $region9
  $region8: #{_lambda_.15} parent=0 // pred_region
    _
  $region9: #{_lambda_.15} parent=0 // pred_fallthru
    _
  // Predicated region
  $region10: #{_lambda_.15} parent=0 // pred_check
    _
  $region11: #{_lambda_.15} parent=0 // pred_check_branch
    %33 = sbr.rel (0) target = $region13
  $region12: #{_lambda_.15} parent=0 // pred_region
    _
  $region13: #{_lambda_.15} parent=0 // pred_fallthru
    _
  // Predicated region
  $region14: #{_lambda_.15} parent=0 // pred_check
    _
  $region15: #{_lambda_.15} parent=0 // pred_check_branch
    %35 = sbr.rel (0) target = $region17
  $region16: #{_lambda_.15} parent=0 // pred_region
    _
  $region17: #{_lambda_.15} parent=0 // pred_fallthru
    _
  // Predicated region
  $region18: #{_lambda_.15} parent=0 // pred_check
    _
  $region19: #{_lambda_.15} parent=0 // pred_check_branch
    %37 = sbr.rel (0) target = $region21
  $region20: #{_lambda_.15} parent=0 // pred_region
    _
  $region21: #{_lambda_.15} parent=0 // pred_fallthru
    _

// kernel: _lambda_.16
$region0: #{_lambda_.16}
  #allocation0 [shape = 'u32[]', space=smem, size = 0x4, offset = 0x4, fixed_abs, tag = 'smem constant byte address 0x4 - core index']
  #allocation1 [shape = 'u32[72,128]{1,0:T(1,128)}', space=vmem, size = 0x9000, scoped, tag = 'internal scratch']
  %s0 = inlined_call_operand.vmem [shape: f32[16,128], index: 0, kind: input, shape index: {}]
  %s1 = inlined_call_operand.vmem [shape: f32[1,128], index: 1, kind: input, shape index: {}]
  %s2 = inlined_call_operand.vmem [shape: f32[1,128], index: 2, kind: input, shape index: {}]
  %s3 = inlined_call_operand.vmem [shape: bf16[16,128], index: 3, kind: output, shape index: {}]
  %s4 = sld [smem:[#allocation0]]
  $region22: #{_lambda_.16} parent=0
    _
  %s6 = ssub.s32 1, %s4
  %s7 = scalar_select 0, %s6, %s4
  // Predicated region
  $region2: #{_lambda_.16} parent=0 // pred_check
    _
  $region3: #{_lambda_.16} parent=0 // pred_check_branch
    %9 = sbr.rel (0) target = $region5
  $region4: #{_lambda_.16} parent=0 // pred_region
    _
  $region5: #{_lambda_.16} parent=0 // pred_fallthru
    _
  // Predicated region
  $region6: #{_lambda_.16} parent=0 // pred_check
    _
  $region7: #{_lambda_.16} parent=0 // pred_check_branch
    %11 = sbr.rel (0) target = $region9
  $region8: #{_lambda_.16} parent=0 // pred_region
    _
  $region9: #{_lambda_.16} parent=0 // pred_fallthru
    _
  // Predicated region
  $region10: #{_lambda_.16} parent=0 // pred_check
    _
  $region11: #{_lambda_.16} parent=0 // pred_check_branch
    %13 = sbr.rel (0) target = $region13
  $region12: #{_lambda_.16} parent=0 // pred_region
    _
  $region13: #{_lambda_.16} parent=0 // pred_fallthru
    _
  %v14 = vld [vmem:[%s0] sm:$0xff]
  %v15 = vld [vmem:[%s0 + $0x8] sm:$0xff]
  %v16 = vld [vmem:[%s1] sm:$0x1]
  %v18 = vperm.slane %v16, 0
  %v20 = vmul.f32 %v14, %v18
  %v21 = vmul.f32 %v15, %v18
  %v22 = vld [vmem:[%s2] sm:$0x1]
  %v24 = vperm.slane %v22, 0
  %v26 = vadd.f32 %v20, %v24
  %v27 = vadd.f32 %v21, %v24
  %v28 = vmax.f32 %v26, 0.0
  %v29 = vmax.f32 %v27, 0.0
  %v30 = vpack.c.bf16 %v28, %v28
  %v31 = vpack.c.bf16 %v29, %v29
  %32 = vst [vmem:[%s3] sm:$0xf] %v30
  %33 = vst [vmem:[%s3 + $0x4] sm:$0xf] %v31
  // Predicated region
  $region14: #{_lambda_.16} parent=0 // pred_check
    _
  $region15: #{_lambda_.16} parent=0 // pred_check_branch
    %35 = sbr.rel (0) target = $region17
  $region16: #{_lambda_.16} parent=0 // pred_region
    _
  $region17: #{_lambda_.16} parent=0 // pred_fallthru
    _
  // Predicated region
  $region18: #{_lambda_.16} parent=0 // pred_check
    _
  $region19: #{_lambda_.16} parent=0 // pred_check_branch
    %37 = sbr.rel (0) target = $region21
  $region20: #{_lambda_.16} parent=0 // pred_region
    _
  $region21: #{_lambda_.16} parent=0 // pred_fallthru
    _

// kernel: _lambda_.17
$region0: #{_lambda_.17}
  #allocation0 [shape = 'u32[]', space=smem, size = 0x4, offset = 0x4, fixed_abs, tag = 'smem constant byte address 0x4 - core index']
  #allocation1 [shape = 'u32[72,128]{1,0:T(1,128)}', space=vmem, size = 0x9000, scoped, tag = 'internal scratch']
  #allocation2 [shape = 'f32[32,512]{1,0:T(8,128)}', space=vmem, size = 0x10000, scoped, tag = 'scratch operand']
  %s0 = inlined_call_operand.vmem [shape: bf16[32,64], index: 0, kind: input, shape index: {}]
  %s1 = inlined_call_operand.hbm [shape: bf16[64,512], index: 1, kind: input, shape index: {}]
  %s2 = inlined_call_operand.vmem [shape: f32[32,512], index: 2, kind: output, shape index: {}]
  %s3 = sld [smem:[#allocation0]]
  $region26: #{_lambda_.17} parent=0
    _
  %s5 = ssub.s32 1, %s3
  %s6 = scalar_select 0, %s5, %s3
  $region1: #{_lambda_.17} parent=0
    #allocation3 [shape = 'u8[65536]{0}', space=vmem, size = 0x10000, scoped, tag = 'input window, operand 1, single buffered']
    #allocation4 [shape = 's32[1]{0}', space=sflag, size = 0x4, scoped, tag = 'scoped memory for _lambda_.17']
    %7 = vsyncpa [#allocation4], 0
    // Predicated region
    $region2: #{_lambda_.17} parent=1 // pred_check
      _
    $region3: #{_lambda_.17} parent=1 // pred_check_branch
      %9 = sbr.rel (0) target = $region5
    $region4: #{_lambda_.17} parent=1 // pred_region
      _
    $region5: #{_lambda_.17} parent=1 // pred_fallthru
      _
    // Predicated region
    $region6: #{_lambda_.17} parent=1 // pred_check
      _
    $region7: #{_lambda_.17} parent=1 // pred_check_branch
      %11 = sbr.rel (0) target = $region9
    $region8: #{_lambda_.17} parent=1 // pred_region
      %13 = vsyncadd [#allocation4], 0
      %s14 = sshll.u32 %s1, 4
      %s15 = int_to_ptr.hbm [resolvable:$true] %s14
      %s16 = sshll.u32 [#allocation3], 4
      %s17 = int_to_ptr.vmem [resolvable:$true] %s16
      %22 = dma.hbm_to_vmem [thread:$0]  %s15, 2048, %s17, [#allocation4], 256, 256, 16
    $region9: #{_lambda_.17} parent=1 // pred_fallthru
      _
    // Predicated region
    $region10: #{_lambda_.17} parent=1 // pred_check
      _
    $region11: #{_lambda_.17} parent=1 // pred_check_branch
      %24 = sbr.rel (0) target = $region13
    $region12: #{_lambda_.17} parent=1 // pred_region
      %26 = dma.done [#allocation4], 2048
    $region13: #{_lambda_.17} parent=1 // pred_fallthru
      _
    %p28 = scmp.eq.s32.totalorder 0, 0
    // Predicated region
    $region14: #{_lambda_.17} parent=1 // pred_check
      %p29 = pneg %p28
    $region15: #{_lambda_.17} parent=1 // pred_check_branch
      %31 = sbr.rel (%p29) target = $region17
    $region16: #{_lambda_.17} parent=1 // pred_region
      %32 = vst [vmem:[#allocation2] sm:$0xff] 0.0
      %33 = vst [vmem:[#allocation2 + $0x8] sm:$0xff] 0.0
      %34 = vst [vmem:[#allocation2 + $0x10] sm:$0xff] 0.0
      %35 = vst [vmem:[#allocation2 + $0x18] sm:$0xff] 0.0
      %36 = vst [vmem:[#allocation2 + $0x20] sm:$0xff] 0.0
      %37 = vst [vmem:[#allocation2 + $0x28] sm:$0xff] 0.0
      %38 = vst [vmem:[#allocation2 + $0x30] sm:$0xff] 0.0
      %39 = vst [vmem:[#allocation2 + $0x38] sm:$0xff] 0.0
      %40 = vst [vmem:[#allocation2 + $0x40] sm:$0xff] 0.0
      %41 = vst [vmem:[#allocation2 + $0x48] sm:$0xff] 0.0
      %42 = vst [vmem:[#allocation2 + $0x50] sm:$0xff] 0.0
      %43 = vst [vmem:[#allocation2 + $0x58] sm:$0xff] 0.0
      %44 = vst [vmem:[#allocation2 + $0x60] sm:$0xff] 0.0
      %45 = vst [vmem:[#allocation2 + $0x68] sm:$0xff] 0.0
      %46 = vst [vmem:[#allocation2 + $0x70] sm:$0xff] 0.0
      %47 = vst [vmem:[#allocation2 + $0x78] sm:$0xff] 0.0
    $region17: #{_lambda_.17} parent=1 // pred_fallthru
      _
    %v48 = vld [vmem:[#allocation2] sm:$0xff]
    %v49 = vld [vmem:[#allocation2 + $0x8] sm:$0xff]
    %v50 = vld [vmem:[#allocation2 + $0x10] sm:$0xff]
    %v51 = vld [vmem:[#allocation2 + $0x18] sm:$0xff]
    %v52 = vld [vmem:[#allocation2 + $0x20] sm:$0xff]
    %v53 = vld [vmem:[#allocation2 + $0x28] sm:$0xff]
    %v54 = vld [vmem:[#allocation2 + $0x30] sm:$0xff]
    %v55 = vld [vmem:[#allocation2 + $0x38] sm:$0xff]
    %v56 = vld [vmem:[#allocation2 + $0x40] sm:$0xff]
    %v57 = vld [vmem:[#allocation2 + $0x48] sm:$0xff]
    %v58 = vld [vmem:[#allocation2 + $0x50] sm:$0xff]
    %v59 = vld [vmem:[#allocation2 + $0x58] sm:$0xff]
    %v60 = vld [vmem:[#allocation2 + $0x60] sm:$0xff]
    %v61 = vld [vmem:[#allocation2 + $0x68] sm:$0xff]
    %v62 = vld [vmem:[#allocation2 + $0x70] sm:$0xff]
    %v63 = vld [vmem:[#allocation2 + $0x78] sm:$0xff]
    %v64 = vld [vmem:[%s0] sm:$0xf]
    %v65 = vld [vmem:[%s0 + $0x4] sm:$0xf]
    %v66 = vld [vmem:[%s0 + $0x8] sm:$0xf]
    %v67 = vld [vmem:[%s0 + $0xc] sm:$0xf]
    %v68 = vld [vmem:[#allocation3] sm:$0xff]
    %v69 = vld [vmem:[#allocation3 + $0x8] sm:$0xff]
    %v70 = vld [vmem:[#allocation3 + $0x10] sm:$0xff]
    %v71 = vld [vmem:[#allocation3 + $0x18] sm:$0xff]
    %v72 = vld [vmem:[#allocation3 + $0x20] sm:$0xff]
    %v73 = vld [vmem:[#allocation3 + $0x28] sm:$0xff]
    %v74 = vld [vmem:[#allocation3 + $0x30] sm:$0xff]
    %v75 = vld [vmem:[#allocation3 + $0x38] sm:$0xff]
    %v76 = vld [vmem:[#allocation3 + $0x40] sm:$0xff]
    %v77 = vld [vmem:[#allocation3 + $0x48] sm:$0xff]
    %v78 = vld [vmem:[#allocation3 + $0x50] sm:$0xff]
    %v79 = vld [vmem:[#allocation3 + $0x58] sm:$0xff]
    %v80 = vld [vmem:[#allocation3 + $0x60] sm:$0xff]
    %v81 = vld [vmem:[#allocation3 + $0x68] sm:$0xff]
    %v82 = vld [vmem:[#allocation3 + $0x70] sm:$0xff]
    %v83 = vld [vmem:[#allocation3 + $0x78] sm:$0xff]
    %v88 = vunpack.c.l.b16 %v64
    %v89 = vunpack.c.l.b16 %v65
    %v90 = vunpack.c.l.b16 %v66
    %v91 = vunpack.c.l.b16 %v67
    %v92 = vpack.c.b16 %v89, %v88
    %v93 = vpack.c.b16 %v91, %v90
    %v110 = vunpack.c.l.b16 %v68
    %v111 = vunpack.c.h.b16 %v68
    %v112 = vunpack.c.l.b16 %v69
    %v113 = vunpack.c.h.b16 %v69
    %v114 = vunpack.c.l.b16 %v70
    %v115 = vunpack.c.h.b16 %v70
    %v116 = vunpack.c.l.b16 %v71
    %v117 = vunpack.c.h.b16 %v71
    %v118 = vunpack.c.l.b16 %v72
    %v119 = vunpack.c.h.b16 %v72
    %v120 = vunpack.c.l.b16 %v73
    %v121 = vunpack.c.h.b16 %v73
    %v122 = vunpack.c.l.b16 %v74
    %v123 = vunpack.c.h.b16 %v74
    %v124 = vunpack.c.l.b16 %v75
    %v125 = vunpack.c.h.b16 %v75
    %v126 = vunpack.c.l.b16 %v76
    %v127 = vunpack.c.h.b16 %v76
    %v128 = vunpack.c.l.b16 %v77
    %v129 = vunpack.c.h.b16 %v77
    %v130 = vunpack.c.l.b16 %v78
    %v131 = vunpack.c.h.b16 %v78
    %v132 = vunpack.c.l.b16 %v79
    %v133 = vunpack.c.h.b16 %v79
    %v134 = vunpack.c.l.b16 %v80
    %v135 = vunpack.c.h.b16 %v80
    %v136 = vunpack.c.l.b16 %v81
    %v137 = vunpack.c.h.b16 %v81
    %v138 = vunpack.c.l.b16 %v82
    %v139 = vunpack.c.h.b16 %v82
    %v140 = vunpack.c.l.b16 %v83
    %v141 = vunpack.c.h.b16 %v83
    %v142 = vpack.c.b16 %v114, %v110
    %v143 = vpack.c.b16 %v115, %v111
    %v144 = vpack.c.b16 %v116, %v112
    %v145 = vpack.c.b16 %v117, %v113
    %v146 = vpack.c.b16 %v122, %v118
    %v147 = vpack.c.b16 %v123, %v119
    %v148 = vpack.c.b16 %v124, %v120
    %v149 = vpack.c.b16 %v125, %v121
    %v150 = vpack.c.b16 %v130, %v126
    %v151 = vpack.c.b16 %v131, %v127
    %v152 = vpack.c.b16 %v132, %v128
    %v153 = vpack.c.b16 %v133, %v129
    %v154 = vpack.c.b16 %v138, %v134
    %v155 = vpack.c.b16 %v139, %v135
    %v156 = vpack.c.b16 %v140, %v136
    %v157 = vpack.c.b16 %v141, %v137
    %vm174 = vcmask 523264
    %v176 = vsel %vm174, %v92, 0
    %v179 = vsel %vm174, %v93, 0
    %181 = vmatpush.bf16.msra.mxu0 0
    %182 = vmatpush.bf16.msra.mxu0 0
    %183 = vmatpush.bf16.msra.mxu0 0
    %184 = vmatpush.bf16.msra.mxu0 0
    %185 = vmatpush.bf16.msra.mxu0 %v154
    %186 = vmatpush.bf16.msra.mxu0 %v150
    %187 = vmatpush.bf16.msra.mxu0 %v146
    %188 = vmatpush.bf16.msra.mxu0 %v142
    %189 = vmatmul.bf16.gmra.mxu0 %v176
    %v190 = vpop.f32.mrf.mxu0
    %v191 = vadd.f32 0.0, %v190
    %v192 = vpop.f32.mrf.mxu0
    %v193 = vadd.f32 0.0, %v192
    %194 = vmatmul.bf16.gmra.mxu0 %v179
    %v195 = vpop.f32.mrf.mxu0
    %v196 = vadd.f32 0.0, %v195
    %v197 = vpop.f32.mrf.mxu0
    %v198 = vadd.f32 0.0, %v197
    %199 = vdwg.mxu0
    %200 = vmatpush.bf16.msra.mxu0 0
    %201 = vmatpush.bf16.msra.mxu0 0
    %202 = vmatpush.bf16.msra.mxu0 0
    %203 = vmatpush.bf16.msra.mxu0 0
    %204 = vmatpush.bf16.msra.mxu0 %v155
    %205 = vmatpush.bf16.msra.mxu0 %v151
    %206 = vmatpush.bf16.msra.mxu0 %v147
    %207 = vmatpush.bf16.msra.mxu0 %v143
    %208 = vmatmul.bf16.gmra.mxu0 %v176
    %v209 = vpop.f32.mrf.mxu0
    %v210 = vadd.f32 0.0, %v209
    %v211 = vpop.f32.mrf.mxu0
    %v212 = vadd.f32 0.0, %v211
    %213 = vmatmul.bf16.gmra.mxu0 %v179
    %v214 = vpop.f32.mrf.mxu0
    %v215 = vadd.f32 0.0, %v214
    %v216 = vpop.f32.mrf.mxu0
    %v217 = vadd.f32 0.0, %v216
    %218 = vdwg.mxu0
    %219 = vmatpush.bf16.msra.mxu0 0
    %220 = vmatpush.bf16.msra.mxu0 0
    %221 = vmatpush.bf16.msra.mxu0 0
    %222 = vmatpush.bf16.msra.mxu0 0
    %223 = vmatpush.bf16.msra.mxu0 %v156
    %224 = vmatpush.bf16.msra.mxu0 %v152
    %225 = vmatpush.bf16.msra.mxu0 %v148
    %226 = vmatpush.bf16.msra.mxu0 %v144
    %227 = vmatmul.bf16.gmra.mxu0 %v176
    %v228 = vpop.f32.mrf.mxu0
    %v229 = vadd.f32 0.0, %v228
    %v230 = vpop.f32.mrf.mxu0
    %v231 = vadd.f32 0.0, %v230
    %232 = vmatmul.bf16.gmra.mxu0 %v179
    %v233 = vpop.f32.mrf.mxu0
    %v234 = vadd.f32 0.0, %v233
    %v235 = vpop.f32.mrf.mxu0
    %v236 = vadd.f32 0.0, %v235
    %237 = vdwg.mxu0
    %238 = vmatpush.bf16.msra.mxu0 0
    %239 = vmatpush.bf16.msra.mxu0 0
    %240 = vmatpush.bf16.msra.mxu0 0
    %241 = vmatpush.bf16.msra.mxu0 0
    %242 = vmatpush.bf16.msra.mxu0 %v157
    %243 = vmatpush.bf16.msra.mxu0 %v153
    %244 = vmatpush.bf16.msra.mxu0 %v149
    %245 = vmatpush.bf16.msra.mxu0 %v145
    %246 = vmatmul.bf16.gmra.mxu0 %v176
    %v247 = vpop.f32.mrf.mxu0
    %v248 = vadd.f32 0.0, %v247
    %v249 = vpop.f32.mrf.mxu0
    %v250 = vadd.f32 0.0, %v249
    %251 = vmatmul.bf16.gmra.mxu0 %v179
    %v252 = vpop.f32.mrf.mxu0
    %v253 = vadd.f32 0.0, %v252
    %v254 = vpop.f32.mrf.mxu0
    %v255 = vadd.f32 0.0, %v254
    %256 = vdwg.mxu0
    %v257 = vadd.f32 %v48, %v191
    %v258 = vadd.f32 %v49, %v210
    %v259 = vadd.f32 %v50, %v229
    %v260 = vadd.f32 %v51, %v248
    %v261 = vadd.f32 %v52, %v193
    %v262 = vadd.f32 %v53, %v212
    %v263 = vadd.f32 %v54, %v231
    %v264 = vadd.f32 %v55, %v250
    %v265 = vadd.f32 %v56, %v196
    %v266 = vadd.f32 %v57, %v215
    %v267 = vadd.f32 %v58, %v234
    %v268 = vadd.f32 %v59, %v253
    %v269 = vadd.f32 %v60, %v198
    %v270 = vadd.f32 %v61, %v217
    %v271 = vadd.f32 %v62, %v236
    %v272 = vadd.f32 %v63, %v255
    %273 = vst [vmem:[#allocation2] sm:$0xff] %v257
    %274 = vst [vmem:[#allocation2 + $0x8] sm:$0xff] %v258
    %275 = vst [vmem:[#allocation2 + $0x10] sm:$0xff] %v259
    %276 = vst [vmem:[#allocation2 + $0x18] sm:$0xff] %v260
    %277 = vst [vmem:[#allocation2 + $0x20] sm:$0xff] %v261
    %278 = vst [vmem:[#allocation2 + $0x28] sm:$0xff] %v262
    %279 = vst [vmem:[#allocation2 + $0x30] sm:$0xff] %v263
    %280 = vst [vmem:[#allocation2 + $0x38] sm:$0xff] %v264
    %281 = vst [vmem:[#allocation2 + $0x40] sm:$0xff] %v265
    %282 = vst [vmem:[#allocation2 + $0x48] sm:$0xff] %v266
    %283 = vst [vmem:[#allocation2 + $0x50] sm:$0xff] %v267
    %284 = vst [vmem:[#allocation2 + $0x58] sm:$0xff] %v268
    %285 = vst [vmem:[#allocation2 + $0x60] sm:$0xff] %v269
    %286 = vst [vmem:[#allocation2 + $0x68] sm:$0xff] %v270
    %287 = vst [vmem:[#allocation2 + $0x70] sm:$0xff] %v271
    %288 = vst [vmem:[#allocation2 + $0x78] sm:$0xff] %v272
    %v289 = vld [vmem:[#allocation2] sm:$0xff]
    %v290 = vld [vmem:[#allocation2 + $0x8] sm:$0xff]
    %v291 = vld [vmem:[#allocation2 + $0x10] sm:$0xff]
    %v292 = vld [vmem:[#allocation2 + $0x18] sm:$0xff]
    %v293 = vld [vmem:[#allocation2 + $0x20] sm:$0xff]
    %v294 = vld [vmem:[#allocation2 + $0x28] sm:$0xff]
    %v295 = vld [vmem:[#allocation2 + $0x30] sm:$0xff]
    %v296 = vld [vmem:[#allocation2 + $0x38] sm:$0xff]
    %v297 = vld [vmem:[#allocation2 + $0x40] sm:$0xff]
    %v298 = vld [vmem:[#allocation2 + $0x48] sm:$0xff]
    %v299 = vld [vmem:[#allocation2 + $0x50] sm:$0xff]
    %v300 = vld [vmem:[#allocation2 + $0x58] sm:$0xff]
    %v301 = vld [vmem:[#allocation2 + $0x60] sm:$0xff]
    %v302 = vld [vmem:[#allocation2 + $0x68] sm:$0xff]
    %v303 = vld [vmem:[#allocation2 + $0x70] sm:$0xff]
    %v304 = vld [vmem:[#allocation2 + $0x78] sm:$0xff]
    %305 = vst [vmem:[%s2] sm:$0xff] %v289
    %306 = vst [vmem:[%s2 + $0x8] sm:$0xff] %v290
    %307 = vst [vmem:[%s2 + $0x10] sm:$0xff] %v291
    %308 = vst [vmem:[%s2 + $0x18] sm:$0xff] %v292
    %309 = vst [vmem:[%s2 + $0x20] sm:$0xff] %v293
    %310 = vst [vmem:[%s2 + $0x28] sm:$0xff] %v294
    %311 = vst [vmem:[%s2 + $0x30] sm:$0xff] %v295
    %312 = vst [vmem:[%s2 + $0x38] sm:$0xff] %v296
    %313 = vst [vmem:[%s2 + $0x40] sm:$0xff] %v297
    %314 = vst [vmem:[%s2 + $0x48] sm:$0xff] %v298
    %315 = vst [vmem:[%s2 + $0x50] sm:$0xff] %v299
    %316 = vst [vmem:[%s2 + $0x58] sm:$0xff] %v300
    %317 = vst [vmem:[%s2 + $0x60] sm:$0xff] %v301
    %318 = vst [vmem:[%s2 + $0x68] sm:$0xff] %v302
    %319 = vst [vmem:[%s2 + $0x70] sm:$0xff] %v303
    %320 = vst [vmem:[%s2 + $0x78] sm:$0xff] %v304
    // Predicated region
    $region18: #{_lambda_.17} parent=1 // pred_check
      _
    $region19: #{_lambda_.17} parent=1 // pred_check_branch
      %322 = sbr.rel (0) target = $region21
    $region20: #{_lambda_.17} parent=1 // pred_region
      _
    $region21: #{_lambda_.17} parent=1 // pred_fallthru
      _
    // Predicated region
    $region22: #{_lambda_.17} parent=1 // pred_check
      _
    $region23: #{_lambda_.17} parent=1 // pred_check_branch
      %324 = sbr.rel (0) target = $region25
    $region24: #{_lambda_.17} parent=1 // pred_region
      _
    $region25: #{_lambda_.17} parent=1 // pred_fallthru
      _
    %325 = vsyncpa [#allocation4], 1

// kernel: tile.58
$region0: #{tile.58}
  #allocation0 [shape = 's32[1]{0}', space=sflag, size = 0x4, scoped, tag = 'scoped memory for tile.58']
  %s0 = inlined_call_operand.vmem [shape: f32[32], index: 0, kind: input, shape index: {}]
  %s1 = inlined_call_operand.vmem [shape: f32[4,32], index: 1, kind: output, shape index: {}]
  // Predicated region
  $region2: #{tile.58} parent=0 // pred_check
    _
  $region3: #{tile.58} parent=0 // pred_check_branch
    %3 = sbr.rel (0) target = $region5
  $region4: #{tile.58} parent=0 // pred_region
    _
  $region5: #{tile.58} parent=0 // pred_fallthru
    _
  %v4 = vld [vmem:[%s0] ss:$0 sm:$0xff]
  %5 = vst [vmem:[%s1] sm:$0xf] %v4

// kernel: tile.59
$region0: #{tile.59}
  %s0 = inlined_call_operand.vmem [shape: f32[4,32], index: 0, kind: input, shape index: {}]
  %s1 = inlined_call_operand.vmem [shape: f32[1,128], index: 1, kind: output, shape index: {}]
  $region1: #{tile.59} parent=0
    #allocation0 [shape = 'u8[4096]{0}', space=vmem, size = 0x1000, scoped, tag = 'scoped mem for output reshape']
    #allocation1 [shape = 'u8[4096]{0}', space=vmem, size = 0x1000, scoped, tag = 'scoped mem for input reshape']
    %s3 = ssub.s32 16, 1
    %v4 = vld [vmem:[%s0] sm:%s3]
    %5 = vst [vmem:[#allocation1] sm:%s3] %v4
    %v6 = vld [vmem:[#allocation1] sm:$0x1]
    %vm7 = vcmask 261120
    %8 = vst.msk [vmem:[#allocation0] sm:$0x1] %vm7, %v6
    %s9 = scalar_lea.vmem [#allocation1], 3
    %v10 = vld [vmem:[%s9] sm:$0x1]
    %11 = vrot.lane.b32.xlu0 %v10, 96
    %v12 = vpop.permute.xlu0 %11
    %vm13 = vcmask 1048320
    %14 = vst.msk [vmem:[#allocation0] sm:$0x1] %vm13, %v12
    %s15 = scalar_lea.vmem [#allocation1], 2
    %v16 = vld [vmem:[%s15] sm:$0x1]
    %17 = vrot.lane.b32.xlu0 %v16, 64
    %v18 = vpop.permute.xlu0 %17
    %vm19 = vcmask 785920
    %20 = vst.msk [vmem:[#allocation0] sm:$0x1] %vm19, %v18
    %s21 = scalar_lea.vmem [#allocation1], 1
    %v22 = vld [vmem:[%s21] sm:$0x1]
    %23 = vrot.lane.b32.xlu0 %v22, 32
    %v24 = vpop.permute.xlu0 %23
    %vm25 = vcmask 523520
    %26 = vst.msk [vmem:[#allocation0] sm:$0x1] %vm25, %v24
    %s28 = ssub.s32 2, 1
    %v29 = vld [vmem:[#allocation0] sm:%s28]
    %s31 = ssub.s32 2, 1
    %32 = vst [vmem:[%s1] sm:%s31] %v29

// kernel: _lambda_.18
$region0: #{_lambda_.18}
  #allocation0 [shape = 'u32[]', space=smem, size = 0x4, offset = 0x4, fixed_abs, tag = 'smem constant byte address 0x4 - core index']
  #allocation1 [shape = 'u32[72,128]{1,0:T(1,128)}', space=vmem, size = 0x9000, scoped, tag = 'internal scratch']
  %s0 = inlined_call_operand.vmem [shape: f32[32,128], index: 0, kind: input, shape index: {}]
  %s1 = inlined_call_operand.vmem [shape: f32[1,1,128], index: 1, kind: output, shape index: {0}]
  %s2 = inlined_call_operand.vmem [shape: f32[1,1,128], index: 2, kind: output, shape index: {1}]
  %3 = xla_tuple %s1, %s2
  %s4 = sld [smem:[#allocation0]]
  $region22: #{_lambda_.18} parent=0
    _
  %s6 = ssub.s32 1, %s4
  %s7 = scalar_select 0, %s6, %s4
  // Predicated region
  $region2: #{_lambda_.18} parent=0 // pred_check
    _
  $region3: #{_lambda_.18} parent=0 // pred_check_branch
    %9 = sbr.rel (0) target = $region5
  $region4: #{_lambda_.18} parent=0 // pred_region
    _
  $region5: #{_lambda_.18} parent=0 // pred_fallthru
    _
  %v10 = vld [vmem:[%s0] sm:$0xff]
  %v11 = vld [vmem:[%s0 + $0x8] sm:$0xff]
  %v12 = vld [vmem:[%s0 + $0x10] sm:$0xff]
  %v13 = vld [vmem:[%s0 + $0x18] sm:$0xff]
  %v14 = vadd.f32 %v10, %v11
  %v15 = vadd.f32 %v14, %v12
  %v16 = vadd.f32 %v15, %v13
  %v17 = vrot.slane %v16, 4
  %v18 = vadd.f32 %v16, %v17
  %v19 = vrot.slane %v18, 2
  %v20 = vadd.f32 %v18, %v19
  %v21 = vrot.slane %v20, 1
  %v22 = vadd.f32 %v20, %v21
  %23 = vst [vmem:[%s1] sm:$0x1] %v22
  %v24 = vmul.f32 %v10, %v10
  %v25 = vmul.f32 %v11, %v11
  %v26 = vmul.f32 %v12, %v12
  %v27 = vmul.f32 %v13, %v13
  %v28 = vadd.f32 %v24, %v25
  %v29 = vadd.f32 %v28, %v26
  %v30 = vadd.f32 %v29, %v27
  %v31 = vrot.slane %v30, 4
  %v32 = vadd.f32 %v30, %v31
  %v33 = vrot.slane %v32, 2
  %v34 = vadd.f32 %v32, %v33
  %v35 = vrot.slane %v34, 1
  %v36 = vadd.f32 %v34, %v35
  %37 = vst [vmem:[%s2] sm:$0x1] %v36
  // Predicated region
  $region6: #{_lambda_.18} parent=0 // pred_check
    _
  $region7: #{_lambda_.18} parent=0 // pred_check_branch
    %39 = sbr.rel (0) target = $region9
  $region8: #{_lambda_.18} parent=0 // pred_region
    _
  $region9: #{_lambda_.18} parent=0 // pred_fallthru
    _
  // Predicated region
  $region10: #{_lambda_.18} parent=0 // pred_check
    _
  $region11: #{_lambda_.18} parent=0 // pred_check_branch
    %41 = sbr.rel (0) target = $region13
  $region12: #{_lambda_.18} parent=0 // pred_region
    _
  $region13: #{_lambda_.18} parent=0 // pred_fallthru
    _
  // Predicated region
  $region14: #{_lambda_.18} parent=0 // pred_check
    _
  $region15: #{_lambda_.18} parent=0 // pred_check_branch
    %43 = sbr.rel (0) target = $region17
  $region16: #{_lambda_.18} parent=0 // pred_region
    _
  $region17: #{_lambda_.18} parent=0 // pred_fallthru
    _
  // Predicated region
  $region18: #{_lambda_.18} parent=0 // pred_check
    _
  $region19: #{_lambda_.18} parent=0 // pred_check_branch
    %45 = sbr.rel (0) target = $region21
  $region20: #{_lambda_.18} parent=0 // pred_region
    _
  $region21: #{_lambda_.18} parent=0 // pred_fallthru
    _

// kernel: _lambda_.19
$region0: #{_lambda_.19}
  #allocation0 [shape = 'u32[]', space=smem, size = 0x4, offset = 0x4, fixed_abs, tag = 'smem constant byte address 0x4 - core index']
  #allocation1 [shape = 'u32[72,128]{1,0:T(1,128)}', space=vmem, size = 0x9000, scoped, tag = 'internal scratch']
  %s0 = inlined_call_operand.vmem [shape: f32[32,128], index: 0, kind: input, shape index: {}]
  %s1 = inlined_call_operand.vmem [shape: f32[1,128], index: 1, kind: input, shape index: {}]
  %s2 = inlined_call_operand.vmem [shape: f32[1,128], index: 2, kind: input, shape index: {}]
  %s3 = inlined_call_operand.vmem [shape: bf16[32,128], index: 3, kind: output, shape index: {}]
  %s4 = sld [smem:[#allocation0]]
  $region22: #{_lambda_.19} parent=0
    _
  %s6 = ssub.s32 1, %s4
  %s7 = scalar_select 0, %s6, %s4
  // Predicated region
  $region2: #{_lambda_.19} parent=0 // pred_check
    _
  $region3: #{_lambda_.19} parent=0 // pred_check_branch
    %9 = sbr.rel (0) target = $region5
  $region4: #{_lambda_.19} parent=0 // pred_region
    _
  $region5: #{_lambda_.19} parent=0 // pred_fallthru
    _
  // Predicated region
  $region6: #{_lambda_.19} parent=0 // pred_check
    _
  $region7: #{_lambda_.19} parent=0 // pred_check_branch
    %11 = sbr.rel (0) target = $region9
  $region8: #{_lambda_.19} parent=0 // pred_region
    _
  $region9: #{_lambda_.19} parent=0 // pred_fallthru
    _
  // Predicated region
  $region10: #{_lambda_.19} parent=0 // pred_check
    _
  $region11: #{_lambda_.19} parent=0 // pred_check_branch
    %13 = sbr.rel (0) target = $region13
  $region12: #{_lambda_.19} parent=0 // pred_region
    _
  $region13: #{_lambda_.19} parent=0 // pred_fallthru
    _
  %v14 = vld [vmem:[%s0] sm:$0xff]
  %v15 = vld [vmem:[%s0 + $0x8] sm:$0xff]
  %v16 = vld [vmem:[%s0 + $0x10] sm:$0xff]
  %v17 = vld [vmem:[%s0 + $0x18] sm:$0xff]
  %v18 = vld [vmem:[%s1] sm:$0x1]
  %v20 = vperm.slane %v18, 0
  %v22 = vmul.f32 %v14, %v20
  %v23 = vmul.f32 %v15, %v20
  %v24 = vmul.f32 %v16, %v20
  %v25 = vmul.f32 %v17, %v20
  %v26 = vld [vmem:[%s2] sm:$0x1]
  %v28 = vperm.slane %v26, 0
  %v30 = vadd.f32 %v22, %v28
  %v31 = vadd.f32 %v23, %v28
  %v32 = vadd.f32 %v24, %v28
  %v33 = vadd.f32 %v25, %v28
  %v34 = vmax.f32 %v30, 0.0
  %v35 = vmax.f32 %v31, 0.0
  %v36 = vmax.f32 %v32, 0.0
  %v37 = vmax.f32 %v33, 0.0
  %v38 = vpack.c.bf16 %v34, %v34
  %v39 = vpack.c.bf16 %v35, %v35
  %v40 = vpack.c.bf16 %v36, %v36
  %v41 = vpack.c.bf16 %v37, %v37
  %42 = vst [vmem:[%s3] sm:$0xf] %v38
  %43 = vst [vmem:[%s3 + $0x4] sm:$0xf] %v39
  %44 = vst [vmem:[%s3 + $0x8] sm:$0xf] %v40
  %45 = vst [vmem:[%s3 + $0xc] sm:$0xf] %v41
  // Predicated region
  $region14: #{_lambda_.19} parent=0 // pred_check
    _
  $region15: #{_lambda_.19} parent=0 // pred_check_branch
    %47 = sbr.rel (0) target = $region17
  $region16: #{_lambda_.19} parent=0 // pred_region
    _
  $region17: #{_lambda_.19} parent=0 // pred_fallthru
    _
  // Predicated region
  $region18: #{_lambda_.19} parent=0 // pred_check
    _
  $region19: #{_lambda_.19} parent=0 // pred_check_branch
    %49 = sbr.rel (0) target = $region21
  $region20: #{_lambda_.19} parent=0 // pred_region
    _
  $region21: #{_lambda_.19} parent=0 // pred_fallthru
    _

// kernel: _lambda_.20
$region0: #{_lambda_.20}
  #allocation0 [shape = 'u32[]', space=smem, size = 0x4, offset = 0x4, fixed_abs, tag = 'smem constant byte address 0x4 - core index']
  #allocation1 [shape = 'u32[72,128]{1,0:T(1,128)}', space=vmem, size = 0x9000, scoped, tag = 'internal scratch']
  #allocation2 [shape = 'f32[128,256]{1,0:T(8,128)}', space=vmem, size = 0x20000, scoped, tag = 'scratch operand']
  %s0 = inlined_call_operand.vmem [shape: bf16[128,32], index: 0, kind: input, shape index: {}]
  %s1 = inlined_call_operand.vmem [shape: bf16[32,256], index: 1, kind: input, shape index: {}]
  %s2 = inlined_call_operand.vmem [shape: f32[128,256], index: 2, kind: output, shape index: {}]
  %s3 = sld [smem:[#allocation0]]
  $region22: #{_lambda_.20} parent=0
    _
  %s5 = ssub.s32 1, %s3
  %s6 = scalar_select 0, %s5, %s3
  // Predicated region
  $region2: #{_lambda_.20} parent=0 // pred_check
    _
  $region3: #{_lambda_.20} parent=0 // pred_check_branch
    %8 = sbr.rel (0) target = $region5
  $region4: #{_lambda_.20} parent=0 // pred_region
    _
  $region5: #{_lambda_.20} parent=0 // pred_fallthru
    _
  // Predicated region
  $region6: #{_lambda_.20} parent=0 // pred_check
    _
  $region7: #{_lambda_.20} parent=0 // pred_check_branch
    %10 = sbr.rel (0) target = $region9
  $region8: #{_lambda_.20} parent=0 // pred_region
    _
  $region9: #{_lambda_.20} parent=0 // pred_fallthru
    _
  %p12 = scmp.eq.s32.totalorder 0, 0
  // Predicated region
  $region10: #{_lambda_.20} parent=0 // pred_check
    %p13 = pneg %p12
  $region11: #{_lambda_.20} parent=0 // pred_check_branch
    %15 = sbr.rel (%p13) target = $region13
  $region12: #{_lambda_.20} parent=0 // pred_region
    %16 = vst [vmem:[#allocation2] sm:$0xff] 0.0
    %17 = vst [vmem:[#allocation2 + $0x8] sm:$0xff] 0.0
    %18 = vst [vmem:[#allocation2 + $0x10] sm:$0xff] 0.0
    %19 = vst [vmem:[#allocation2 + $0x18] sm:$0xff] 0.0
    %20 = vst [vmem:[#allocation2 + $0x20] sm:$0xff] 0.0
    %21 = vst [vmem:[#allocation2 + $0x28] sm:$0xff] 0.0
    %22 = vst [vmem:[#allocation2 + $0x30] sm:$0xff] 0.0
    %23 = vst [vmem:[#allocation2 + $0x38] sm:$0xff] 0.0
    %24 = vst [vmem:[#allocation2 + $0x40] sm:$0xff] 0.0
    %25 = vst [vmem:[#allocation2 + $0x48] sm:$0xff] 0.0
    %26 = vst [vmem:[#allocation2 + $0x50] sm:$0xff] 0.0
    %27 = vst [vmem:[#allocation2 + $0x58] sm:$0xff] 0.0
    %28 = vst [vmem:[#allocation2 + $0x60] sm:$0xff] 0.0
    %29 = vst [vmem:[#allocation2 + $0x68] sm:$0xff] 0.0
    %30 = vst [vmem:[#allocation2 + $0x70] sm:$0xff] 0.0
    %31 = vst [vmem:[#allocation2 + $0x78] sm:$0xff] 0.0
    %32 = vst [vmem:[#allocation2 + $0x80] sm:$0xff] 0.0
    %33 = vst [vmem:[#allocation2 + $0x88] sm:$0xff] 0.0
    %34 = vst [vmem:[#allocation2 + $0x90] sm:$0xff] 0.0
    %35 = vst [vmem:[#allocation2 + $0x98] sm:$0xff] 0.0
    %36 = vst [vmem:[#allocation2 + $0xa0] sm:$0xff] 0.0
    %37 = vst [vmem:[#allocation2 + $0xa8] sm:$0xff] 0.0
    %38 = vst [vmem:[#allocation2 + $0xb0] sm:$0xff] 0.0
    %39 = vst [vmem:[#allocation2 + $0xb8] sm:$0xff] 0.0
    %40 = vst [vmem:[#allocation2 + $0xc0] sm:$0xff] 0.0
    %41 = vst [vmem:[#allocation2 + $0xc8] sm:$0xff] 0.0
    %42 = vst [vmem:[#allocation2 + $0xd0] sm:$0xff] 0.0
    %43 = vst [vmem:[#allocation2 + $0xd8] sm:$0xff] 0.0
    %44 = vst [vmem:[#allocation2 + $0xe0] sm:$0xff] 0.0
    %45 = vst [vmem:[#allocation2 + $0xe8] sm:$0xff] 0.0
    %46 = vst [vmem:[#allocation2 + $0xf0] sm:$0xff] 0.0
    %47 = vst [vmem:[#allocation2 + $0xf8] sm:$0xff] 0.0
  $region13: #{_lambda_.20} parent=0 // pred_fallthru
    _
  %v48 = vld [vmem:[#allocation2] sm:$0xff]
  %v49 = vld [vmem:[#allocation2 + $0x8] sm:$0xff]
  %v50 = vld [vmem:[#allocation2 + $0x10] sm:$0xff]
  %v51 = vld [vmem:[#allocation2 + $0x18] sm:$0xff]
  %v52 = vld [vmem:[#allocation2 + $0x20] sm:$0xff]
  %v53 = vld [vmem:[#allocation2 + $0x28] sm:$0xff]
  %v54 = vld [vmem:[#allocation2 + $0x30] sm:$0xff]
  %v55 = vld [vmem:[#allocation2 + $0x38] sm:$0xff]
  %v56 = vld [vmem:[#allocation2 + $0x40] sm:$0xff]
  %v57 = vld [vmem:[#allocation2 + $0x48] sm:$0xff]
  %v58 = vld [vmem:[#allocation2 + $0x50] sm:$0xff]
  %v59 = vld [vmem:[#allocation2 + $0x58] sm:$0xff]
  %v60 = vld [vmem:[#allocation2 + $0x60] sm:$0xff]
  %v61 = vld [vmem:[#allocation2 + $0x68] sm:$0xff]
  %v62 = vld [vmem:[#allocation2 + $0x70] sm:$0xff]
  %v63 = vld [vmem:[#allocation2 + $0x78] sm:$0xff]
  %v64 = vld [vmem:[#allocation2 + $0x80] sm:$0xff]
  %v65 = vld [vmem:[#allocation2 + $0x88] sm:$0xff]
  %v66 = vld [vmem:[#allocation2 + $0x90] sm:$0xff]
  %v67 = vld [vmem:[#allocation2 + $0x98] sm:$0xff]
  %v68 = vld [vmem:[#allocation2 + $0xa0] sm:$0xff]
  %v69 = vld [vmem:[#allocation2 + $0xa8] sm:$0xff]
  %v70 = vld [vmem:[#allocation2 + $0xb0] sm:$0xff]
  %v71 = vld [vmem:[#allocation2 + $0xb8] sm:$0xff]
  %v72 = vld [vmem:[#allocation2 + $0xc0] sm:$0xff]
  %v73 = vld [vmem:[#allocation2 + $0xc8] sm:$0xff]
  %v74 = vld [vmem:[#allocation2 + $0xd0] sm:$0xff]
  %v75 = vld [vmem:[#allocation2 + $0xd8] sm:$0xff]
  %v76 = vld [vmem:[#allocation2 + $0xe0] sm:$0xff]
  %v77 = vld [vmem:[#allocation2 + $0xe8] sm:$0xff]
  %v78 = vld [vmem:[#allocation2 + $0xf0] sm:$0xff]
  %v79 = vld [vmem:[#allocation2 + $0xf8] sm:$0xff]
  %v80 = vld [vmem:[%s0] sm:$0xf]
  %v81 = vld [vmem:[%s0 + $0x4] sm:$0xf]
  %v82 = vld [vmem:[%s0 + $0x8] sm:$0xf]
  %v83 = vld [vmem:[%s0 + $0xc] sm:$0xf]
  %v84 = vld [vmem:[%s0 + $0x10] sm:$0xf]
  %v85 = vld [vmem:[%s0 + $0x14] sm:$0xf]
  %v86 = vld [vmem:[%s0 + $0x18] sm:$0xf]
  %v87 = vld [vmem:[%s0 + $0x1c] sm:$0xf]
  %v88 = vld [vmem:[%s0 + $0x20] sm:$0xf]
  %v89 = vld [vmem:[%s0 + $0x24] sm:$0xf]
  %v90 = vld [vmem:[%s0 + $0x28] sm:$0xf]
  %v91 = vld [vmem:[%s0 + $0x2c] sm:$0xf]
  %v92 = vld [vmem:[%s0 + $0x30] sm:$0xf]
  %v93 = vld [vmem:[%s0 + $0x34] sm:$0xf]
  %v94 = vld [vmem:[%s0 + $0x38] sm:$0xf]
  %v95 = vld [vmem:[%s0 + $0x3c] sm:$0xf]
  %v96 = vld [vmem:[%s1] sm:$0xff]
  %v97 = vld [vmem:[%s1 + $0x8] sm:$0xff]
  %v98 = vld [vmem:[%s1 + $0x10] sm:$0xff]
  %v99 = vld [vmem:[%s1 + $0x18] sm:$0xff]
  %v116 = vunpack.c.l.b16 %v80
  %v117 = vunpack.c.l.b16 %v81
  %v118 = vunpack.c.l.b16 %v82
  %v119 = vunpack.c.l.b16 %v83
  %v120 = vunpack.c.l.b16 %v84
  %v121 = vunpack.c.l.b16 %v85
  %v122 = vunpack.c.l.b16 %v86
  %v123 = vunpack.c.l.b16 %v87
  %v124 = vunpack.c.l.b16 %v88
  %v125 = vunpack.c.l.b16 %v89
  %v126 = vunpack.c.l.b16 %v90
  %v127 = vunpack.c.l.b16 %v91
  %v128 = vunpack.c.l.b16 %v92
  %v129 = vunpack.c.l.b16 %v93
  %v130 = vunpack.c.l.b16 %v94
  %v131 = vunpack.c.l.b16 %v95
  %v132 = vpack.c.b16 %v117, %v116
  %v133 = vpack.c.b16 %v119, %v118
  %v134 = vpack.c.b16 %v121, %v120
  %v135 = vpack.c.b16 %v123, %v122
  %v136 = vpack.c.b16 %v125, %v124
  %v137 = vpack.c.b16 %v127, %v126
  %v138 = vpack.c.b16 %v129, %v128
  %v139 = vpack.c.b16 %v131, %v130
  %v144 = vunpack.c.l.b16 %v96
  %v145 = vunpack.c.h.b16 %v96
  %v146 = vunpack.c.l.b16 %v97
  %v147 = vunpack.c.h.b16 %v97
  %v148 = vunpack.c.l.b16 %v98
  %v149 = vunpack.c.h.b16 %v98
  %v150 = vunpack.c.l.b16 %v99
  %v151 = vunpack.c.h.b16 %v99
  %v152 = vpack.c.b16 %v146, %v144
  %v153 = vpack.c.b16 %v147, %v145
  %v154 = vpack.c.b16 %v150, %v148
  %v155 = vpack.c.b16 %v151, %v149
  %vm160 = vcmask 261120
  %v162 = vsel %vm160, %v132, 0
  %v165 = vsel %vm160, %v133, 0
  %v168 = vsel %vm160, %v134, 0
  %v171 = vsel %vm160, %v135, 0
  %v174 = vsel %vm160, %v136, 0
  %v177 = vsel %vm160, %v137, 0
  %v180 = vsel %vm160, %v138, 0
  %v183 = vsel %vm160, %v139, 0
  %185 = vmatpush.bf16.msra.mxu0 0
  %186 = vmatpush.bf16.msra.mxu0 0
  %187 = vmatpush.bf16.msra.mxu0 0
  %188 = vmatpush.bf16.msra.mxu0 0
  %189 = vmatpush.bf16.msra.mxu0 0
  %190 = vmatpush.bf16.msra.mxu0 0
  %191 = vmatpush.bf16.msra.mxu0 %v154
  %192 = vmatpush.bf16.msra.mxu0 %v152
  %193 = vmatmul.bf16.gmra.mxu0 %v162
  %v194 = vpop.f32.mrf.mxu0
  %v195 = vadd.f32 0.0, %v194
  %v196 = vpop.f32.mrf.mxu0
  %v197 = vadd.f32 0.0, %v196
  %198 = vmatmul.bf16.gmra.mxu0 %v165
  %v199 = vpop.f32.mrf.mxu0
  %v200 = vadd.f32 0.0, %v199
  %v201 = vpop.f32.mrf.mxu0
  %v202 = vadd.f32 0.0, %v201
  %203 = vmatmul.bf16.gmra.mxu0 %v168
  %v204 = vpop.f32.mrf.mxu0
  %v205 = vadd.f32 0.0, %v204
  %v206 = vpop.f32.mrf.mxu0
  %v207 = vadd.f32 0.0, %v206
  %208 = vmatmul.bf16.gmra.mxu0 %v171
  %v209 = vpop.f32.mrf.mxu0
  %v210 = vadd.f32 0.0, %v209
  %v211 = vpop.f32.mrf.mxu0
  %v212 = vadd.f32 0.0, %v211
  %213 = vmatmul.bf16.gmra.mxu0 %v174
  %v214 = vpop.f32.mrf.mxu0
  %v215 = vadd.f32 0.0, %v214
  %v216 = vpop.f32.mrf.mxu0
  %v217 = vadd.f32 0.0, %v216
  %218 = vmatmul.bf16.gmra.mxu0 %v177
  %v219 = vpop.f32.mrf.mxu0
  %v220 = vadd.f32 0.0, %v219
  %v221 = vpop.f32.mrf.mxu0
  %v222 = vadd.f32 0.0, %v221
  %223 = vmatmul.bf16.gmra.mxu0 %v180
  %v224 = vpop.f32.mrf.mxu0
  %v225 = vadd.f32 0.0, %v224
  %v226 = vpop.f32.mrf.mxu0
  %v227 = vadd.f32 0.0, %v226
  %228 = vmatmul.bf16.gmra.mxu0 %v183
  %v229 = vpop.f32.mrf.mxu0
  %v230 = vadd.f32 0.0, %v229
  %v231 = vpop.f32.mrf.mxu0
  %v232 = vadd.f32 0.0, %v231
  %233 = vdwg.mxu0
  %234 = vmatpush.bf16.msra.mxu0 0
  %235 = vmatpush.bf16.msra.mxu0 0
  %236 = vmatpush.bf16.msra.mxu0 0
  %237 = vmatpush.bf16.msra.mxu0 0
  %238 = vmatpush.bf16.msra.mxu0 0
  %239 = vmatpush.bf16.msra.mxu0 0
  %240 = vmatpush.bf16.msra.mxu0 %v155
  %241 = vmatpush.bf16.msra.mxu0 %v153
  %242 = vmatmul.bf16.gmra.mxu0 %v162
  %v243 = vpop.f32.mrf.mxu0
  %v244 = vadd.f32 0.0, %v243
  %v245 = vpop.f32.mrf.mxu0
  %v246 = vadd.f32 0.0, %v245
  %247 = vmatmul.bf16.gmra.mxu0 %v165
  %v248 = vpop.f32.mrf.mxu0
  %v249 = vadd.f32 0.0, %v248
  %v250 = vpop.f32.mrf.mxu0
  %v251 = vadd.f32 0.0, %v250
  %252 = vmatmul.bf16.gmra.mxu0 %v168
  %v253 = vpop.f32.mrf.mxu0
  %v254 = vadd.f32 0.0, %v253
  %v255 = vpop.f32.mrf.mxu0
  %v256 = vadd.f32 0.0, %v255
  %257 = vmatmul.bf16.gmra.mxu0 %v171
  %v258 = vpop.f32.mrf.mxu0
  %v259 = vadd.f32 0.0, %v258
  %v260 = vpop.f32.mrf.mxu0
  %v261 = vadd.f32 0.0, %v260
  %262 = vmatmul.bf16.gmra.mxu0 %v174
  %v263 = vpop.f32.mrf.mxu0
  %v264 = vadd.f32 0.0, %v263
  %v265 = vpop.f32.mrf.mxu0
  %v266 = vadd.f32 0.0, %v265
  %267 = vmatmul.bf16.gmra.mxu0 %v177
  %v268 = vpop.f32.mrf.mxu0
  %v269 = vadd.f32 0.0, %v268
  %v270 = vpop.f32.mrf.mxu0
  %v271 = vadd.f32 0.0, %v270
  %272 = vmatmul.bf16.gmra.mxu0 %v180
  %v273 = vpop.f32.mrf.mxu0
  %v274 = vadd.f32 0.0, %v273
  %v275 = vpop.f32.mrf.mxu0
  %v276 = vadd.f32 0.0, %v275
  %277 = vmatmul.bf16.gmra.mxu0 %v183
  %v278 = vpop.f32.mrf.mxu0
  %v279 = vadd.f32 0.0, %v278
  %v280 = vpop.f32.mrf.mxu0
  %v281 = vadd.f32 0.0, %v280
  %282 = vdwg.mxu0
  %v283 = vadd.f32 %v48, %v195
  %v284 = vadd.f32 %v49, %v244
  %v285 = vadd.f32 %v50, %v197
  %v286 = vadd.f32 %v51, %v246
  %v287 = vadd.f32 %v52, %v200
  %v288 = vadd.f32 %v53, %v249
  %v289 = vadd.f32 %v54, %v202
  %v290 = vadd.f32 %v55, %v251
  %v291 = vadd.f32 %v56, %v205
  %v292 = vadd.f32 %v57, %v254
  %v293 = vadd.f32 %v58, %v207
  %v294 = vadd.f32 %v59, %v256
  %v295 = vadd.f32 %v60, %v210
  %v296 = vadd.f32 %v61, %v259
  %v297 = vadd.f32 %v62, %v212
  %v298 = vadd.f32 %v63, %v261
  %v299 = vadd.f32 %v64, %v215
  %v300 = vadd.f32 %v65, %v264
  %v301 = vadd.f32 %v66, %v217
  %v302 = vadd.f32 %v67, %v266
  %v303 = vadd.f32 %v68, %v220
  %v304 = vadd.f32 %v69, %v269
  %v305 = vadd.f32 %v70, %v222
  %v306 = vadd.f32 %v71, %v271
  %v307 = vadd.f32 %v72, %v225
  %v308 = vadd.f32 %v73, %v274
  %v309 = vadd.f32 %v74, %v227
  %v310 = vadd.f32 %v75, %v276
  %v311 = vadd.f32 %v76, %v230
  %v312 = vadd.f32 %v77, %v279
  %v313 = vadd.f32 %v78, %v232
  %v314 = vadd.f32 %v79, %v281
  %315 = vst [vmem:[#allocation2] sm:$0xff] %v283
  %316 = vst [vmem:[#allocation2 + $0x8] sm:$0xff] %v284
  %317 = vst [vmem:[#allocation2 + $0x10] sm:$0xff] %v285
  %318 = vst [vmem:[#allocation2 + $0x18] sm:$0xff] %v286
  %319 = vst [vmem:[#allocation2 + $0x20] sm:$0xff] %v287
  %320 = vst [vmem:[#allocation2 + $0x28] sm:$0xff] %v288
  %321 = vst [vmem:[#allocation2 + $0x30] sm:$0xff] %v289
  %322 = vst [vmem:[#allocation2 + $0x38] sm:$0xff] %v290
  %323 = vst [vmem:[#allocation2 + $0x40] sm:$0xff] %v291
  %324 = vst [vmem:[#allocation2 + $0x48] sm:$0xff] %v292
  %325 = vst [vmem:[#allocation2 + $0x50] sm:$0xff] %v293
  %326 = vst [vmem:[#allocation2 + $0x58] sm:$0xff] %v294
  %327 = vst [vmem:[#allocation2 + $0x60] sm:$0xff] %v295
  %328 = vst [vmem:[#allocation2 + $0x68] sm:$0xff] %v296
  %329 = vst [vmem:[#allocation2 + $0x70] sm:$0xff] %v297
  %330 = vst [vmem:[#allocation2 + $0x78] sm:$0xff] %v298
  %331 = vst [vmem:[#allocation2 + $0x80] sm:$0xff] %v299
  %332 = vst [vmem:[#allocation2 + $0x88] sm:$0xff] %v300
  %333 = vst [vmem:[#allocation2 + $0x90] sm:$0xff] %v301
  %334 = vst [vmem:[#allocation2 + $0x98] sm:$0xff] %v302
  %335 = vst [vmem:[#allocation2 + $0xa0] sm:$0xff] %v303
  %336 = vst [vmem:[#allocation2 + $0xa8] sm:$0xff] %v304
  %337 = vst [vmem:[#allocation2 + $0xb0] sm:$0xff] %v305
  %338 = vst [vmem:[#allocation2 + $0xb8] sm:$0xff] %v306
  %339 = vst [vmem:[#allocation2 + $0xc0] sm:$0xff] %v307
  %340 = vst [vmem:[#allocation2 + $0xc8] sm:$0xff] %v308
  %341 = vst [vmem:[#allocation2 + $0xd0] sm:$0xff] %v309
  %342 = vst [vmem:[#allocation2 + $0xd8] sm:$0xff] %v310
  %343 = vst [vmem:[#allocation2 + $0xe0] sm:$0xff] %v311
  %344 = vst [vmem:[#allocation2 + $0xe8] sm:$0xff] %v312
  %345 = vst [vmem:[#allocation2 + $0xf0] sm:$0xff] %v313
  %346 = vst [vmem:[#allocation2 + $0xf8] sm:$0xff] %v314
  %v347 = vld [vmem:[#allocation2] sm:$0xff]
  %v348 = vld [vmem:[#allocation2 + $0x8] sm:$0xff]
  %v349 = vld [vmem:[#allocation2 + $0x10] sm:$0xff]
  %v350 = vld [vmem:[#allocation2 + $0x18] sm:$0xff]
  %v351 = vld [vmem:[#allocation2 + $0x20] sm:$0xff]
  %v352 = vld [vmem:[#allocation2 + $0x28] sm:$0xff]
  %v353 = vld [vmem:[#allocation2 + $0x30] sm:$0xff]
  %v354 = vld [vmem:[#allocation2 + $0x38] sm:$0xff]
  %v355 = vld [vmem:[#allocation2 + $0x40] sm:$0xff]
  %v356 = vld [vmem:[#allocation2 + $0x48] sm:$0xff]
  %v357 = vld [vmem:[#allocation2 + $0x50] sm:$0xff]
  %v358 = vld [vmem:[#allocation2 + $0x58] sm:$0xff]
  %v359 = vld [vmem:[#allocation2 + $0x60] sm:$0xff]
  %v360 = vld [vmem:[#allocation2 + $0x68] sm:$0xff]
  %v361 = vld [vmem:[#allocation2 + $0x70] sm:$0xff]
  %v362 = vld [vmem:[#allocation2 + $0x78] sm:$0xff]
  %v363 = vld [vmem:[#allocation2 + $0x80] sm:$0xff]
  %v364 = vld [vmem:[#allocation2 + $0x88] sm:$0xff]
  %v365 = vld [vmem:[#allocation2 + $0x90] sm:$0xff]
  %v366 = vld [vmem:[#allocation2 + $0x98] sm:$0xff]
  %v367 = vld [vmem:[#allocation2 + $0xa0] sm:$0xff]
  %v368 = vld [vmem:[#allocation2 + $0xa8] sm:$0xff]
  %v369 = vld [vmem:[#allocation2 + $0xb0] sm:$0xff]
  %v370 = vld [vmem:[#allocation2 + $0xb8] sm:$0xff]
  %v371 = vld [vmem:[#allocation2 + $0xc0] sm:$0xff]
  %v372 = vld [vmem:[#allocation2 + $0xc8] sm:$0xff]
  %v373 = vld [vmem:[#allocation2 + $0xd0] sm:$0xff]
  %v374 = vld [vmem:[#allocation2 + $0xd8] sm:$0xff]
  %v375 = vld [vmem:[#allocation2 + $0xe0] sm:$0xff]
  %v376 = vld [vmem:[#allocation2 + $0xe8] sm:$0xff]
  %v377 = vld [vmem:[#allocation2 + $0xf0] sm:$0xff]
  %v378 = vld [vmem:[#allocation2 + $0xf8] sm:$0xff]
  %379 = vst [vmem:[%s2] sm:$0xff] %v347
  %380 = vst [vmem:[%s2 + $0x8] sm:$0xff] %v348
  %381 = vst [vmem:[%s2 + $0x10] sm:$0xff] %v349
  %382 = vst [vmem:[%s2 + $0x18] sm:$0xff] %v350
  %383 = vst [vmem:[%s2 + $0x20] sm:$0xff] %v351
  %384 = vst [vmem:[%s2 + $0x28] sm:$0xff] %v352
  %385 = vst [vmem:[%s2 + $0x30] sm:$0xff] %v353
  %386 = vst [vmem:[%s2 + $0x38] sm:$0xff] %v354
  %387 = vst [vmem:[%s2 + $0x40] sm:$0xff] %v355
  %388 = vst [vmem:[%s2 + $0x48] sm:$0xff] %v356
  %389 = vst [vmem:[%s2 + $0x50] sm:$0xff] %v357
  %390 = vst [vmem:[%s2 + $0x58] sm:$0xff] %v358
  %391 = vst [vmem:[%s2 + $0x60] sm:$0xff] %v359
  %392 = vst [vmem:[%s2 + $0x68] sm:$0xff] %v360
  %393 = vst [vmem:[%s2 + $0x70] sm:$0xff] %v361
  %394 = vst [vmem:[%s2 + $0x78] sm:$0xff] %v362
  %395 = vst [vmem:[%s2 + $0x80] sm:$0xff] %v363
  %396 = vst [vmem:[%s2 + $0x88] sm:$0xff] %v364
  %397 = vst [vmem:[%s2 + $0x90] sm:$0xff] %v365
  %398 = vst [vmem:[%s2 + $0x98] sm:$0xff] %v366
  %399 = vst [vmem:[%s2 + $0xa0] sm:$0xff] %v367
  %400 = vst [vmem:[%s2 + $0xa8] sm:$0xff] %v368
  %401 = vst [vmem:[%s2 + $0xb0] sm:$0xff] %v369
  %402 = vst [vmem:[%s2 + $0xb8] sm:$0xff] %v370
  %403 = vst [vmem:[%s2 + $0xc0] sm:$0xff] %v371
  %404 = vst [vmem:[%s2 + $0xc8] sm:$0xff] %v372
  %405 = vst [vmem:[%s2 + $0xd0] sm:$0xff] %v373
  %406 = vst [vmem:[%s2 + $0xd8] sm:$0xff] %v374
  %407 = vst [vmem:[%s2 + $0xe0] sm:$0xff] %v375
  %408 = vst [vmem:[%s2 + $0xe8] sm:$0xff] %v376
  %409 = vst [vmem:[%s2 + $0xf0] sm:$0xff] %v377
  %410 = vst [vmem:[%s2 + $0xf8] sm:$0xff] %v378
  // Predicated region
  $region14: #{_lambda_.20} parent=0 // pred_check
    _
  $region15: #{_lambda_.20} parent=0 // pred_check_branch
    %412 = sbr.rel (0) target = $region17
  $region16: #{_lambda_.20} parent=0 // pred_region
    _
  $region17: #{_lambda_.20} parent=0 // pred_fallthru
    _
  // Predicated region
  $region18: #{_lambda_.20} parent=0 // pred_check
    _
  $region19: #{_lambda_.20} parent=0 // pred_check_branch
    %414 = sbr.rel (0) target = $region21
  $region20: #{_lambda_.20} parent=0 // pred_region
    _
  $region21: #{_lambda_.20} parent=0 // pred_fallthru
    _

// kernel: _lambda_.21
$region0: #{_lambda_.21}
  #allocation0 [shape = 'u32[]', space=smem, size = 0x4, offset = 0x4, fixed_abs, tag = 'smem constant byte address 0x4 - core index']
  #allocation1 [shape = 'u32[72,128]{1,0:T(1,128)}', space=vmem, size = 0x9000, scoped, tag = 'internal scratch']
  %s0 = inlined_call_operand.vmem [shape: f32[64,128], index: 0, kind: input, shape index: {}]
  %s1 = inlined_call_operand.vmem [shape: f32[1,1,128], index: 1, kind: output, shape index: {0}]
  %s2 = inlined_call_operand.vmem [shape: f32[1,1,128], index: 2, kind: output, shape index: {1}]
  %3 = xla_tuple %s1, %s2
  %s4 = sld [smem:[#allocation0]]
  $region22: #{_lambda_.21} parent=0
    _
  %s6 = ssub.s32 1, %s4
  %s7 = scalar_select 0, %s6, %s4
  // Predicated region
  $region2: #{_lambda_.21} parent=0 // pred_check
    _
  $region3: #{_lambda_.21} parent=0 // pred_check_branch
    %9 = sbr.rel (0) target = $region5
  $region4: #{_lambda_.21} parent=0 // pred_region
    _
  $region5: #{_lambda_.21} parent=0 // pred_fallthru
    _
  %v10 = vld [vmem:[%s0] sm:$0xff]
  %v11 = vld [vmem:[%s0 + $0x8] sm:$0xff]
  %v12 = vld [vmem:[%s0 + $0x10] sm:$0xff]
  %v13 = vld [vmem:[%s0 + $0x18] sm:$0xff]
  %v14 = vld [vmem:[%s0 + $0x20] sm:$0xff]
  %v15 = vld [vmem:[%s0 + $0x28] sm:$0xff]
  %v16 = vld [vmem:[%s0 + $0x30] sm:$0xff]
  %v17 = vld [vmem:[%s0 + $0x38] sm:$0xff]
  %v18 = vadd.f32 %v10, %v11
  %v19 = vadd.f32 %v18, %v12
  %v20 = vadd.f32 %v19, %v13
  %v21 = vadd.f32 %v20, %v14
  %v22 = vadd.f32 %v21, %v15
  %v23 = vadd.f32 %v22, %v16
  %v24 = vadd.f32 %v23, %v17
  %v25 = vrot.slane %v24, 4
  %v26 = vadd.f32 %v24, %v25
  %v27 = vrot.slane %v26, 2
  %v28 = vadd.f32 %v26, %v27
  %v29 = vrot.slane %v28, 1
  %v30 = vadd.f32 %v28, %v29
  %31 = vst [vmem:[%s1] sm:$0x1] %v30
  %v32 = vmul.f32 %v10, %v10
  %v33 = vmul.f32 %v11, %v11
  %v34 = vmul.f32 %v12, %v12
  %v35 = vmul.f32 %v13, %v13
  %v36 = vmul.f32 %v14, %v14
  %v37 = vmul.f32 %v15, %v15
  %v38 = vmul.f32 %v16, %v16
  %v39 = vmul.f32 %v17, %v17
  %v40 = vadd.f32 %v32, %v33
  %v41 = vadd.f32 %v40, %v34
  %v42 = vadd.f32 %v41, %v35
  %v43 = vadd.f32 %v42, %v36
  %v44 = vadd.f32 %v43, %v37
  %v45 = vadd.f32 %v44, %v38
  %v46 = vadd.f32 %v45, %v39
  %v47 = vrot.slane %v46, 4
  %v48 = vadd.f32 %v46, %v47
  %v49 = vrot.slane %v48, 2
  %v50 = vadd.f32 %v48, %v49
  %v51 = vrot.slane %v50, 1
  %v52 = vadd.f32 %v50, %v51
  %53 = vst [vmem:[%s2] sm:$0x1] %v52
  // Predicated region
  $region6: #{_lambda_.21} parent=0 // pred_check
    _
  $region7: #{_lambda_.21} parent=0 // pred_check_branch
    %55 = sbr.rel (0) target = $region9
  $region8: #{_lambda_.21} parent=0 // pred_region
    _
  $region9: #{_lambda_.21} parent=0 // pred_fallthru
    _
  // Predicated region
  $region10: #{_lambda_.21} parent=0 // pred_check
    _
  $region11: #{_lambda_.21} parent=0 // pred_check_branch
    %57 = sbr.rel (0) target = $region13
  $region12: #{_lambda_.21} parent=0 // pred_region
    _
  $region13: #{_lambda_.21} parent=0 // pred_fallthru
    _
  // Predicated region
  $region14: #{_lambda_.21} parent=0 // pred_check
    _
  $region15: #{_lambda_.21} parent=0 // pred_check_branch
    %59 = sbr.rel (0) target = $region17
  $region16: #{_lambda_.21} parent=0 // pred_region
    _
  $region17: #{_lambda_.21} parent=0 // pred_fallthru
    _
  // Predicated region
  $region18: #{_lambda_.21} parent=0 // pred_check
    _
  $region19: #{_lambda_.21} parent=0 // pred_check_branch
    %61 = sbr.rel (0) target = $region21
  $region20: #{_lambda_.21} parent=0 // pred_region
    _
  $region21: #{_lambda_.21} parent=0 // pred_fallthru
    _

// kernel: tile.68
$region0: #{tile.68}
  #allocation0 [shape = 's32[1]{0}', space=sflag, size = 0x4, scoped, tag = 'scoped memory for tile.68']
  %s0 = inlined_call_operand.vmem [shape: f32[16], index: 0, kind: input, shape index: {}]
  %s1 = inlined_call_operand.vmem [shape: f32[8,16], index: 1, kind: output, shape index: {}]
  // Predicated region
  $region2: #{tile.68} parent=0 // pred_check
    _
  $region3: #{tile.68} parent=0 // pred_check_branch
    %3 = sbr.rel (0) target = $region5
  $region4: #{tile.68} parent=0 // pred_region
    _
  $region5: #{tile.68} parent=0 // pred_fallthru
    _
  %v4 = vld [vmem:[%s0] ss:$0 sm:$0xff]
  %5 = vst [vmem:[%s1] sm:$0xff] %v4

// kernel: tile.69
$region0: #{tile.69}
  %s0 = inlined_call_operand.vmem [shape: f32[8,16], index: 0, kind: input, shape index: {}]
  %s1 = inlined_call_operand.vmem [shape: f32[1,128], index: 1, kind: output, shape index: {}]
  $region1: #{tile.69} parent=0
    #allocation0 [shape = 'u8[4096]{0}', space=vmem, size = 0x1000, scoped, tag = 'scoped mem for output reshape']
    %v2 = vld [vmem:[%s0] sm:$0x1]
    %vm3 = vcmask 130048
    %4 = vst.msk [vmem:[#allocation0] sm:$0x1] %vm3, %v2
    %s5 = scalar_lea.vmem %s0, 7
    %v6 = vld [vmem:[%s5] sm:$0x1]
    %7 = vrot.lane.b32.xlu0 %v6, 112
    %v8 = vpop.permute.xlu0 %7
    %vm9 = vcmask 1048448
    %10 = vst.msk [vmem:[#allocation0] sm:$0x1] %vm9, %v8
    %s11 = scalar_lea.vmem %s0, 6
    %v12 = vld [vmem:[%s11] sm:$0x1]
    %13 = vrot.lane.b32.xlu0 %v12, 96
    %v14 = vpop.permute.xlu0 %13
    %vm15 = vcmask 917248
    %16 = vst.msk [vmem:[#allocation0] sm:$0x1] %vm15, %v14
    %s17 = scalar_lea.vmem %s0, 5
    %v18 = vld [vmem:[%s17] sm:$0x1]
    %19 = vrot.lane.b32.xlu0 %v18, 80
    %v20 = vpop.permute.xlu0 %19
    %vm21 = vcmask 786048
    %22 = vst.msk [vmem:[#allocation0] sm:$0x1] %vm21, %v20
    %s23 = scalar_lea.vmem %s0, 4
    %v24 = vld [vmem:[%s23] sm:$0x1]
    %25 = vrot.lane.b32.xlu0 %v24, 64
    %v26 = vpop.permute.xlu0 %25
    %vm27 = vcmask 654848
    %28 = vst.msk [vmem:[#allocation0] sm:$0x1] %vm27, %v26
    %s29 = scalar_lea.vmem %s0, 3
    %v30 = vld [vmem:[%s29] sm:$0x1]
    %31 = vrot.lane.b32.xlu0 %v30, 48
    %v32 = vpop.permute.xlu0 %31
    %vm33 = vcmask 523648
    %34 = vst.msk [vmem:[#allocation0] sm:$0x1] %vm33, %v32
    %s35 = scalar_lea.vmem %s0, 2
    %v36 = vld [vmem:[%s35] sm:$0x1]
    %37 = vrot.lane.b32.xlu0 %v36, 32
    %v38 = vpop.permute.xlu0 %37
    %vm39 = vcmask 392448
    %40 = vst.msk [vmem:[#allocation0] sm:$0x1] %vm39, %v38
    %s41 = scalar_lea.vmem %s0, 1
    %v42 = vld [vmem:[%s41] sm:$0x1]
    %43 = vrot.lane.b32.xlu0 %v42, 16
    %v44 = vpop.permute.xlu0 %43
    %vm45 = vcmask 261248
    %46 = vst.msk [vmem:[#allocation0] sm:$0x1] %vm45, %v44
    %s48 = ssub.s32 2, 1
    %v49 = vld [vmem:[#allocation0] sm:%s48]
    %s51 = ssub.s32 2, 1
    %52 = vst [vmem:[%s1] sm:%s51] %v49

// kernel: _lambda_.22
$region0: #{_lambda_.22}
  #allocation0 [shape = 'u32[]', space=smem, size = 0x4, offset = 0x4, fixed_abs, tag = 'smem constant byte address 0x4 - core index']
  #allocation1 [shape = 'u32[72,128]{1,0:T(1,128)}', space=vmem, size = 0x9000, scoped, tag = 'internal scratch']
  %s0 = inlined_call_operand.vmem [shape: f32[64,128], index: 0, kind: input, shape index: {}]
  %s1 = inlined_call_operand.vmem [shape: f32[1,128], index: 1, kind: input, shape index: {}]
  %s2 = inlined_call_operand.vmem [shape: f32[1,128], index: 2, kind: input, shape index: {}]
  %s3 = inlined_call_operand.vmem [shape: bf16[64,128], index: 3, kind: output, shape index: {}]
  %s4 = sld [smem:[#allocation0]]
  $region22: #{_lambda_.22} parent=0
    _
  %s6 = ssub.s32 1, %s4
  %s7 = scalar_select 0, %s6, %s4
  // Predicated region
  $region2: #{_lambda_.22} parent=0 // pred_check
    _
  $region3: #{_lambda_.22} parent=0 // pred_check_branch
    %9 = sbr.rel (0) target = $region5
  $region4: #{_lambda_.22} parent=0 // pred_region
    _
  $region5: #{_lambda_.22} parent=0 // pred_fallthru
    _
  // Predicated region
  $region6: #{_lambda_.22} parent=0 // pred_check
    _
  $region7: #{_lambda_.22} parent=0 // pred_check_branch
    %11 = sbr.rel (0) target = $region9
  $region8: #{_lambda_.22} parent=0 // pred_region
    _
  $region9: #{_lambda_.22} parent=0 // pred_fallthru
    _
  // Predicated region
  $region10: #{_lambda_.22} parent=0 // pred_check
    _
  $region11: #{_lambda_.22} parent=0 // pred_check_branch
    %13 = sbr.rel (0) target = $region13
  $region12: #{_lambda_.22} parent=0 // pred_region
    _
  $region13: #{_lambda_.22} parent=0 // pred_fallthru
    _
  %v14 = vld [vmem:[%s0] sm:$0xff]
  %v15 = vld [vmem:[%s0 + $0x8] sm:$0xff]
  %v16 = vld [vmem:[%s0 + $0x10] sm:$0xff]
  %v17 = vld [vmem:[%s0 + $0x18] sm:$0xff]
  %v18 = vld [vmem:[%s0 + $0x20] sm:$0xff]
  %v19 = vld [vmem:[%s0 + $0x28] sm:$0xff]
  %v20 = vld [vmem:[%s0 + $0x30] sm:$0xff]
  %v21 = vld [vmem:[%s0 + $0x38] sm:$0xff]
  %v22 = vld [vmem:[%s1] sm:$0x1]
  %v24 = vperm.slane %v22, 0
  %v26 = vmul.f32 %v14, %v24
  %v27 = vmul.f32 %v15, %v24
  %v28 = vmul.f32 %v16, %v24
  %v29 = vmul.f32 %v17, %v24
  %v30 = vmul.f32 %v18, %v24
  %v31 = vmul.f32 %v19, %v24
  %v32 = vmul.f32 %v20, %v24
  %v33 = vmul.f32 %v21, %v24
  %v34 = vld [vmem:[%s2] sm:$0x1]
  %v36 = vperm.slane %v34, 0
  %v38 = vadd.f32 %v26, %v36
  %v39 = vadd.f32 %v27, %v36
  %v40 = vadd.f32 %v28, %v36
  %v41 = vadd.f32 %v29, %v36
  %v42 = vadd.f32 %v30, %v36
  %v43 = vadd.f32 %v31, %v36
  %v44 = vadd.f32 %v32, %v36
  %v45 = vadd.f32 %v33, %v36
  %v46 = vmax.f32 %v38, 0.0
  %v47 = vmax.f32 %v39, 0.0
  %v48 = vmax.f32 %v40, 0.0
  %v49 = vmax.f32 %v41, 0.0
  %v50 = vmax.f32 %v42, 0.0
  %v51 = vmax.f32 %v43, 0.0
  %v52 = vmax.f32 %v44, 0.0
  %v53 = vmax.f32 %v45, 0.0
  %v54 = vpack.c.bf16 %v46, %v46
  %v55 = vpack.c.bf16 %v47, %v47
  %v56 = vpack.c.bf16 %v48, %v48
  %v57 = vpack.c.bf16 %v49, %v49
  %v58 = vpack.c.bf16 %v50, %v50
  %v59 = vpack.c.bf16 %v51, %v51
  %v60 = vpack.c.bf16 %v52, %v52
  %v61 = vpack.c.bf16 %v53, %v53
  %62 = vst [vmem:[%s3] sm:$0xf] %v54
  %63 = vst [vmem:[%s3 + $0x4] sm:$0xf] %v55
  %64 = vst [vmem:[%s3 + $0x8] sm:$0xf] %v56
  %65 = vst [vmem:[%s3 + $0xc] sm:$0xf] %v57
  %66 = vst [vmem:[%s3 + $0x10] sm:$0xf] %v58
  %67 = vst [vmem:[%s3 + $0x14] sm:$0xf] %v59
  %68 = vst [vmem:[%s3 + $0x18] sm:$0xf] %v60
  %69 = vst [vmem:[%s3 + $0x1c] sm:$0xf] %v61
  // Predicated region
  $region14: #{_lambda_.22} parent=0 // pred_check
    _
  $region15: #{_lambda_.22} parent=0 // pred_check_branch
    %71 = sbr.rel (0) target = $region17
  $region16: #{_lambda_.22} parent=0 // pred_region
    _
  $region17: #{_lambda_.22} parent=0 // pred_fallthru
    _
  // Predicated region
  $region18: #{_lambda_.22} parent=0 // pred_check
    _
  $region19: #{_lambda_.22} parent=0 // pred_check_branch
    %73 = sbr.rel (0) target = $region21
  $region20: #{_lambda_.22} parent=0 // pred_region
    _
  $region21: #{_lambda_.22} parent=0 // pred_fallthru
    _

// kernel: _lambda_.23
$region0: #{_lambda_.23}
  #allocation0 [shape = 'u32[]', space=smem, size = 0x4, offset = 0x4, fixed_abs, tag = 'smem constant byte address 0x4 - core index']
  #allocation1 [shape = 'u32[72,128]{1,0:T(1,128)}', space=vmem, size = 0x9000, scoped, tag = 'internal scratch']
  #allocation2 [shape = 'f32[512,128]{1,0:T(8,128)}', space=vmem, size = 0x40000, scoped, tag = 'scratch operand']
  %s0 = inlined_call_operand.vmem [shape: bf16[512,16], index: 0, kind: input, shape index: {}]
  %s1 = inlined_call_operand.vmem [shape: bf16[16,128], index: 1, kind: input, shape index: {}]
  %s2 = inlined_call_operand.vmem [shape: f32[512,128], index: 2, kind: output, shape index: {}]
  %s3 = sld [smem:[#allocation0]]
  $region22: #{_lambda_.23} parent=0
    _
  %s5 = ssub.s32 1, %s3
  %s6 = scalar_select 0, %s5, %s3
  // Predicated region
  $region2: #{_lambda_.23} parent=0 // pred_check
    _
  $region3: #{_lambda_.23} parent=0 // pred_check_branch
    %8 = sbr.rel (0) target = $region5
  $region4: #{_lambda_.23} parent=0 // pred_region
    _
  $region5: #{_lambda_.23} parent=0 // pred_fallthru
    _
  // Predicated region
  $region6: #{_lambda_.23} parent=0 // pred_check
    _
  $region7: #{_lambda_.23} parent=0 // pred_check_branch
    %10 = sbr.rel (0) target = $region9
  $region8: #{_lambda_.23} parent=0 // pred_region
    _
  $region9: #{_lambda_.23} parent=0 // pred_fallthru
    _
  %p12 = scmp.eq.s32.totalorder 0, 0
  // Predicated region
  $region10: #{_lambda_.23} parent=0 // pred_check
    %p13 = pneg %p12
  $region11: #{_lambda_.23} parent=0 // pred_check_branch
    %15 = sbr.rel (%p13) target = $region13
  $region12: #{_lambda_.23} parent=0 // pred_region
    %16 = vst [vmem:[#allocation2] sm:$0xff] 0.0
    %17 = vst [vmem:[#allocation2 + $0x8] sm:$0xff] 0.0
    %18 = vst [vmem:[#allocation2 + $0x10] sm:$0xff] 0.0
    %19 = vst [vmem:[#allocation2 + $0x18] sm:$0xff] 0.0
    %20 = vst [vmem:[#allocation2 + $0x20] sm:$0xff] 0.0
    %21 = vst [vmem:[#allocation2 + $0x28] sm:$0xff] 0.0
    %22 = vst [vmem:[#allocation2 + $0x30] sm:$0xff] 0.0
    %23 = vst [vmem:[#allocation2 + $0x38] sm:$0xff] 0.0
    %24 = vst [vmem:[#allocation2 + $0x40] sm:$0xff] 0.0
    %25 = vst [vmem:[#allocation2 + $0x48] sm:$0xff] 0.0
    %26 = vst [vmem:[#allocation2 + $0x50] sm:$0xff] 0.0
    %27 = vst [vmem:[#allocation2 + $0x58] sm:$0xff] 0.0
    %28 = vst [vmem:[#allocation2 + $0x60] sm:$0xff] 0.0
    %29 = vst [vmem:[#allocation2 + $0x68] sm:$0xff] 0.0
    %30 = vst [vmem:[#allocation2 + $0x70] sm:$0xff] 0.0
    %31 = vst [vmem:[#allocation2 + $0x78] sm:$0xff] 0.0
    %32 = vst [vmem:[#allocation2 + $0x80] sm:$0xff] 0.0
    %33 = vst [vmem:[#allocation2 + $0x88] sm:$0xff] 0.0
    %34 = vst [vmem:[#allocation2 + $0x90] sm:$0xff] 0.0
    %35 = vst [vmem:[#allocation2 + $0x98] sm:$0xff] 0.0
    %36 = vst [vmem:[#allocation2 + $0xa0] sm:$0xff] 0.0
    %37 = vst [vmem:[#allocation2 + $0xa8] sm:$0xff] 0.0
    %38 = vst [vmem:[#allocation2 + $0xb0] sm:$0xff] 0.0
    %39 = vst [vmem:[#allocation2 + $0xb8] sm:$0xff] 0.0
    %40 = vst [vmem:[#allocation2 + $0xc0] sm:$0xff] 0.0
    %41 = vst [vmem:[#allocation2 + $0xc8] sm:$0xff] 0.0
    %42 = vst [vmem:[#allocation2 + $0xd0] sm:$0xff] 0.0
    %43 = vst [vmem:[#allocation2 + $0xd8] sm:$0xff] 0.0
    %44 = vst [vmem:[#allocation2 + $0xe0] sm:$0xff] 0.0
    %45 = vst [vmem:[#allocation2 + $0xe8] sm:$0xff] 0.0
    %46 = vst [vmem:[#allocation2 + $0xf0] sm:$0xff] 0.0
    %47 = vst [vmem:[#allocation2 + $0xf8] sm:$0xff] 0.0
    %48 = vst [vmem:[#allocation2 + $0x100] sm:$0xff] 0.0
    %49 = vst [vmem:[#allocation2 + $0x108] sm:$0xff] 0.0
    %50 = vst [vmem:[#allocation2 + $0x110] sm:$0xff] 0.0
    %51 = vst [vmem:[#allocation2 + $0x118] sm:$0xff] 0.0
    %52 = vst [vmem:[#allocation2 + $0x120] sm:$0xff] 0.0
    %53 = vst [vmem:[#allocation2 + $0x128] sm:$0xff] 0.0
    %54 = vst [vmem:[#allocation2 + $0x130] sm:$0xff] 0.0
    %55 = vst [vmem:[#allocation2 + $0x138] sm:$0xff] 0.0
    %56 = vst [vmem:[#allocation2 + $0x140] sm:$0xff] 0.0
    %57 = vst [vmem:[#allocation2 + $0x148] sm:$0xff] 0.0
    %58 = vst [vmem:[#allocation2 + $0x150] sm:$0xff] 0.0
    %59 = vst [vmem:[#allocation2 + $0x158] sm:$0xff] 0.0
    %60 = vst [vmem:[#allocation2 + $0x160] sm:$0xff] 0.0
    %61 = vst [vmem:[#allocation2 + $0x168] sm:$0xff] 0.0
    %62 = vst [vmem:[#allocation2 + $0x170] sm:$0xff] 0.0
    %63 = vst [vmem:[#allocation2 + $0x178] sm:$0xff] 0.0
    %64 = vst [vmem:[#allocation2 + $0x180] sm:$0xff] 0.0
    %65 = vst [vmem:[#allocation2 + $0x188] sm:$0xff] 0.0
    %66 = vst [vmem:[#allocation2 + $0x190] sm:$0xff] 0.0
    %67 = vst [vmem:[#allocation2 + $0x198] sm:$0xff] 0.0
    %68 = vst [vmem:[#allocation2 + $0x1a0] sm:$0xff] 0.0
    %69 = vst [vmem:[#allocation2 + $0x1a8] sm:$0xff] 0.0
    %70 = vst [vmem:[#allocation2 + $0x1b0] sm:$0xff] 0.0
    %71 = vst [vmem:[#allocation2 + $0x1b8] sm:$0xff] 0.0
    %72 = vst [vmem:[#allocation2 + $0x1c0] sm:$0xff] 0.0
    %73 = vst [vmem:[#allocation2 + $0x1c8] sm:$0xff] 0.0
    %74 = vst [vmem:[#allocation2 + $0x1d0] sm:$0xff] 0.0
    %75 = vst [vmem:[#allocation2 + $0x1d8] sm:$0xff] 0.0
    %76 = vst [vmem:[#allocation2 + $0x1e0] sm:$0xff] 0.0
    %77 = vst [vmem:[#allocation2 + $0x1e8] sm:$0xff] 0.0
    %78 = vst [vmem:[#allocation2 + $0x1f0] sm:$0xff] 0.0
    %79 = vst [vmem:[#allocation2 + $0x1f8] sm:$0xff] 0.0
  $region13: #{_lambda_.23} parent=0 // pred_fallthru
    _
  %v80 = vld [vmem:[#allocation2] sm:$0xff]
  %v81 = vld [vmem:[#allocation2 + $0x8] sm:$0xff]
  %v82 = vld [vmem:[#allocation2 + $0x10] sm:$0xff]
  %v83 = vld [vmem:[#allocation2 + $0x18] sm:$0xff]
  %v84 = vld [vmem:[#allocation2 + $0x20] sm:$0xff]
  %v85 = vld [vmem:[#allocation2 + $0x28] sm:$0xff]
  %v86 = vld [vmem:[#allocation2 + $0x30] sm:$0xff]
  %v87 = vld [vmem:[#allocation2 + $0x38] sm:$0xff]
  %v88 = vld [vmem:[#allocation2 + $0x40] sm:$0xff]
  %v89 = vld [vmem:[#allocation2 + $0x48] sm:$0xff]
  %v90 = vld [vmem:[#allocation2 + $0x50] sm:$0xff]
  %v91 = vld [vmem:[#allocation2 + $0x58] sm:$0xff]
  %v92 = vld [vmem:[#allocation2 + $0x60] sm:$0xff]
  %v93 = vld [vmem:[#allocation2 + $0x68] sm:$0xff]
  %v94 = vld [vmem:[#allocation2 + $0x70] sm:$0xff]
  %v95 = vld [vmem:[#allocation2 + $0x78] sm:$0xff]
  %v96 = vld [vmem:[#allocation2 + $0x80] sm:$0xff]
  %v97 = vld [vmem:[#allocation2 + $0x88] sm:$0xff]
  %v98 = vld [vmem:[#allocation2 + $0x90] sm:$0xff]
  %v99 = vld [vmem:[#allocation2 + $0x98] sm:$0xff]
  %v100 = vld [vmem:[#allocation2 + $0xa0] sm:$0xff]
  %v101 = vld [vmem:[#allocation2 + $0xa8] sm:$0xff]
  %v102 = vld [vmem:[#allocation2 + $0xb0] sm:$0xff]
  %v103 = vld [vmem:[#allocation2 + $0xb8] sm:$0xff]
  %v104 = vld [vmem:[#allocation2 + $0xc0] sm:$0xff]
  %v105 = vld [vmem:[#allocation2 + $0xc8] sm:$0xff]
  %v106 = vld [vmem:[#allocation2 + $0xd0] sm:$0xff]
  %v107 = vld [vmem:[#allocation2 + $0xd8] sm:$0xff]
  %v108 = vld [vmem:[#allocation2 + $0xe0] sm:$0xff]
  %v109 = vld [vmem:[#allocation2 + $0xe8] sm:$0xff]
  %v110 = vld [vmem:[#allocation2 + $0xf0] sm:$0xff]
  %v111 = vld [vmem:[#allocation2 + $0xf8] sm:$0xff]
  %v112 = vld [vmem:[#allocation2 + $0x100] sm:$0xff]
  %v113 = vld [vmem:[#allocation2 + $0x108] sm:$0xff]
  %v114 = vld [vmem:[#allocation2 + $0x110] sm:$0xff]
  %v115 = vld [vmem:[#allocation2 + $0x118] sm:$0xff]
  %v116 = vld [vmem:[#allocation2 + $0x120] sm:$0xff]
  %v117 = vld [vmem:[#allocation2 + $0x128] sm:$0xff]
  %v118 = vld [vmem:[#allocation2 + $0x130] sm:$0xff]
  %v119 = vld [vmem:[#allocation2 + $0x138] sm:$0xff]
  %v120 = vld [vmem:[#allocation2 + $0x140] sm:$0xff]
  %v121 = vld [vmem:[#allocation2 + $0x148] sm:$0xff]
  %v122 = vld [vmem:[#allocation2 + $0x150] sm:$0xff]
  %v123 = vld [vmem:[#allocation2 + $0x158] sm:$0xff]
  %v124 = vld [vmem:[#allocation2 + $0x160] sm:$0xff]
  %v125 = vld [vmem:[#allocation2 + $0x168] sm:$0xff]
  %v126 = vld [vmem:[#allocation2 + $0x170] sm:$0xff]
  %v127 = vld [vmem:[#allocation2 + $0x178] sm:$0xff]
  %v128 = vld [vmem:[#allocation2 + $0x180] sm:$0xff]
  %v129 = vld [vmem:[#allocation2 + $0x188] sm:$0xff]
  %v130 = vld [vmem:[#allocation2 + $0x190] sm:$0xff]
  %v131 = vld [vmem:[#allocation2 + $0x198] sm:$0xff]
  %v132 = vld [vmem:[#allocation2 + $0x1a0] sm:$0xff]
  %v133 = vld [vmem:[#allocation2 + $0x1a8] sm:$0xff]
  %v134 = vld [vmem:[#allocation2 + $0x1b0] sm:$0xff]
  %v135 = vld [vmem:[#allocation2 + $0x1b8] sm:$0xff]
  %v136 = vld [vmem:[#allocation2 + $0x1c0] sm:$0xff]
  %v137 = vld [vmem:[#allocation2 + $0x1c8] sm:$0xff]
  %v138 = vld [vmem:[#allocation2 + $0x1d0] sm:$0xff]
  %v139 = vld [vmem:[#allocation2 + $0x1d8] sm:$0xff]
  %v140 = vld [vmem:[#allocation2 + $0x1e0] sm:$0xff]
  %v141 = vld [vmem:[#allocation2 + $0x1e8] sm:$0xff]
  %v142 = vld [vmem:[#allocation2 + $0x1f0] sm:$0xff]
  %v143 = vld [vmem:[#allocation2 + $0x1f8] sm:$0xff]
  %v144 = vld [vmem:[%s0] sm:$0xf]
  %v145 = vld [vmem:[%s0 + $0x4] sm:$0xf]
  %v146 = vld [vmem:[%s0 + $0x8] sm:$0xf]
  %v147 = vld [vmem:[%s0 + $0xc] sm:$0xf]
  %v148 = vld [vmem:[%s0 + $0x10] sm:$0xf]
  %v149 = vld [vmem:[%s0 + $0x14] sm:$0xf]
  %v150 = vld [vmem:[%s0 + $0x18] sm:$0xf]
  %v151 = vld [vmem:[%s0 + $0x1c] sm:$0xf]
  %v152 = vld [vmem:[%s0 + $0x20] sm:$0xf]
  %v153 = vld [vmem:[%s0 + $0x24] sm:$0xf]
  %v154 = vld [vmem:[%s0 + $0x28] sm:$0xf]
  %v155 = vld [vmem:[%s0 + $0x2c] sm:$0xf]
  %v156 = vld [vmem:[%s0 + $0x30] sm:$0xf]
  %v157 = vld [vmem:[%s0 + $0x34] sm:$0xf]
  %v158 = vld [vmem:[%s0 + $0x38] sm:$0xf]
  %v159 = vld [vmem:[%s0 + $0x3c] sm:$0xf]
  %v160 = vld [vmem:[%s0 + $0x40] sm:$0xf]
  %v161 = vld [vmem:[%s0 + $0x44] sm:$0xf]
  %v162 = vld [vmem:[%s0 + $0x48] sm:$0xf]
  %v163 = vld [vmem:[%s0 + $0x4c] sm:$0xf]
  %v164 = vld [vmem:[%s0 + $0x50] sm:$0xf]
  %v165 = vld [vmem:[%s0 + $0x54] sm:$0xf]
  %v166 = vld [vmem:[%s0 + $0x58] sm:$0xf]
  %v167 = vld [vmem:[%s0 + $0x5c] sm:$0xf]
  %v168 = vld [vmem:[%s0 + $0x60] sm:$0xf]
  %v169 = vld [vmem:[%s0 + $0x64] sm:$0xf]
  %v170 = vld [vmem:[%s0 + $0x68] sm:$0xf]
  %v171 = vld [vmem:[%s0 + $0x6c] sm:$0xf]
  %v172 = vld [vmem:[%s0 + $0x70] sm:$0xf]
  %v173 = vld [vmem:[%s0 + $0x74] sm:$0xf]
  %v174 = vld [vmem:[%s0 + $0x78] sm:$0xf]
  %v175 = vld [vmem:[%s0 + $0x7c] sm:$0xf]
  %v176 = vld [vmem:[%s0 + $0x80] sm:$0xf]
  %v177 = vld [vmem:[%s0 + $0x84] sm:$0xf]
  %v178 = vld [vmem:[%s0 + $0x88] sm:$0xf]
  %v179 = vld [vmem:[%s0 + $0x8c] sm:$0xf]
  %v180 = vld [vmem:[%s0 + $0x90] sm:$0xf]
  %v181 = vld [vmem:[%s0 + $0x94] sm:$0xf]
  %v182 = vld [vmem:[%s0 + $0x98] sm:$0xf]
  %v183 = vld [vmem:[%s0 + $0x9c] sm:$0xf]
  %v184 = vld [vmem:[%s0 + $0xa0] sm:$0xf]
  %v185 = vld [vmem:[%s0 + $0xa4] sm:$0xf]
  %v186 = vld [vmem:[%s0 + $0xa8] sm:$0xf]
  %v187 = vld [vmem:[%s0 + $0xac] sm:$0xf]
  %v188 = vld [vmem:[%s0 + $0xb0] sm:$0xf]
  %v189 = vld [vmem:[%s0 + $0xb4] sm:$0xf]
  %v190 = vld [vmem:[%s0 + $0xb8] sm:$0xf]
  %v191 = vld [vmem:[%s0 + $0xbc] sm:$0xf]
  %v192 = vld [vmem:[%s0 + $0xc0] sm:$0xf]
  %v193 = vld [vmem:[%s0 + $0xc4] sm:$0xf]
  %v194 = vld [vmem:[%s0 + $0xc8] sm:$0xf]
  %v195 = vld [vmem:[%s0 + $0xcc] sm:$0xf]
  %v196 = vld [vmem:[%s0 + $0xd0] sm:$0xf]
  %v197 = vld [vmem:[%s0 + $0xd4] sm:$0xf]
  %v198 = vld [vmem:[%s0 + $0xd8] sm:$0xf]
  %v199 = vld [vmem:[%s0 + $0xdc] sm:$0xf]
  %v200 = vld [vmem:[%s0 + $0xe0] sm:$0xf]
  %v201 = vld [vmem:[%s0 + $0xe4] sm:$0xf]
  %v202 = vld [vmem:[%s0 + $0xe8] sm:$0xf]
  %v203 = vld [vmem:[%s0 + $0xec] sm:$0xf]
  %v204 = vld [vmem:[%s0 + $0xf0] sm:$0xf]
  %v205 = vld [vmem:[%s0 + $0xf4] sm:$0xf]
  %v206 = vld [vmem:[%s0 + $0xf8] sm:$0xf]
  %v207 = vld [vmem:[%s0 + $0xfc] sm:$0xf]
  %v208 = vld [vmem:[%s1] sm:$0xf]
  %v209 = vld [vmem:[%s1 + $0x4] sm:$0xf]
  %v274 = vunpack.c.l.b16 %v144
  %v275 = vunpack.c.l.b16 %v145
  %v276 = vunpack.c.l.b16 %v146
  %v277 = vunpack.c.l.b16 %v147
  %v278 = vunpack.c.l.b16 %v148
  %v279 = vunpack.c.l.b16 %v149
  %v280 = vunpack.c.l.b16 %v150
  %v281 = vunpack.c.l.b16 %v151
  %v282 = vunpack.c.l.b16 %v152
  %v283 = vunpack.c.l.b16 %v153
  %v284 = vunpack.c.l.b16 %v154
  %v285 = vunpack.c.l.b16 %v155
  %v286 = vunpack.c.l.b16 %v156
  %v287 = vunpack.c.l.b16 %v157
  %v288 = vunpack.c.l.b16 %v158
  %v289 = vunpack.c.l.b16 %v159
  %v290 = vunpack.c.l.b16 %v160
  %v291 = vunpack.c.l.b16 %v161
  %v292 = vunpack.c.l.b16 %v162
  %v293 = vunpack.c.l.b16 %v163
  %v294 = vunpack.c.l.b16 %v164
  %v295 = vunpack.c.l.b16 %v165
  %v296 = vunpack.c.l.b16 %v166
  %v297 = vunpack.c.l.b16 %v167
  %v298 = vunpack.c.l.b16 %v168
  %v299 = vunpack.c.l.b16 %v169
  %v300 = vunpack.c.l.b16 %v170
  %v301 = vunpack.c.l.b16 %v171
  %v302 = vunpack.c.l.b16 %v172
  %v303 = vunpack.c.l.b16 %v173
  %v304 = vunpack.c.l.b16 %v174
  %v305 = vunpack.c.l.b16 %v175
  %v306 = vunpack.c.l.b16 %v176
  %v307 = vunpack.c.l.b16 %v177
  %v308 = vunpack.c.l.b16 %v178
  %v309 = vunpack.c.l.b16 %v179
  %v310 = vunpack.c.l.b16 %v180
  %v311 = vunpack.c.l.b16 %v181
  %v312 = vunpack.c.l.b16 %v182
  %v313 = vunpack.c.l.b16 %v183
  %v314 = vunpack.c.l.b16 %v184
  %v315 = vunpack.c.l.b16 %v185
  %v316 = vunpack.c.l.b16 %v186
  %v317 = vunpack.c.l.b16 %v187
  %v318 = vunpack.c.l.b16 %v188
  %v319 = vunpack.c.l.b16 %v189
  %v320 = vunpack.c.l.b16 %v190
  %v321 = vunpack.c.l.b16 %v191
  %v322 = vunpack.c.l.b16 %v192
  %v323 = vunpack.c.l.b16 %v193
  %v324 = vunpack.c.l.b16 %v194
  %v325 = vunpack.c.l.b16 %v195
  %v326 = vunpack.c.l.b16 %v196
  %v327 = vunpack.c.l.b16 %v197
  %v328 = vunpack.c.l.b16 %v198
  %v329 = vunpack.c.l.b16 %v199
  %v330 = vunpack.c.l.b16 %v200
  %v331 = vunpack.c.l.b16 %v201
  %v332 = vunpack.c.l.b16 %v202
  %v333 = vunpack.c.l.b16 %v203
  %v334 = vunpack.c.l.b16 %v204
  %v335 = vunpack.c.l.b16 %v205
  %v336 = vunpack.c.l.b16 %v206
  %v337 = vunpack.c.l.b16 %v207
  %v338 = vpack.c.b16 %v275, %v274
  %v339 = vpack.c.b16 %v277, %v276
  %v340 = vpack.c.b16 %v279, %v278
  %v341 = vpack.c.b16 %v281, %v280
  %v342 = vpack.c.b16 %v283, %v282
  %v343 = vpack.c.b16 %v285, %v284
  %v344 = vpack.c.b16 %v287, %v286
  %v345 = vpack.c.b16 %v289, %v288
  %v346 = vpack.c.b16 %v291, %v290
  %v347 = vpack.c.b16 %v293, %v292
  %v348 = vpack.c.b16 %v295, %v294
  %v349 = vpack.c.b16 %v297, %v296
  %v350 = vpack.c.b16 %v299, %v298
  %v351 = vpack.c.b16 %v301, %v300
  %v352 = vpack.c.b16 %v303, %v302
  %v353 = vpack.c.b16 %v305, %v304
  %v354 = vpack.c.b16 %v307, %v306
  %v355 = vpack.c.b16 %v309, %v308
  %v356 = vpack.c.b16 %v311, %v310
  %v357 = vpack.c.b16 %v313, %v312
  %v358 = vpack.c.b16 %v315, %v314
  %v359 = vpack.c.b16 %v317, %v316
  %v360 = vpack.c.b16 %v319, %v318
  %v361 = vpack.c.b16 %v321, %v320
  %v362 = vpack.c.b16 %v323, %v322
  %v363 = vpack.c.b16 %v325, %v324
  %v364 = vpack.c.b16 %v327, %v326
  %v365 = vpack.c.b16 %v329, %v328
  %v366 = vpack.c.b16 %v331, %v330
  %v367 = vpack.c.b16 %v333, %v332
  %v368 = vpack.c.b16 %v335, %v334
  %v369 = vpack.c.b16 %v337, %v336
  %v372 = vunpack.c.l.b16 %v208
  %v373 = vunpack.c.l.b16 %v209
  %v374 = vpack.c.b16 %v373, %v372
  %vm376 = vcmask 130048
  %v378 = vsel %vm376, %v338, 0
  %v381 = vsel %vm376, %v339, 0
  %v384 = vsel %vm376, %v340, 0
  %v387 = vsel %vm376, %v341, 0
  %v390 = vsel %vm376, %v342, 0
  %v393 = vsel %vm376, %v343, 0
  %v396 = vsel %vm376, %v344, 0
  %v399 = vsel %vm376, %v345, 0
  %v402 = vsel %vm376, %v346, 0
  %v405 = vsel %vm376, %v347, 0
  %v408 = vsel %vm376, %v348, 0
  %v411 = vsel %vm376, %v349, 0
  %v414 = vsel %vm376, %v350, 0
  %v417 = vsel %vm376, %v351, 0
  %v420 = vsel %vm376, %v352, 0
  %v423 = vsel %vm376, %v353, 0
  %v426 = vsel %vm376, %v354, 0
  %v429 = vsel %vm376, %v355, 0
  %v432 = vsel %vm376, %v356, 0
  %v435 = vsel %vm376, %v357, 0
  %v438 = vsel %vm376, %v358, 0
  %v441 = vsel %vm376, %v359, 0
  %v444 = vsel %vm376, %v360, 0
  %v447 = vsel %vm376, %v361, 0
  %v450 = vsel %vm376, %v362, 0
  %v453 = vsel %vm376, %v363, 0
  %v456 = vsel %vm376, %v364, 0
  %v459 = vsel %vm376, %v365, 0
  %v462 = vsel %vm376, %v366, 0
  %v465 = vsel %vm376, %v367, 0
  %v468 = vsel %vm376, %v368, 0
  %v471 = vsel %vm376, %v369, 0
  %473 = vmatpush.bf16.msra.mxu0 0
  %474 = vmatpush.bf16.msra.mxu0 0
  %475 = vmatpush.bf16.msra.mxu0 0
  %476 = vmatpush.bf16.msra.mxu0 0
  %477 = vmatpush.bf16.msra.mxu0 0
  %478 = vmatpush.bf16.msra.mxu0 0
  %479 = vmatpush.bf16.msra.mxu0 0
  %480 = vmatpush.bf16.msra.mxu0 %v374
  %481 = vmatmul.bf16.gmra.mxu0 %v378
  %v482 = vpop.f32.mrf.mxu0
  %v483 = vadd.f32 0.0, %v482
  %v484 = vpop.f32.mrf.mxu0
  %v485 = vadd.f32 0.0, %v484
  %486 = vmatmul.bf16.gmra.mxu0 %v381
  %v487 = vpop.f32.mrf.mxu0
  %v488 = vadd.f32 0.0, %v487
  %v489 = vpop.f32.mrf.mxu0
  %v490 = vadd.f32 0.0, %v489
  %491 = vmatmul.bf16.gmra.mxu0 %v384
  %v492 = vpop.f32.mrf.mxu0
  %v493 = vadd.f32 0.0, %v492
  %v494 = vpop.f32.mrf.mxu0
  %v495 = vadd.f32 0.0, %v494
  %496 = vmatmul.bf16.gmra.mxu0 %v387
  %v497 = vpop.f32.mrf.mxu0
  %v498 = vadd.f32 0.0, %v497
  %v499 = vpop.f32.mrf.mxu0
  %v500 = vadd.f32 0.0, %v499
  %501 = vmatmul.bf16.gmra.mxu0 %v390
  %v502 = vpop.f32.mrf.mxu0
  %v503 = vadd.f32 0.0, %v502
  %v504 = vpop.f32.mrf.mxu0
  %v505 = vadd.f32 0.0, %v504
  %506 = vmatmul.bf16.gmra.mxu0 %v393
  %v507 = vpop.f32.mrf.mxu0
  %v508 = vadd.f32 0.0, %v507
  %v509 = vpop.f32.mrf.mxu0
  %v510 = vadd.f32 0.0, %v509
  %511 = vmatmul.bf16.gmra.mxu0 %v396
  %v512 = vpop.f32.mrf.mxu0
  %v513 = vadd.f32 0.0, %v512
  %v514 = vpop.f32.mrf.mxu0
  %v515 = vadd.f32 0.0, %v514
  %516 = vmatmul.bf16.gmra.mxu0 %v399
  %v517 = vpop.f32.mrf.mxu0
  %v518 = vadd.f32 0.0, %v517
  %v519 = vpop.f32.mrf.mxu0
  %v520 = vadd.f32 0.0, %v519
  %521 = vmatmul.bf16.gmra.mxu0 %v402
  %v522 = vpop.f32.mrf.mxu0
  %v523 = vadd.f32 0.0, %v522
  %v524 = vpop.f32.mrf.mxu0
  %v525 = vadd.f32 0.0, %v524
  %526 = vmatmul.bf16.gmra.mxu0 %v405
  %v527 = vpop.f32.mrf.mxu0
  %v528 = vadd.f32 0.0, %v527
  %v529 = vpop.f32.mrf.mxu0
  %v530 = vadd.f32 0.0, %v529
  %531 = vmatmul.bf16.gmra.mxu0 %v408
  %v532 = vpop.f32.mrf.mxu0
  %v533 = vadd.f32 0.0, %v532
  %v534 = vpop.f32.mrf.mxu0
  %v535 = vadd.f32 0.0, %v534
  %536 = vmatmul.bf16.gmra.mxu0 %v411
  %v537 = vpop.f32.mrf.mxu0
  %v538 = vadd.f32 0.0, %v537
  %v539 = vpop.f32.mrf.mxu0
  %v540 = vadd.f32 0.0, %v539
  %541 = vmatmul.bf16.gmra.mxu0 %v414
  %v542 = vpop.f32.mrf.mxu0
  %v543 = vadd.f32 0.0, %v542
  %v544 = vpop.f32.mrf.mxu0
  %v545 = vadd.f32 0.0, %v544
  %546 = vmatmul.bf16.gmra.mxu0 %v417
  %v547 = vpop.f32.mrf.mxu0
  %v548 = vadd.f32 0.0, %v547
  %v549 = vpop.f32.mrf.mxu0
  %v550 = vadd.f32 0.0, %v549
  %551 = vmatmul.bf16.gmra.mxu0 %v420
  %v552 = vpop.f32.mrf.mxu0
  %v553 = vadd.f32 0.0, %v552
  %v554 = vpop.f32.mrf.mxu0
  %v555 = vadd.f32 0.0, %v554
  %556 = vmatmul.bf16.gmra.mxu0 %v423
  %v557 = vpop.f32.mrf.mxu0
  %v558 = vadd.f32 0.0, %v557
  %v559 = vpop.f32.mrf.mxu0
  %v560 = vadd.f32 0.0, %v559
  %561 = vmatmul.bf16.gmra.mxu0 %v426
  %v562 = vpop.f32.mrf.mxu0
  %v563 = vadd.f32 0.0, %v562
  %v564 = vpop.f32.mrf.mxu0
  %v565 = vadd.f32 0.0, %v564
  %566 = vmatmul.bf16.gmra.mxu0 %v429
  %v567 = vpop.f32.mrf.mxu0
  %v568 = vadd.f32 0.0, %v567
  %v569 = vpop.f32.mrf.mxu0
  %v570 = vadd.f32 0.0, %v569
  %571 = vmatmul.bf16.gmra.mxu0 %v432
  %v572 = vpop.f32.mrf.mxu0
  %v573 = vadd.f32 0.0, %v572
  %v574 = vpop.f32.mrf.mxu0
  %v575 = vadd.f32 0.0, %v574
  %576 = vmatmul.bf16.gmra.mxu0 %v435
  %v577 = vpop.f32.mrf.mxu0
  %v578 = vadd.f32 0.0, %v577
  %v579 = vpop.f32.mrf.mxu0
  %v580 = vadd.f32 0.0, %v579
  %581 = vmatmul.bf16.gmra.mxu0 %v438
  %v582 = vpop.f32.mrf.mxu0
  %v583 = vadd.f32 0.0, %v582
  %v584 = vpop.f32.mrf.mxu0
  %v585 = vadd.f32 0.0, %v584
  %586 = vmatmul.bf16.gmra.mxu0 %v441
  %v587 = vpop.f32.mrf.mxu0
  %v588 = vadd.f32 0.0, %v587
  %v589 = vpop.f32.mrf.mxu0
  %v590 = vadd.f32 0.0, %v589
  %591 = vmatmul.bf16.gmra.mxu0 %v444
  %v592 = vpop.f32.mrf.mxu0
  %v593 = vadd.f32 0.0, %v592
  %v594 = vpop.f32.mrf.mxu0
  %v595 = vadd.f32 0.0, %v594
  %596 = vmatmul.bf16.gmra.mxu0 %v447
  %v597 = vpop.f32.mrf.mxu0
  %v598 = vadd.f32 0.0, %v597
  %v599 = vpop.f32.mrf.mxu0
  %v600 = vadd.f32 0.0, %v599
  %601 = vmatmul.bf16.gmra.mxu0 %v450
  %v602 = vpop.f32.mrf.mxu0
  %v603 = vadd.f32 0.0, %v602
  %v604 = vpop.f32.mrf.mxu0
  %v605 = vadd.f32 0.0, %v604
  %606 = vmatmul.bf16.gmra.mxu0 %v453
  %v607 = vpop.f32.mrf.mxu0
  %v608 = vadd.f32 0.0, %v607
  %v609 = vpop.f32.mrf.mxu0
  %v610 = vadd.f32 0.0, %v609
  %611 = vmatmul.bf16.gmra.mxu0 %v456
  %v612 = vpop.f32.mrf.mxu0
  %v613 = vadd.f32 0.0, %v612
  %v614 = vpop.f32.mrf.mxu0
  %v615 = vadd.f32 0.0, %v614
  %616 = vmatmul.bf16.gmra.mxu0 %v459
  %v617 = vpop.f32.mrf.mxu0
  %v618 = vadd.f32 0.0, %v617
  %v619 = vpop.f32.mrf.mxu0
  %v620 = vadd.f32 0.0, %v619
  %621 = vmatmul.bf16.gmra.mxu0 %v462
  %v622 = vpop.f32.mrf.mxu0
  %v623 = vadd.f32 0.0, %v622
  %v624 = vpop.f32.mrf.mxu0
  %v625 = vadd.f32 0.0, %v624
  %626 = vmatmul.bf16.gmra.mxu0 %v465
  %v627 = vpop.f32.mrf.mxu0
  %v628 = vadd.f32 0.0, %v627
  %v629 = vpop.f32.mrf.mxu0
  %v630 = vadd.f32 0.0, %v629
  %631 = vmatmul.bf16.gmra.mxu0 %v468
  %v632 = vpop.f32.mrf.mxu0
  %v633 = vadd.f32 0.0, %v632
  %v634 = vpop.f32.mrf.mxu0
  %v635 = vadd.f32 0.0, %v634
  %636 = vmatmul.bf16.gmra.mxu0 %v471
  %v637 = vpop.f32.mrf.mxu0
  %v638 = vadd.f32 0.0, %v637
  %v639 = vpop.f32.mrf.mxu0
  %v640 = vadd.f32 0.0, %v639
  %641 = vdwg.mxu0
  %v642 = vadd.f32 %v80, %v483
  %v643 = vadd.f32 %v81, %v485
  %v644 = vadd.f32 %v82, %v488
  %v645 = vadd.f32 %v83, %v490
  %v646 = vadd.f32 %v84, %v493
  %v647 = vadd.f32 %v85, %v495
  %v648 = vadd.f32 %v86, %v498
  %v649 = vadd.f32 %v87, %v500
  %v650 = vadd.f32 %v88, %v503
  %v651 = vadd.f32 %v89, %v505
  %v652 = vadd.f32 %v90, %v508
  %v653 = vadd.f32 %v91, %v510
  %v654 = vadd.f32 %v92, %v513
  %v655 = vadd.f32 %v93, %v515
  %v656 = vadd.f32 %v94, %v518
  %v657 = vadd.f32 %v95, %v520
  %v658 = vadd.f32 %v96, %v523
  %v659 = vadd.f32 %v97, %v525
  %v660 = vadd.f32 %v98, %v528
  %v661 = vadd.f32 %v99, %v530
  %v662 = vadd.f32 %v100, %v533
  %v663 = vadd.f32 %v101, %v535
  %v664 = vadd.f32 %v102, %v538
  %v665 = vadd.f32 %v103, %v540
  %v666 = vadd.f32 %v104, %v543
  %v667 = vadd.f32 %v105, %v545
  %v668 = vadd.f32 %v106, %v548
  %v669 = vadd.f32 %v107, %v550
  %v670 = vadd.f32 %v108, %v553
  %v671 = vadd.f32 %v109, %v555
  %v672 = vadd.f32 %v110, %v558
  %v673 = vadd.f32 %v111, %v560
  %v674 = vadd.f32 %v112, %v563
  %v675 = vadd.f32 %v113, %v565
  %v676 = vadd.f32 %v114, %v568
  %v677 = vadd.f32 %v115, %v570
  %v678 = vadd.f32 %v116, %v573
  %v679 = vadd.f32 %v117, %v575
  %v680 = vadd.f32 %v118, %v578
  %v681 = vadd.f32 %v119, %v580
  %v682 = vadd.f32 %v120, %v583
  %v683 = vadd.f32 %v121, %v585
  %v684 = vadd.f32 %v122, %v588
  %v685 = vadd.f32 %v123, %v590
  %v686 = vadd.f32 %v124, %v593
  %v687 = vadd.f32 %v125, %v595
  %v688 = vadd.f32 %v126, %v598
  %v689 = vadd.f32 %v127, %v600
  %v690 = vadd.f32 %v128, %v603
  %v691 = vadd.f32 %v129, %v605
  %v692 = vadd.f32 %v130, %v608
  %v693 = vadd.f32 %v131, %v610
  %v694 = vadd.f32 %v132, %v613
  %v695 = vadd.f32 %v133, %v615
  %v696 = vadd.f32 %v134, %v618
  %v697 = vadd.f32 %v135, %v620
  %v698 = vadd.f32 %v136, %v623
  %v699 = vadd.f32 %v137, %v625
  %v700 = vadd.f32 %v138, %v628
  %v701 = vadd.f32 %v139, %v630
  %v702 = vadd.f32 %v140, %v633
  %v703 = vadd.f32 %v141, %v635
  %v704 = vadd.f32 %v142, %v638
  %v705 = vadd.f32 %v143, %v640
  %706 = vst [vmem:[#allocation2] sm:$0xff] %v642
  %707 = vst [vmem:[#allocation2 + $0x8] sm:$0xff] %v643
  %708 = vst [vmem:[#allocation2 + $0x10] sm:$0xff] %v644
  %709 = vst [vmem:[#allocation2 + $0x18] sm:$0xff] %v645
  %710 = vst [vmem:[#allocation2 + $0x20] sm:$0xff] %v646
  %711 = vst [vmem:[#allocation2 + $0x28] sm:$0xff] %v647
  %712 = vst [vmem:[#allocation2 + $0x30] sm:$0xff] %v648
  %713 = vst [vmem:[#allocation2 + $0x38] sm:$0xff] %v649
  %714 = vst [vmem:[#allocation2 + $0x40] sm:$0xff] %v650
  %715 = vst [vmem:[#allocation2 + $0x48] sm:$0xff] %v651
  %716 = vst [vmem:[#allocation2 + $0x50] sm:$0xff] %v652
  %717 = vst [vmem:[#allocation2 + $0x58] sm:$0xff] %v653
  %718 = vst [vmem:[#allocation2 + $0x60] sm:$0xff] %v654
  %719 = vst [vmem:[#allocation2 + $0x68] sm:$0xff] %v655
  %720 = vst [vmem:[#allocation2 + $0x70] sm:$0xff] %v656
  %721 = vst [vmem:[#allocation2 + $0x78] sm:$0xff] %v657
  %722 = vst [vmem:[#allocation2 + $0x80] sm:$0xff] %v658
  %723 = vst [vmem:[#allocation2 + $0x88] sm:$0xff] %v659
  %724 = vst [vmem:[#allocation2 + $0x90] sm:$0xff] %v660
  %725 = vst [vmem:[#allocation2 + $0x98] sm:$0xff] %v661
  %726 = vst [vmem:[#allocation2 + $0xa0] sm:$0xff] %v662
  %727 = vst [vmem:[#allocation2 + $0xa8] sm:$0xff] %v663
  %728 = vst [vmem:[#allocation2 + $0xb0] sm:$0xff] %v664
  %729 = vst [vmem:[#allocation2 + $0xb8] sm:$0xff] %v665
  %730 = vst [vmem:[#allocation2 + $0xc0] sm:$0xff] %v666
  %731 = vst [vmem:[#allocation2 + $0xc8] sm:$0xff] %v667
  %732 = vst [vmem:[#allocation2 + $0xd0] sm:$0xff] %v668
  %733 = vst [vmem:[#allocation2 + $0xd8] sm:$0xff] %v669
  %734 = vst [vmem:[#allocation2 + $0xe0] sm:$0xff] %v670
  %735 = vst [vmem:[#allocation2 + $0xe8] sm:$0xff] %v671
  %736 = vst [vmem:[#allocation2 + $0xf0] sm:$0xff] %v672
  %737 = vst [vmem:[#allocation2 + $0xf8] sm:$0xff] %v673
  %738 = vst [vmem:[#allocation2 + $0x100] sm:$0xff] %v674
  %739 = vst [vmem:[#allocation2 + $0x108] sm:$0xff] %v675
  %740 = vst [vmem:[#allocation2 + $0x110] sm:$0xff] %v676
  %741 = vst [vmem:[#allocation2 + $0x118] sm:$0xff] %v677
  %742 = vst [vmem:[#allocation2 + $0x120] sm:$0xff] %v678
  %743 = vst [vmem:[#allocation2 + $0x128] sm:$0xff] %v679
  %744 = vst [vmem:[#allocation2 + $0x130] sm:$0xff] %v680
  %745 = vst [vmem:[#allocation2 + $0x138] sm:$0xff] %v681
  %746 = vst [vmem:[#allocation2 + $0x140] sm:$0xff] %v682
  %747 = vst [vmem:[#allocation2 + $0x148] sm:$0xff] %v683
  %748 = vst [vmem:[#allocation2 + $0x150] sm:$0xff] %v684
  %749 = vst [vmem:[#allocation2 + $0x158] sm:$0xff] %v685
  %750 = vst [vmem:[#allocation2 + $0x160] sm:$0xff] %v686
  %751 = vst [vmem:[#allocation2 + $0x168] sm:$0xff] %v687
  %752 = vst [vmem:[#allocation2 + $0x170] sm:$0xff] %v688
  %753 = vst [vmem:[#allocation2 + $0x178] sm:$0xff] %v689
  %754 = vst [vmem:[#allocation2 + $0x180] sm:$0xff] %v690
  %755 = vst [vmem:[#allocation2 + $0x188] sm:$0xff] %v691
  %756 = vst [vmem:[#allocation2 + $0x190] sm:$0xff] %v692
  %757 = vst [vmem:[#allocation2 + $0x198] sm:$0xff] %v693
  %758 = vst [vmem:[#allocation2 + $0x1a0] sm:$0xff] %v694
  %759 = vst [vmem:[#allocation2 + $0x1a8] sm:$0xff] %v695
  %760 = vst [vmem:[#allocation2 + $0x1b0] sm:$0xff] %v696
  %761 = vst [vmem:[#allocation2 + $0x1b8] sm:$0xff] %v697
  %762 = vst [vmem:[#allocation2 + $0x1c0] sm:$0xff] %v698
  %763 = vst [vmem:[#allocation2 + $0x1c8] sm:$0xff] %v699
  %764 = vst [vmem:[#allocation2 + $0x1d0] sm:$0xff] %v700
  %765 = vst [vmem:[#allocation2 + $0x1d8] sm:$0xff] %v701
  %766 = vst [vmem:[#allocation2 + $0x1e0] sm:$0xff] %v702
  %767 = vst [vmem:[#allocation2 + $0x1e8] sm:$0xff] %v703
  %768 = vst [vmem:[#allocation2 + $0x1f0] sm:$0xff] %v704
  %769 = vst [vmem:[#allocation2 + $0x1f8] sm:$0xff] %v705
  %v770 = vld [vmem:[#allocation2] sm:$0xff]
  %v771 = vld [vmem:[#allocation2 + $0x8] sm:$0xff]
  %v772 = vld [vmem:[#allocation2 + $0x10] sm:$0xff]
  %v773 = vld [vmem:[#allocation2 + $0x18] sm:$0xff]
  %v774 = vld [vmem:[#allocation2 + $0x20] sm:$0xff]
  %v775 = vld [vmem:[#allocation2 + $0x28] sm:$0xff]
  %v776 = vld [vmem:[#allocation2 + $0x30] sm:$0xff]
  %v777 = vld [vmem:[#allocation2 + $0x38] sm:$0xff]
  %v778 = vld [vmem:[#allocation2 + $0x40] sm:$0xff]
  %v779 = vld [vmem:[#allocation2 + $0x48] sm:$0xff]
  %v780 = vld [vmem:[#allocation2 + $0x50] sm:$0xff]
  %v781 = vld [vmem:[#allocation2 + $0x58] sm:$0xff]
  %v782 = vld [vmem:[#allocation2 + $0x60] sm:$0xff]
  %v783 = vld [vmem:[#allocation2 + $0x68] sm:$0xff]
  %v784 = vld [vmem:[#allocation2 + $0x70] sm:$0xff]
  %v785 = vld [vmem:[#allocation2 + $0x78] sm:$0xff]
  %v786 = vld [vmem:[#allocation2 + $0x80] sm:$0xff]
  %v787 = vld [vmem:[#allocation2 + $0x88] sm:$0xff]
  %v788 = vld [vmem:[#allocation2 + $0x90] sm:$0xff]
  %v789 = vld [vmem:[#allocation2 + $0x98] sm:$0xff]
  %v790 = vld [vmem:[#allocation2 + $0xa0] sm:$0xff]
  %v791 = vld [vmem:[#allocation2 + $0xa8] sm:$0xff]
  %v792 = vld [vmem:[#allocation2 + $0xb0] sm:$0xff]
  %v793 = vld [vmem:[#allocation2 + $0xb8] sm:$0xff]
  %v794 = vld [vmem:[#allocation2 + $0xc0] sm:$0xff]
  %v795 = vld [vmem:[#allocation2 + $0xc8] sm:$0xff]
  %v796 = vld [vmem:[#allocation2 + $0xd0] sm:$0xff]
  %v797 = vld [vmem:[#allocation2 + $0xd8] sm:$0xff]
  %v798 = vld [vmem:[#allocation2 + $0xe0] sm:$0xff]
  %v799 = vld [vmem:[#allocation2 + $0xe8] sm:$0xff]
  %v800 = vld [vmem:[#allocation2 + $0xf0] sm:$0xff]
  %v801 = vld [vmem:[#allocation2 + $0xf8] sm:$0xff]
  %v802 = vld [vmem:[#allocation2 + $0x100] sm:$0xff]
  %v803 = vld [vmem:[#allocation2 + $0x108] sm:$0xff]
  %v804 = vld [vmem:[#allocation2 + $0x110] sm:$0xff]
  %v805 = vld [vmem:[#allocation2 + $0x118] sm:$0xff]
  %v806 = vld [vmem:[#allocation2 + $0x120] sm:$0xff]
  %v807 = vld [vmem:[#allocation2 + $0x128] sm:$0xff]
  %v808 = vld [vmem:[#allocation2 + $0x130] sm:$0xff]
  %v809 = vld [vmem:[#allocation2 + $0x138] sm:$0xff]
  %v810 = vld [vmem:[#allocation2 + $0x140] sm:$0xff]
  %v811 = vld [vmem:[#allocation2 + $0x148] sm:$0xff]
  %v812 = vld [vmem:[#allocation2 + $0x150] sm:$0xff]
  %v813 = vld [vmem:[#allocation2 + $0x158] sm:$0xff]
  %v814 = vld [vmem:[#allocation2 + $0x160] sm:$0xff]
  %v815 = vld [vmem:[#allocation2 + $0x168] sm:$0xff]
  %v816 = vld [vmem:[#allocation2 + $0x170] sm:$0xff]
  %v817 = vld [vmem:[#allocation2 + $0x178] sm:$0xff]
  %v818 = vld [vmem:[#allocation2 + $0x180] sm:$0xff]
  %v819 = vld [vmem:[#allocation2 + $0x188] sm:$0xff]
  %v820 = vld [vmem:[#allocation2 + $0x190] sm:$0xff]
  %v821 = vld [vmem:[#allocation2 + $0x198] sm:$0xff]
  %v822 = vld [vmem:[#allocation2 + $0x1a0] sm:$0xff]
  %v823 = vld [vmem:[#allocation2 + $0x1a8] sm:$0xff]
  %v824 = vld [vmem:[#allocation2 + $0x1b0] sm:$0xff]
  %v825 = vld [vmem:[#allocation2 + $0x1b8] sm:$0xff]
  %v826 = vld [vmem:[#allocation2 + $0x1c0] sm:$0xff]
  %v827 = vld [vmem:[#allocation2 + $0x1c8] sm:$0xff]
  %v828 = vld [vmem:[#allocation2 + $0x1d0] sm:$0xff]
  %v829 = vld [vmem:[#allocation2 + $0x1d8] sm:$0xff]
  %v830 = vld [vmem:[#allocation2 + $0x1e0] sm:$0xff]
  %v831 = vld [vmem:[#allocation2 + $0x1e8] sm:$0xff]
  %v832 = vld [vmem:[#allocation2 + $0x1f0] sm:$0xff]
  %v833 = vld [vmem:[#allocation2 + $0x1f8] sm:$0xff]
  %834 = vst [vmem:[%s2] sm:$0xff] %v770
  %835 = vst [vmem:[%s2 + $0x8] sm:$0xff] %v771
  %836 = vst [vmem:[%s2 + $0x10] sm:$0xff] %v772
  %837 = vst [vmem:[%s2 + $0x18] sm:$0xff] %v773
  %838 = vst [vmem:[%s2 + $0x20] sm:$0xff] %v774
  %839 = vst [vmem:[%s2 + $0x28] sm:$0xff] %v775
  %840 = vst [vmem:[%s2 + $0x30] sm:$0xff] %v776
  %841 = vst [vmem:[%s2 + $0x38] sm:$0xff] %v777
  %842 = vst [vmem:[%s2 + $0x40] sm:$0xff] %v778
  %843 = vst [vmem:[%s2 + $0x48] sm:$0xff] %v779
  %844 = vst [vmem:[%s2 + $0x50] sm:$0xff] %v780
  %845 = vst [vmem:[%s2 + $0x58] sm:$0xff] %v781
  %846 = vst [vmem:[%s2 + $0x60] sm:$0xff] %v782
  %847 = vst [vmem:[%s2 + $0x68] sm:$0xff] %v783
  %848 = vst [vmem:[%s2 + $0x70] sm:$0xff] %v784
  %849 = vst [vmem:[%s2 + $0x78] sm:$0xff] %v785
  %850 = vst [vmem:[%s2 + $0x80] sm:$0xff] %v786
  %851 = vst [vmem:[%s2 + $0x88] sm:$0xff] %v787
  %852 = vst [vmem:[%s2 + $0x90] sm:$0xff] %v788
  %853 = vst [vmem:[%s2 + $0x98] sm:$0xff] %v789
  %854 = vst [vmem:[%s2 + $0xa0] sm:$0xff] %v790
  %855 = vst [vmem:[%s2 + $0xa8] sm:$0xff] %v791
  %856 = vst [vmem:[%s2 + $0xb0] sm:$0xff] %v792
  %857 = vst [vmem:[%s2 + $0xb8] sm:$0xff] %v793
  %858 = vst [vmem:[%s2 + $0xc0] sm:$0xff] %v794
  %859 = vst [vmem:[%s2 + $0xc8] sm:$0xff] %v795
  %860 = vst [vmem:[%s2 + $0xd0] sm:$0xff] %v796
  %861 = vst [vmem:[%s2 + $0xd8] sm:$0xff] %v797
  %862 = vst [vmem:[%s2 + $0xe0] sm:$0xff] %v798
  %863 = vst [vmem:[%s2 + $0xe8] sm:$0xff] %v799
  %864 = vst [vmem:[%s2 + $0xf0] sm:$0xff] %v800
  %865 = vst [vmem:[%s2 + $0xf8] sm:$0xff] %v801
  %866 = vst [vmem:[%s2 + $0x100] sm:$0xff] %v802
  %867 = vst [vmem:[%s2 + $0x108] sm:$0xff] %v803
  %868 = vst [vmem:[%s2 + $0x110] sm:$0xff] %v804
  %869 = vst [vmem:[%s2 + $0x118] sm:$0xff] %v805
  %870 = vst [vmem:[%s2 + $0x120] sm:$0xff] %v806
  %871 = vst [vmem:[%s2 + $0x128] sm:$0xff] %v807
  %872 = vst [vmem:[%s2 + $0x130] sm:$0xff] %v808
  %873 = vst [vmem:[%s2 + $0x138] sm:$0xff] %v809
  %874 = vst [vmem:[%s2 + $0x140] sm:$0xff] %v810
  %875 = vst [vmem:[%s2 + $0x148] sm:$0xff] %v811
  %876 = vst [vmem:[%s2 + $0x150] sm:$0xff] %v812
  %877 = vst [vmem:[%s2 + $0x158] sm:$0xff] %v813
  %878 = vst [vmem:[%s2 + $0x160] sm:$0xff] %v814
  %879 = vst [vmem:[%s2 + $0x168] sm:$0xff] %v815
  %880 = vst [vmem:[%s2 + $0x170] sm:$0xff] %v816
  %881 = vst [vmem:[%s2 + $0x178] sm:$0xff] %v817
  %882 = vst [vmem:[%s2 + $0x180] sm:$0xff] %v818
  %883 = vst [vmem:[%s2 + $0x188] sm:$0xff] %v819
  %884 = vst [vmem:[%s2 + $0x190] sm:$0xff] %v820
  %885 = vst [vmem:[%s2 + $0x198] sm:$0xff] %v821
  %886 = vst [vmem:[%s2 + $0x1a0] sm:$0xff] %v822
  %887 = vst [vmem:[%s2 + $0x1a8] sm:$0xff] %v823
  %888 = vst [vmem:[%s2 + $0x1b0] sm:$0xff] %v824
  %889 = vst [vmem:[%s2 + $0x1b8] sm:$0xff] %v825
  %890 = vst [vmem:[%s2 + $0x1c0] sm:$0xff] %v826
  %891 = vst [vmem:[%s2 + $0x1c8] sm:$0xff] %v827
  %892 = vst [vmem:[%s2 + $0x1d0] sm:$0xff] %v828
  %893 = vst [vmem:[%s2 + $0x1d8] sm:$0xff] %v829
  %894 = vst [vmem:[%s2 + $0x1e0] sm:$0xff] %v830
  %895 = vst [vmem:[%s2 + $0x1e8] sm:$0xff] %v831
  %896 = vst [vmem:[%s2 + $0x1f0] sm:$0xff] %v832
  %897 = vst [vmem:[%s2 + $0x1f8] sm:$0xff] %v833
  // Predicated region
  $region14: #{_lambda_.23} parent=0 // pred_check
    _
  $region15: #{_lambda_.23} parent=0 // pred_check_branch
    %899 = sbr.rel (0) target = $region17
  $region16: #{_lambda_.23} parent=0 // pred_region
    _
  $region17: #{_lambda_.23} parent=0 // pred_fallthru
    _
  // Predicated region
  $region18: #{_lambda_.23} parent=0 // pred_check
    _
  $region19: #{_lambda_.23} parent=0 // pred_check_branch
    %901 = sbr.rel (0) target = $region21
  $region20: #{_lambda_.23} parent=0 // pred_region
    _
  $region21: #{_lambda_.23} parent=0 // pred_fallthru
    _

// kernel: _lambda_.24
$region0: #{_lambda_.24}
  #allocation0 [shape = 'u32[]', space=smem, size = 0x4, offset = 0x4, fixed_abs, tag = 'smem constant byte address 0x4 - core index']
  #allocation1 [shape = 'u32[72,128]{1,0:T(1,128)}', space=vmem, size = 0x9000, scoped, tag = 'internal scratch']
  %s0 = inlined_call_operand.vmem [shape: f32[128,128], index: 0, kind: input, shape index: {}]
  %s1 = inlined_call_operand.vmem [shape: f32[1,1,128], index: 1, kind: output, shape index: {0}]
  %s2 = inlined_call_operand.vmem [shape: f32[1,1,128], index: 2, kind: output, shape index: {1}]
  %3 = xla_tuple %s1, %s2
  %s4 = sld [smem:[#allocation0]]
  $region22: #{_lambda_.24} parent=0
    _
  %s6 = ssub.s32 1, %s4
  %s7 = scalar_select 0, %s6, %s4
  // Predicated region
  $region2: #{_lambda_.24} parent=0 // pred_check
    _
  $region3: #{_lambda_.24} parent=0 // pred_check_branch
    %9 = sbr.rel (0) target = $region5
  $region4: #{_lambda_.24} parent=0 // pred_region
    _
  $region5: #{_lambda_.24} parent=0 // pred_fallthru
    _
  %v10 = vld [vmem:[%s0] sm:$0xff]
  %v11 = vld [vmem:[%s0 + $0x8] sm:$0xff]
  %v12 = vld [vmem:[%s0 + $0x10] sm:$0xff]
  %v13 = vld [vmem:[%s0 + $0x18] sm:$0xff]
  %v14 = vld [vmem:[%s0 + $0x20] sm:$0xff]
  %v15 = vld [vmem:[%s0 + $0x28] sm:$0xff]
  %v16 = vld [vmem:[%s0 + $0x30] sm:$0xff]
  %v17 = vld [vmem:[%s0 + $0x38] sm:$0xff]
  %v18 = vld [vmem:[%s0 + $0x40] sm:$0xff]
  %v19 = vld [vmem:[%s0 + $0x48] sm:$0xff]
  %v20 = vld [vmem:[%s0 + $0x50] sm:$0xff]
  %v21 = vld [vmem:[%s0 + $0x58] sm:$0xff]
  %v22 = vld [vmem:[%s0 + $0x60] sm:$0xff]
  %v23 = vld [vmem:[%s0 + $0x68] sm:$0xff]
  %v24 = vld [vmem:[%s0 + $0x70] sm:$0xff]
  %v25 = vld [vmem:[%s0 + $0x78] sm:$0xff]
  %v26 = vadd.f32 %v10, %v11
  %v27 = vadd.f32 %v26, %v12
  %v28 = vadd.f32 %v27, %v13
  %v29 = vadd.f32 %v28, %v14
  %v30 = vadd.f32 %v29, %v15
  %v31 = vadd.f32 %v30, %v16
  %v32 = vadd.f32 %v31, %v17
  %v33 = vadd.f32 %v32, %v18
  %v34 = vadd.f32 %v33, %v19
  %v35 = vadd.f32 %v34, %v20
  %v36 = vadd.f32 %v35, %v21
  %v37 = vadd.f32 %v36, %v22
  %v38 = vadd.f32 %v37, %v23
  %v39 = vadd.f32 %v38, %v24
  %v40 = vadd.f32 %v39, %v25
  %v41 = vrot.slane %v40, 4
  %v42 = vadd.f32 %v40, %v41
  %v43 = vrot.slane %v42, 2
  %v44 = vadd.f32 %v42, %v43
  %v45 = vrot.slane %v44, 1
  %v46 = vadd.f32 %v44, %v45
  %47 = vst [vmem:[%s1] sm:$0x1] %v46
  %v48 = vmul.f32 %v10, %v10
  %v49 = vmul.f32 %v11, %v11
  %v50 = vmul.f32 %v12, %v12
  %v51 = vmul.f32 %v13, %v13
  %v52 = vmul.f32 %v14, %v14
  %v53 = vmul.f32 %v15, %v15
  %v54 = vmul.f32 %v16, %v16
  %v55 = vmul.f32 %v17, %v17
  %v56 = vmul.f32 %v18, %v18
  %v57 = vmul.f32 %v19, %v19
  %v58 = vmul.f32 %v20, %v20
  %v59 = vmul.f32 %v21, %v21
  %v60 = vmul.f32 %v22, %v22
  %v61 = vmul.f32 %v23, %v23
  %v62 = vmul.f32 %v24, %v24
  %v63 = vmul.f32 %v25, %v25
  %v64 = vadd.f32 %v48, %v49
  %v65 = vadd.f32 %v64, %v50
  %v66 = vadd.f32 %v65, %v51
  %v67 = vadd.f32 %v66, %v52
  %v68 = vadd.f32 %v67, %v53
  %v69 = vadd.f32 %v68, %v54
  %v70 = vadd.f32 %v69, %v55
  %v71 = vadd.f32 %v70, %v56
  %v72 = vadd.f32 %v71, %v57
  %v73 = vadd.f32 %v72, %v58
  %v74 = vadd.f32 %v73, %v59
  %v75 = vadd.f32 %v74, %v60
  %v76 = vadd.f32 %v75, %v61
  %v77 = vadd.f32 %v76, %v62
  %v78 = vadd.f32 %v77, %v63
  %v79 = vrot.slane %v78, 4
  %v80 = vadd.f32 %v78, %v79
  %v81 = vrot.slane %v80, 2
  %v82 = vadd.f32 %v80, %v81
  %v83 = vrot.slane %v82, 1
  %v84 = vadd.f32 %v82, %v83
  %85 = vst [vmem:[%s2] sm:$0x1] %v84
  // Predicated region
  $region6: #{_lambda_.24} parent=0 // pred_check
    _
  $region7: #{_lambda_.24} parent=0 // pred_check_branch
    %87 = sbr.rel (0) target = $region9
  $region8: #{_lambda_.24} parent=0 // pred_region
    _
  $region9: #{_lambda_.24} parent=0 // pred_fallthru
    _
  // Predicated region
  $region10: #{_lambda_.24} parent=0 // pred_check
    _
  $region11: #{_lambda_.24} parent=0 // pred_check_branch
    %89 = sbr.rel (0) target = $region13
  $region12: #{_lambda_.24} parent=0 // pred_region
    _
  $region13: #{_lambda_.24} parent=0 // pred_fallthru
    _
  // Predicated region
  $region14: #{_lambda_.24} parent=0 // pred_check
    _
  $region15: #{_lambda_.24} parent=0 // pred_check_branch
    %91 = sbr.rel (0) target = $region17
  $region16: #{_lambda_.24} parent=0 // pred_region
    _
  $region17: #{_lambda_.24} parent=0 // pred_fallthru
    _
  // Predicated region
  $region18: #{_lambda_.24} parent=0 // pred_check
    _
  $region19: #{_lambda_.24} parent=0 // pred_check_branch
    %93 = sbr.rel (0) target = $region21
  $region20: #{_lambda_.24} parent=0 // pred_region
    _
  $region21: #{_lambda_.24} parent=0 // pred_fallthru
    _

// kernel: tile.78
$region0: #{tile.78}
  #allocation0 [shape = 's32[1]{0}', space=sflag, size = 0x4, scoped, tag = 'scoped memory for tile.78']
  %s0 = inlined_call_operand.vmem [shape: f32[8], index: 0, kind: input, shape index: {}]
  %s1 = inlined_call_operand.vmem [shape: f32[16,8], index: 1, kind: output, shape index: {}]
  // Predicated region
  $region2: #{tile.78} parent=0 // pred_check
    _
  $region3: #{tile.78} parent=0 // pred_check_branch
    %3 = sbr.rel (0) target = $region5
  $region4: #{tile.78} parent=0 // pred_region
    _
  $region5: #{tile.78} parent=0 // pred_fallthru
    _
  %v4 = vld [vmem:[%s0] ss:$0 sm:$0xff]
  %5 = vst [vmem:[%s1] sm:$0xff] %v4
  %s6 = scalar_lea.vmem %s1, 8
  %7 = vst [vmem:[%s6] sm:$0xff] %v4

// kernel: tile.79
$region0: #{tile.79}
  %s0 = inlined_call_operand.vmem [shape: f32[16,8], index: 0, kind: input, shape index: {}]
  %s1 = inlined_call_operand.vmem [shape: f32[1,128], index: 1, kind: output, shape index: {}]
  $region1: #{tile.79} parent=0
    #allocation0 [shape = 'u8[4096]{0}', space=vmem, size = 0x1000, scoped, tag = 'scoped mem for output reshape']
    %v2 = vld [vmem:[%s0] sm:$0x1]
    %vm3 = vcmask 64512
    %4 = vst.msk [vmem:[#allocation0] sm:$0x1] %vm3, %v2
    %s5 = scalar_lea.vmem %s0, 15
    %v6 = vld [vmem:[%s5] sm:$0x1]
    %7 = vrot.lane.b32.xlu0 %v6, 120
    %v8 = vpop.permute.xlu0 %7
    %vm9 = vcmask 1048512
    %10 = vst.msk [vmem:[#allocation0] sm:$0x1] %vm9, %v8
    %s11 = scalar_lea.vmem %s0, 14
    %v12 = vld [vmem:[%s11] sm:$0x1]
    %13 = vrot.lane.b32.xlu0 %v12, 112
    %v14 = vpop.permute.xlu0 %13
    %vm15 = vcmask 982912
    %16 = vst.msk [vmem:[#allocation0] sm:$0x1] %vm15, %v14
    %s17 = scalar_lea.vmem %s0, 13
    %v18 = vld [vmem:[%s17] sm:$0x1]
    %19 = vrot.lane.b32.xlu0 %v18, 104
    %v20 = vpop.permute.xlu0 %19
    %vm21 = vcmask 917312
    %22 = vst.msk [vmem:[#allocation0] sm:$0x1] %vm21, %v20
    %s23 = scalar_lea.vmem %s0, 12
    %v24 = vld [vmem:[%s23] sm:$0x1]
    %25 = vrot.lane.b32.xlu0 %v24, 96
    %v26 = vpop.permute.xlu0 %25
    %vm27 = vcmask 851712
    %28 = vst.msk [vmem:[#allocation0] sm:$0x1] %vm27, %v26
    %s29 = scalar_lea.vmem %s0, 11
    %v30 = vld [vmem:[%s29] sm:$0x1]
    %31 = vrot.lane.b32.xlu0 %v30, 88
    %v32 = vpop.permute.xlu0 %31
    %vm33 = vcmask 786112
    %34 = vst.msk [vmem:[#allocation0] sm:$0x1] %vm33, %v32
    %s35 = scalar_lea.vmem %s0, 10
    %v36 = vld [vmem:[%s35] sm:$0x1]
    %37 = vrot.lane.b32.xlu0 %v36, 80
    %v38 = vpop.permute.xlu0 %37
    %vm39 = vcmask 720512
    %40 = vst.msk [vmem:[#allocation0] sm:$0x1] %vm39, %v38
    %s41 = scalar_lea.vmem %s0, 9
    %v42 = vld [vmem:[%s41] sm:$0x1]
    %43 = vrot.lane.b32.xlu0 %v42, 72
    %v44 = vpop.permute.xlu0 %43
    %vm45 = vcmask 654912
    %46 = vst.msk [vmem:[#allocation0] sm:$0x1] %vm45, %v44
    %s47 = scalar_lea.vmem %s0, 8
    %v48 = vld [vmem:[%s47] sm:$0x1]
    %49 = vrot.lane.b32.xlu0 %v48, 64
    %v50 = vpop.permute.xlu0 %49
    %vm51 = vcmask 589312
    %52 = vst.msk [vmem:[#allocation0] sm:$0x1] %vm51, %v50
    %s53 = scalar_lea.vmem %s0, 7
    %v54 = vld [vmem:[%s53] sm:$0x1]
    %55 = vrot.lane.b32.xlu0 %v54, 56
    %v56 = vpop.permute.xlu0 %55
    %vm57 = vcmask 523712
    %58 = vst.msk [vmem:[#allocation0] sm:$0x1] %vm57, %v56
    %s59 = scalar_lea.vmem %s0, 6
    %v60 = vld [vmem:[%s59] sm:$0x1]
    %61 = vrot.lane.b32.xlu0 %v60, 48
    %v62 = vpop.permute.xlu0 %61
    %vm63 = vcmask 458112
    %64 = vst.msk [vmem:[#allocation0] sm:$0x1] %vm63, %v62
    %s65 = scalar_lea.vmem %s0, 5
    %v66 = vld [vmem:[%s65] sm:$0x1]
    %67 = vrot.lane.b32.xlu0 %v66, 40
    %v68 = vpop.permute.xlu0 %67
    %vm69 = vcmask 392512
    %70 = vst.msk [vmem:[#allocation0] sm:$0x1] %vm69, %v68
    %s71 = scalar_lea.vmem %s0, 4
    %v72 = vld [vmem:[%s71] sm:$0x1]
    %73 = vrot.lane.b32.xlu0 %v72, 32
    %v74 = vpop.permute.xlu0 %73
    %vm75 = vcmask 326912
    %76 = vst.msk [vmem:[#allocation0] sm:$0x1] %vm75, %v74
    %s77 = scalar_lea.vmem %s0, 3
    %v78 = vld [vmem:[%s77] sm:$0x1]
    %79 = vrot.lane.b32.xlu0 %v78, 24
    %v80 = vpop.permute.xlu0 %79
    %vm81 = vcmask 261312
    %82 = vst.msk [vmem:[#allocation0] sm:$0x1] %vm81, %v80
    %s83 = scalar_lea.vmem %s0, 2
    %v84 = vld [vmem:[%s83] sm:$0x1]
    %85 = vrot.lane.b32.xlu0 %v84, 16
    %v86 = vpop.permute.xlu0 %85
    %vm87 = vcmask 195712
    %88 = vst.msk [vmem:[#allocation0] sm:$0x1] %vm87, %v86
    %s89 = scalar_lea.vmem %s0, 1
    %v90 = vld [vmem:[%s89] sm:$0x1]
    %91 = vrot.lane.b32.xlu0 %v90, 8
    %v92 = vpop.permute.xlu0 %91
    %vm93 = vcmask 130112
    %94 = vst.msk [vmem:[#allocation0] sm:$0x1] %vm93, %v92
    %s96 = ssub.s32 2, 1
    %v97 = vld [vmem:[#allocation0] sm:%s96]
    %s99 = ssub.s32 2, 1
    %100 = vst [vmem:[%s1] sm:%s99] %v97

// kernel: _lambda_.25
$region0: #{_lambda_.25}
  #allocation0 [shape = 'u32[]', space=smem, size = 0x4, offset = 0x4, fixed_abs, tag = 'smem constant byte address 0x4 - core index']
  #allocation1 [shape = 'u32[72,128]{1,0:T(1,128)}', space=vmem, size = 0x9000, scoped, tag = 'internal scratch']
  %s0 = inlined_call_operand.vmem [shape: f32[128,128], index: 0, kind: input, shape index: {}]
  %s1 = inlined_call_operand.vmem [shape: f32[1,128], index: 1, kind: input, shape index: {}]
  %s2 = inlined_call_operand.vmem [shape: f32[1,128], index: 2, kind: input, shape index: {}]
  %s3 = inlined_call_operand.vmem [shape: bf16[128,128], index: 3, kind: output, shape index: {}]
  %s4 = sld [smem:[#allocation0]]
  $region22: #{_lambda_.25} parent=0
    _
  %s6 = ssub.s32 1, %s4
  %s7 = scalar_select 0, %s6, %s4
  // Predicated region
  $region2: #{_lambda_.25} parent=0 // pred_check
    _
  $region3: #{_lambda_.25} parent=0 // pred_check_branch
    %9 = sbr.rel (0) target = $region5
  $region4: #{_lambda_.25} parent=0 // pred_region
    _
  $region5: #{_lambda_.25} parent=0 // pred_fallthru
    _
  // Predicated region
  $region6: #{_lambda_.25} parent=0 // pred_check
    _
  $region7: #{_lambda_.25} parent=0 // pred_check_branch
    %11 = sbr.rel (0) target = $region9
  $region8: #{_lambda_.25} parent=0 // pred_region
    _
  $region9: #{_lambda_.25} parent=0 // pred_fallthru
    _
  // Predicated region
  $region10: #{_lambda_.25} parent=0 // pred_check
    _
  $region11: #{_lambda_.25} parent=0 // pred_check_branch
    %13 = sbr.rel (0) target = $region13
  $region12: #{_lambda_.25} parent=0 // pred_region
    _
  $region13: #{_lambda_.25} parent=0 // pred_fallthru
    _
  %v14 = vld [vmem:[%s0] sm:$0xff]
  %v15 = vld [vmem:[%s0 + $0x8] sm:$0xff]
  %v16 = vld [vmem:[%s0 + $0x10] sm:$0xff]
  %v17 = vld [vmem:[%s0 + $0x18] sm:$0xff]
  %v18 = vld [vmem:[%s0 + $0x20] sm:$0xff]
  %v19 = vld [vmem:[%s0 + $0x28] sm:$0xff]
  %v20 = vld [vmem:[%s0 + $0x30] sm:$0xff]
  %v21 = vld [vmem:[%s0 + $0x38] sm:$0xff]
  %v22 = vld [vmem:[%s0 + $0x40] sm:$0xff]
  %v23 = vld [vmem:[%s0 + $0x48] sm:$0xff]
  %v24 = vld [vmem:[%s0 + $0x50] sm:$0xff]
  %v25 = vld [vmem:[%s0 + $0x58] sm:$0xff]
  %v26 = vld [vmem:[%s0 + $0x60] sm:$0xff]
  %v27 = vld [vmem:[%s0 + $0x68] sm:$0xff]
  %v28 = vld [vmem:[%s0 + $0x70] sm:$0xff]
  %v29 = vld [vmem:[%s0 + $0x78] sm:$0xff]
  %v30 = vld [vmem:[%s1] sm:$0x1]
  %v32 = vperm.slane %v30, 0
  %v34 = vmul.f32 %v14, %v32
  %v35 = vmul.f32 %v15, %v32
  %v36 = vmul.f32 %v16, %v32
  %v37 = vmul.f32 %v17, %v32
  %v38 = vmul.f32 %v18, %v32
  %v39 = vmul.f32 %v19, %v32
  %v40 = vmul.f32 %v20, %v32
  %v41 = vmul.f32 %v21, %v32
  %v42 = vmul.f32 %v22, %v32
  %v43 = vmul.f32 %v23, %v32
  %v44 = vmul.f32 %v24, %v32
  %v45 = vmul.f32 %v25, %v32
  %v46 = vmul.f32 %v26, %v32
  %v47 = vmul.f32 %v27, %v32
  %v48 = vmul.f32 %v28, %v32
  %v49 = vmul.f32 %v29, %v32
  %v50 = vld [vmem:[%s2] sm:$0x1]
  %v52 = vperm.slane %v50, 0
  %v54 = vadd.f32 %v34, %v52
  %v55 = vadd.f32 %v35, %v52
  %v56 = vadd.f32 %v36, %v52
  %v57 = vadd.f32 %v37, %v52
  %v58 = vadd.f32 %v38, %v52
  %v59 = vadd.f32 %v39, %v52
  %v60 = vadd.f32 %v40, %v52
  %v61 = vadd.f32 %v41, %v52
  %v62 = vadd.f32 %v42, %v52
  %v63 = vadd.f32 %v43, %v52
  %v64 = vadd.f32 %v44, %v52
  %v65 = vadd.f32 %v45, %v52
  %v66 = vadd.f32 %v46, %v52
  %v67 = vadd.f32 %v47, %v52
  %v68 = vadd.f32 %v48, %v52
  %v69 = vadd.f32 %v49, %v52
  %v70 = vmax.f32 %v54, 0.0
  %v71 = vmax.f32 %v55, 0.0
  %v72 = vmax.f32 %v56, 0.0
  %v73 = vmax.f32 %v57, 0.0
  %v74 = vmax.f32 %v58, 0.0
  %v75 = vmax.f32 %v59, 0.0
  %v76 = vmax.f32 %v60, 0.0
  %v77 = vmax.f32 %v61, 0.0
  %v78 = vmax.f32 %v62, 0.0
  %v79 = vmax.f32 %v63, 0.0
  %v80 = vmax.f32 %v64, 0.0
  %v81 = vmax.f32 %v65, 0.0
  %v82 = vmax.f32 %v66, 0.0
  %v83 = vmax.f32 %v67, 0.0
  %v84 = vmax.f32 %v68, 0.0
  %v85 = vmax.f32 %v69, 0.0
  %v86 = vpack.c.bf16 %v70, %v70
  %v87 = vpack.c.bf16 %v71, %v71
  %v88 = vpack.c.bf16 %v72, %v72
  %v89 = vpack.c.bf16 %v73, %v73
  %v90 = vpack.c.bf16 %v74, %v74
  %v91 = vpack.c.bf16 %v75, %v75
  %v92 = vpack.c.bf16 %v76, %v76
  %v93 = vpack.c.bf16 %v77, %v77
  %v94 = vpack.c.bf16 %v78, %v78
  %v95 = vpack.c.bf16 %v79, %v79
  %v96 = vpack.c.bf16 %v80, %v80
  %v97 = vpack.c.bf16 %v81, %v81
  %v98 = vpack.c.bf16 %v82, %v82
  %v99 = vpack.c.bf16 %v83, %v83
  %v100 = vpack.c.bf16 %v84, %v84
  %v101 = vpack.c.bf16 %v85, %v85
  %102 = vst [vmem:[%s3] sm:$0xf] %v86
  %103 = vst [vmem:[%s3 + $0x4] sm:$0xf] %v87
  %104 = vst [vmem:[%s3 + $0x8] sm:$0xf] %v88
  %105 = vst [vmem:[%s3 + $0xc] sm:$0xf] %v89
  %106 = vst [vmem:[%s3 + $0x10] sm:$0xf] %v90
  %107 = vst [vmem:[%s3 + $0x14] sm:$0xf] %v91
  %108 = vst [vmem:[%s3 + $0x18] sm:$0xf] %v92
  %109 = vst [vmem:[%s3 + $0x1c] sm:$0xf] %v93
  %110 = vst [vmem:[%s3 + $0x20] sm:$0xf] %v94
  %111 = vst [vmem:[%s3 + $0x24] sm:$0xf] %v95
  %112 = vst [vmem:[%s3 + $0x28] sm:$0xf] %v96
  %113 = vst [vmem:[%s3 + $0x2c] sm:$0xf] %v97
  %114 = vst [vmem:[%s3 + $0x30] sm:$0xf] %v98
  %115 = vst [vmem:[%s3 + $0x34] sm:$0xf] %v99
  %116 = vst [vmem:[%s3 + $0x38] sm:$0xf] %v100
  %117 = vst [vmem:[%s3 + $0x3c] sm:$0xf] %v101
  // Predicated region
  $region14: #{_lambda_.25} parent=0 // pred_check
    _
  $region15: #{_lambda_.25} parent=0 // pred_check_branch
    %119 = sbr.rel (0) target = $region17
  $region16: #{_lambda_.25} parent=0 // pred_region
    _
  $region17: #{_lambda_.25} parent=0 // pred_fallthru
    _
  // Predicated region
  $region18: #{_lambda_.25} parent=0 // pred_check
    _
  $region19: #{_lambda_.25} parent=0 // pred_check_branch
    %121 = sbr.rel (0) target = $region21
  $region20: #{_lambda_.25} parent=0 // pred_region
    _
  $region21: #{_lambda_.25} parent=0 // pred_fallthru
    _

// kernel: _lambda_.26
$region0: #{_lambda_.26}
  #allocation0 [shape = 'u32[]', space=smem, size = 0x4, offset = 0x4, fixed_abs, tag = 'smem constant byte address 0x4 - core index']
  #allocation1 [shape = 'u32[72,128]{1,0:T(1,128)}', space=vmem, size = 0x9000, scoped, tag = 'internal scratch']
  #allocation2 [shape = 'f32[512,48]{1,0:T(8,128)}', space=vmem, size = 0x40000, scoped, tag = 'scratch operand']
  %s0 = inlined_call_operand.vmem [shape: bf16[2048,8], index: 0, kind: input, shape index: {}]
  %s1 = inlined_call_operand.vmem [shape: bf16[8,48], index: 1, kind: input, shape index: {}]
  %s2 = inlined_call_operand.vmem [shape: f32[2048,48], index: 2, kind: output, shape index: {}]
  %s3 = sld [smem:[#allocation0]]
  $region45: #{_lambda_.26} parent=0
    _
  %s5 = ssub.s32 1, %s3
  %s6 = scalar_select 0, %s5, %s3
  loop: start=0, step=1, limit=6
  $region2: #{_lambda_.26} parent=0 // loop_pre_header
    _
  $region3: #{_lambda_.26} parent=0 // loop_header
    %s8 = sphi 0, %s12
    %p9 = scmp.ge.s32.totalorder %s8, 6
    %s15 = sphi 0, %s34
    %s16 = sphi 0, %s30
    %s17 = sphi 0, %s26
    %s18 = sphi 0, %s15
    %s19 = sphi 0, %s16
    %s20 = sphi 0, %s17
    %s21 = sphi 0, %s18
    %s22 = sphi 0, %s19
    %s23 = sphi 0, %s20
    %s39 = sphi 0, %s41
    %s42 = sphi 0, %s39
    %s43 = sphi 0, %s42
    %s59 = sphi 0, %s43
    %s67 = sphi 0, %s69
    %s70 = sphi 0, %s67
    %s71 = sphi 0, %s70
    %s87 = sphi 0, %s71
    %s95 = sphi 0, %s97
    %s98 = sphi 0, %s95
    %s99 = sphi 0, %s98
    %s115 = sphi 0, %s99
  $region4: #{_lambda_.26} parent=0 // loop_header_branch
    %11 = sbr.rel (%p9) target = $region8
  $region5: #{_lambda_.26} parent=0 // loop_body
    %s13 = ssub.s32 %s8, 1
    %s14 = ssub.s32 %s8, 2
    %s24 = sadd.s32 1, %s17
    %p25 = scmp.ge.s32.totalorder %s24, 1
    %s26 = scalar_select %p25, 0, %s24
    %s27 = sadd.s32 1, %s16
    %s28 = scalar_select %p25, %s27, %s16
    %p29 = scmp.ge.s32.totalorder %s28, 1
    %s30 = scalar_select %p29, 0, %s28
    %s31 = sadd.s32 1, %s15
    %s32 = scalar_select %p29, %s31, %s15
    %p33 = scmp.ge.s32.totalorder %s32, 4
    %s34 = scalar_select %p33, 0, %s32
    %s35 = ssub.s32 %s15, %s34
    %s36 = ssub.s32 %s17, %s26
    %s37 = sor.u32 %s35, %s36
    %p38 = scmp.eq.s32.totalorder %s37, 0
    %s40 = sadd.s32 %s39, 1
    %s41 = scalar_select %p38, %s39, %s40
    %p44 = pneg %p38
    %p45 = scmp.eq.s32.totalorder %s8, 3
    %p46 = por %p44, %p45
    %p47 = scmp.ne.s32.totalorder %s39, %s42
    %p48 = scmp.eq.s32.totalorder %s8, 0
    %p49 = por %p47, %p48
    %p50 = scmp.ne.s32.totalorder %s39, %s42
    %p51 = scmp.eq.s32.totalorder %s13, 3
    %p52 = por %p50, %p51
    %p53 = scmp.ne.s32.totalorder %s42, %s43
    %p54 = scmp.eq.s32.totalorder %s13, 0
    %p55 = por %p53, %p54
    %p56 = scmp.ne.s32.totalorder %s42, %s43
    %p57 = scmp.eq.s32.totalorder %s14, 3
    %p58 = por %p56, %p57
    %p60 = scmp.ne.s32.totalorder %s43, %s59
    %p61 = scmp.eq.s32.totalorder %s14, 0
    %p62 = por %p60, %p61
    %s63 = ssub.s32 %s17, %s26
    %s64 = ssub.s32 %s16, %s30
    %s65 = sor.u32 %s63, %s64
    %p66 = scmp.eq.s32.totalorder %s65, 0
    %s68 = sadd.s32 %s67, 1
    %s69 = scalar_select %p66, %s67, %s68
    %p72 = pneg %p66
    %p73 = scmp.eq.s32.totalorder %s8, 3
    %p74 = por %p72, %p73
    %p75 = scmp.ne.s32.totalorder %s67, %s70
    %p76 = scmp.eq.s32.totalorder %s8, 0
    %p77 = por %p75, %p76
    %p78 = scmp.ne.s32.totalorder %s67, %s70
    %p79 = scmp.eq.s32.totalorder %s13, 3
    %p80 = por %p78, %p79
    %p81 = scmp.ne.s32.totalorder %s70, %s71
    %p82 = scmp.eq.s32.totalorder %s13, 0
    %p83 = por %p81, %p82
    %p84 = scmp.ne.s32.totalorder %s70, %s71
    %p85 = scmp.eq.s32.totalorder %s14, 3
    %p86 = por %p84, %p85
    %p88 = scmp.ne.s32.totalorder %s71, %s87
    %p89 = scmp.eq.s32.totalorder %s14, 0
    %p90 = por %p88, %p89
    %s91 = ssub.s32 %s15, %s34
    %s92 = ssub.s32 %s16, %s30
    %s93 = sor.u32 %s91, %s92
    %p94 = scmp.eq.s32.totalorder %s93, 0
    %s96 = sadd.s32 %s95, 1
    %s97 = scalar_select %p94, %s95, %s96
    %p100 = pneg %p94
    %p101 = scmp.eq.s32.totalorder %s8, 3
    %p102 = por %p100, %p101
    %p103 = scmp.ne.s32.totalorder %s95, %s98
    %p104 = scmp.eq.s32.totalorder %s8, 0
    %p105 = por %p103, %p104
    %p106 = scmp.ne.s32.totalorder %s95, %s98
    %p107 = scmp.eq.s32.totalorder %s13, 3
    %p108 = por %p106, %p107
    %p109 = scmp.ne.s32.totalorder %s98, %s99
    %p110 = scmp.eq.s32.totalorder %s13, 0
    %p111 = por %p109, %p110
    %p112 = scmp.ne.s32.totalorder %s98, %s99
    %p113 = scmp.eq.s32.totalorder %s14, 3
    %p114 = por %p112, %p113
    %p116 = scmp.ne.s32.totalorder %s99, %s115
    %p117 = scmp.eq.s32.totalorder %s14, 0
    %p118 = por %p116, %p117
    %p119 = scmp.le.s32.totalorder 1, %s8
    %p120 = scmp.lt.s32.totalorder %s8, 5
    %p121 = pnand %p119, %p120
    %p122 = pneg %p121
    // Predicated region
    $region9: #{_lambda_.26} parent=5 // pred_check
      _
    $region10: #{_lambda_.26} parent=5 // pred_check_branch
      %124 = sbr.rel (%p121) target = $region12
    $region11: #{_lambda_.26} parent=5 // pred_region
      %s125 = ssub.s32 %s8, 1
      // Predicated region
      $region13: #{_lambda_.26} parent=11 // pred_check
        %p126 = pneg %p83
      $region14: #{_lambda_.26} parent=11 // pred_check_branch
        %128 = sbr.rel (%p126) target = $region16
      $region15: #{_lambda_.26} parent=11 // pred_region
        %p129 = scmp.lt.s32.totalorder %s20, 0
        %s130 = scalar_select %p129, %s20, 0
        %p131 = scmp.lt.s32.totalorder %s19, 0
        %s132 = scalar_select %p131, %s19, 0
        %s133 = sadd.s32 %s132, %s130
        %s134 = smul.addr %s133, 4
        %s135 = scalar_lea.vmem %s1, %s134
      $region16: #{_lambda_.26} parent=11 // pred_fallthru
        _
    $region12: #{_lambda_.26} parent=5 // pred_fallthru
      _
    %p136 = scmp.lt.s32.totalorder %s8, 4
    // Predicated region
    $region17: #{_lambda_.26} parent=5 // pred_check
      %p137 = pneg %p136
    $region18: #{_lambda_.26} parent=5 // pred_check_branch
      %139 = sbr.rel (%p137) target = $region20
    $region19: #{_lambda_.26} parent=5 // pred_region
      // Predicated region
      $region21: #{_lambda_.26} parent=19 // pred_check
        %p140 = pneg %p49
      $region22: #{_lambda_.26} parent=19 // pred_check_branch
        %142 = sbr.rel (%p140) target = $region24
      $region23: #{_lambda_.26} parent=19 // pred_region
        %s143 = smul.u32 64, %s15
        %p144 = scmp.lt.s32.totalorder %s143, 255
        %s145 = scalar_select %p144, %s143, 255
        %p146 = scmp.lt.s32.totalorder %s17, 0
        %s147 = scalar_select %p146, %s17, 0
        %s148 = sadd.s32 %s147, %s145
        %s149 = smul.addr %s148, 4
        %s150 = scalar_lea.vmem %s0, %s149
        %s151 = smul.u32 64, %s15
      $region24: #{_lambda_.26} parent=19 // pred_fallthru
        _
    $region20: #{_lambda_.26} parent=5 // pred_fallthru
      _
    %p152 = scmp.le.s32.totalorder 1, %s8
    %p153 = scmp.lt.s32.totalorder %s8, 5
    %p154 = pnand %p152, %p153
    %p155 = pneg %p154
    // Predicated region
    $region25: #{_lambda_.26} parent=5 // pred_check
      _
    $region26: #{_lambda_.26} parent=5 // pred_check_branch
      %157 = sbr.rel (%p154) target = $region28
    $region27: #{_lambda_.26} parent=5 // pred_region
      %s158 = ssub.s32 %s8, 1
      %s159 = smul.u32 64, %s18
      %p160 = scmp.lt.s32.totalorder %s159, 255
      %s161 = scalar_select %p160, %s159, 255
      %p162 = scmp.lt.s32.totalorder %s20, 0
      %s163 = scalar_select %p162, %s20, 0
      %s164 = sadd.s32 %s163, %s161
      %s165 = smul.addr %s164, 4
      %s166 = scalar_lea.vmem %s0, %s165
      %p167 = pneg %p55
      %p168 = pneg %p52
      %p169 = scmp.lt.s32.totalorder %s20, 0
      %s170 = scalar_select %p169, %s20, 0
      %p171 = scmp.lt.s32.totalorder %s19, 0
      %s172 = scalar_select %p171, %s19, 0
      %s173 = sadd.s32 %s172, %s170
      %s174 = smul.addr %s173, 4
      %s175 = scalar_lea.vmem %s1, %s174
      %p176 = pneg %p83
      %p177 = pneg %p80
      %p178 = pneg %p111
      %p179 = pneg %p108
      %s180 = smul.u32 64, %s18
      %p181 = scmp.lt.s32.totalorder %s180, 255
      %s182 = scalar_select %p181, %s180, 255
      %p183 = scmp.lt.s32.totalorder %s19, 0
      %s184 = scalar_select %p183, %s19, 0
      %s185 = sadd.s32 %s184, %s182
      %s186 = smul.addr %s185, 8
      %s187 = scalar_lea.vmem %s2, %s186
      %s188 = smul.u32 64, %s18
      %p189 = scmp.lt.s32.totalorder %s188, 255
      %s190 = scalar_select %p189, %s188, 255
      %p191 = scmp.lt.s32.totalorder %s20, 0
      %s192 = scalar_select %p191, %s20, 0
      %s193 = sadd.s32 %s192, %s190
      %s194 = smul.addr %s193, 4
      %s195 = scalar_lea.vmem %s0, %s194
      %s196 = smul.u32 64, %s18
      %p197 = scmp.lt.s32.totalorder %s20, 0
      %s198 = scalar_select %p197, %s20, 0
      %p199 = scmp.lt.s32.totalorder %s19, 0
      %s200 = scalar_select %p199, %s19, 0
      %s201 = sadd.s32 %s200, %s198
      %s202 = smul.addr %s201, 4
      %s203 = scalar_lea.vmem %s1, %s202
      %s204 = smul.u32 64, %s18
      %p205 = scmp.lt.s32.totalorder %s204, 255
      %s206 = scalar_select %p205, %s204, 255
      %p207 = scmp.lt.s32.totalorder %s19, 0
      %s208 = scalar_select %p207, %s19, 0
      %s209 = sadd.s32 %s208, %s206
      %s210 = smul.addr %s209, 8
      %s211 = scalar_lea.vmem %s2, %s210
      %s212 = smul.u32 64, %s18
      %p214 = scmp.eq.s32.totalorder %s20, 0
      // Predicated region
      $region29: #{_lambda_.26} parent=27 // pred_check
        %p215 = pneg %p214
      $region30: #{_lambda_.26} parent=27 // pred_check_branch
        %217 = sbr.rel (%p215) target = $region32
      $region31: #{_lambda_.26} parent=27 // pred_region
        %vm218 = vcmask 392192
        %219 = vst.msk [vmem:[#allocation2] sm:$0xff] %vm218, 0.0
        %220 = vst.msk [vmem:[#allocation2 + $0x8] sm:$0xff] %vm218, 0.0
        %221 = vst.msk [vmem:[#allocation2 + $0x10] sm:$0xff] %vm218, 0.0
        %222 = vst.msk [vmem:[#allocation2 + $0x18] sm:$0xff] %vm218, 0.0
        %223 = vst.msk [vmem:[#allocation2 + $0x20] sm:$0xff] %vm218, 0.0
        %224 = vst.msk [vmem:[#allocation2 + $0x28] sm:$0xff] %vm218, 0.0
        %225 = vst.msk [vmem:[#allocation2 + $0x30] sm:$0xff] %vm218, 0.0
        %226 = vst.msk [vmem:[#allocation2 + $0x38] sm:$0xff] %vm218, 0.0
        %227 = vst.msk [vmem:[#allocation2 + $0x40] sm:$0xff] %vm218, 0.0
        %228 = vst.msk [vmem:[#allocation2 + $0x48] sm:$0xff] %vm218, 0.0
        %229 = vst.msk [vmem:[#allocation2 + $0x50] sm:$0xff] %vm218, 0.0
        %230 = vst.msk [vmem:[#allocation2 + $0x58] sm:$0xff] %vm218, 0.0
        %231 = vst.msk [vmem:[#allocation2 + $0x60] sm:$0xff] %vm218, 0.0
        %232 = vst.msk [vmem:[#allocation2 + $0x68] sm:$0xff] %vm218, 0.0
        %233 = vst.msk [vmem:[#allocation2 + $0x70] sm:$0xff] %vm218, 0.0
        %234 = vst.msk [vmem:[#allocation2 + $0x78] sm:$0xff] %vm218, 0.0
        %235 = vst.msk [vmem:[#allocation2 + $0x80] sm:$0xff] %vm218, 0.0
        %236 = vst.msk [vmem:[#allocation2 + $0x88] sm:$0xff] %vm218, 0.0
        %237 = vst.msk [vmem:[#allocation2 + $0x90] sm:$0xff] %vm218, 0.0
        %238 = vst.msk [vmem:[#allocation2 + $0x98] sm:$0xff] %vm218, 0.0
        %239 = vst.msk [vmem:[#allocation2 + $0xa0] sm:$0xff] %vm218, 0.0
        %240 = vst.msk [vmem:[#allocation2 + $0xa8] sm:$0xff] %vm218, 0.0
        %241 = vst.msk [vmem:[#allocation2 + $0xb0] sm:$0xff] %vm218, 0.0
        %242 = vst.msk [vmem:[#allocation2 + $0xb8] sm:$0xff] %vm218, 0.0
        %243 = vst.msk [vmem:[#allocation2 + $0xc0] sm:$0xff] %vm218, 0.0
        %244 = vst.msk [vmem:[#allocation2 + $0xc8] sm:$0xff] %vm218, 0.0
        %245 = vst.msk [vmem:[#allocation2 + $0xd0] sm:$0xff] %vm218, 0.0
        %246 = vst.msk [vmem:[#allocation2 + $0xd8] sm:$0xff] %vm218, 0.0
        %247 = vst.msk [vmem:[#allocation2 + $0xe0] sm:$0xff] %vm218, 0.0
        %248 = vst.msk [vmem:[#allocation2 + $0xe8] sm:$0xff] %vm218, 0.0
        %249 = vst.msk [vmem:[#allocation2 + $0xf0] sm:$0xff] %vm218, 0.0
        %250 = vst.msk [vmem:[#allocation2 + $0xf8] sm:$0xff] %vm218, 0.0
        %251 = vst.msk [vmem:[#allocation2 + $0x100] sm:$0xff] %vm218, 0.0
        %252 = vst.msk [vmem:[#allocation2 + $0x108] sm:$0xff] %vm218, 0.0
        %253 = vst.msk [vmem:[#allocation2 + $0x110] sm:$0xff] %vm218, 0.0
        %254 = vst.msk [vmem:[#allocation2 + $0x118] sm:$0xff] %vm218, 0.0
        %255 = vst.msk [vmem:[#allocation2 + $0x120] sm:$0xff] %vm218, 0.0
        %256 = vst.msk [vmem:[#allocation2 + $0x128] sm:$0xff] %vm218, 0.0
        %257 = vst.msk [vmem:[#allocation2 + $0x130] sm:$0xff] %vm218, 0.0
        %258 = vst.msk [vmem:[#allocation2 + $0x138] sm:$0xff] %vm218, 0.0
        %259 = vst.msk [vmem:[#allocation2 + $0x140] sm:$0xff] %vm218, 0.0
        %260 = vst.msk [vmem:[#allocation2 + $0x148] sm:$0xff] %vm218, 0.0
        %261 = vst.msk [vmem:[#allocation2 + $0x150] sm:$0xff] %vm218, 0.0
        %262 = vst.msk [vmem:[#allocation2 + $0x158] sm:$0xff] %vm218, 0.0
        %263 = vst.msk [vmem:[#allocation2 + $0x160] sm:$0xff] %vm218, 0.0
        %264 = vst.msk [vmem:[#allocation2 + $0x168] sm:$0xff] %vm218, 0.0
        %265 = vst.msk [vmem:[#allocation2 + $0x170] sm:$0xff] %vm218, 0.0
        %266 = vst.msk [vmem:[#allocation2 + $0x178] sm:$0xff] %vm218, 0.0
        %267 = vst.msk [vmem:[#allocation2 + $0x180] sm:$0xff] %vm218, 0.0
        %268 = vst.msk [vmem:[#allocation2 + $0x188] sm:$0xff] %vm218, 0.0
        %269 = vst.msk [vmem:[#allocation2 + $0x190] sm:$0xff] %vm218, 0.0
        %270 = vst.msk [vmem:[#allocation2 + $0x198] sm:$0xff] %vm218, 0.0
        %271 = vst.msk [vmem:[#allocation2 + $0x1a0] sm:$0xff] %vm218, 0.0
        %272 = vst.msk [vmem:[#allocation2 + $0x1a8] sm:$0xff] %vm218, 0.0
        %273 = vst.msk [vmem:[#allocation2 + $0x1b0] sm:$0xff] %vm218, 0.0
        %274 = vst.msk [vmem:[#allocation2 + $0x1b8] sm:$0xff] %vm218, 0.0
        %275 = vst.msk [vmem:[#allocation2 + $0x1c0] sm:$0xff] %vm218, 0.0
        %276 = vst.msk [vmem:[#allocation2 + $0x1c8] sm:$0xff] %vm218, 0.0
        %277 = vst.msk [vmem:[#allocation2 + $0x1d0] sm:$0xff] %vm218, 0.0
        %278 = vst.msk [vmem:[#allocation2 + $0x1d8] sm:$0xff] %vm218, 0.0
        %279 = vst.msk [vmem:[#allocation2 + $0x1e0] sm:$0xff] %vm218, 0.0
        %280 = vst.msk [vmem:[#allocation2 + $0x1e8] sm:$0xff] %vm218, 0.0
        %281 = vst.msk [vmem:[#allocation2 + $0x1f0] sm:$0xff] %vm218, 0.0
        %282 = vst.msk [vmem:[#allocation2 + $0x1f8] sm:$0xff] %vm218, 0.0
      $region32: #{_lambda_.26} parent=27 // pred_fallthru
        _
      %v283 = vld [vmem:[#allocation2] sm:$0xff]
      %v284 = vld [vmem:[#allocation2 + $0x8] sm:$0xff]
      %v285 = vld [vmem:[#allocation2 + $0x10] sm:$0xff]
      %v286 = vld [vmem:[#allocation2 + $0x18] sm:$0xff]
      %v287 = vld [vmem:[#allocation2 + $0x20] sm:$0xff]
      %v288 = vld [vmem:[#allocation2 + $0x28] sm:$0xff]
      %v289 = vld [vmem:[#allocation2 + $0x30] sm:$0xff]
      %v290 = vld [vmem:[#allocation2 + $0x38] sm:$0xff]
      %v291 = vld [vmem:[#allocation2 + $0x40] sm:$0xff]
      %v292 = vld [vmem:[#allocation2 + $0x48] sm:$0xff]
      %v293 = vld [vmem:[#allocation2 + $0x50] sm:$0xff]
      %v294 = vld [vmem:[#allocation2 + $0x58] sm:$0xff]
      %v295 = vld [vmem:[#allocation2 + $0x60] sm:$0xff]
      %v296 = vld [vmem:[#allocation2 + $0x68] sm:$0xff]
      %v297 = vld [vmem:[#allocation2 + $0x70] sm:$0xff]
      %v298 = vld [vmem:[#allocation2 + $0x78] sm:$0xff]
      %v299 = vld [vmem:[#allocation2 + $0x80] sm:$0xff]
      %v300 = vld [vmem:[#allocation2 + $0x88] sm:$0xff]
      %v301 = vld [vmem:[#allocation2 + $0x90] sm:$0xff]
      %v302 = vld [vmem:[#allocation2 + $0x98] sm:$0xff]
      %v303 = vld [vmem:[#allocation2 + $0xa0] sm:$0xff]
      %v304 = vld [vmem:[#allocation2 + $0xa8] sm:$0xff]
      %v305 = vld [vmem:[#allocation2 + $0xb0] sm:$0xff]
      %v306 = vld [vmem:[#allocation2 + $0xb8] sm:$0xff]
      %v307 = vld [vmem:[#allocation2 + $0xc0] sm:$0xff]
      %v308 = vld [vmem:[#allocation2 + $0xc8] sm:$0xff]
      %v309 = vld [vmem:[#allocation2 + $0xd0] sm:$0xff]
      %v310 = vld [vmem:[#allocation2 + $0xd8] sm:$0xff]
      %v311 = vld [vmem:[#allocation2 + $0xe0] sm:$0xff]
      %v312 = vld [vmem:[#allocation2 + $0xe8] sm:$0xff]
      %v313 = vld [vmem:[#allocation2 + $0xf0] sm:$0xff]
      %v314 = vld [vmem:[#allocation2 + $0xf8] sm:$0xff]
      %v315 = vld [vmem:[#allocation2 + $0x100] sm:$0xff]
      %v316 = vld [vmem:[#allocation2 + $0x108] sm:$0xff]
      %v317 = vld [vmem:[#allocation2 + $0x110] sm:$0xff]
      %v318 = vld [vmem:[#allocation2 + $0x118] sm:$0xff]
      %v319 = vld [vmem:[#allocation2 + $0x120] sm:$0xff]
      %v320 = vld [vmem:[#allocation2 + $0x128] sm:$0xff]
      %v321 = vld [vmem:[#allocation2 + $0x130] sm:$0xff]
      %v322 = vld [vmem:[#allocation2 + $0x138] sm:$0xff]
      %v323 = vld [vmem:[#allocation2 + $0x140] sm:$0xff]
      %v324 = vld [vmem:[#allocation2 + $0x148] sm:$0xff]
      %v325 = vld [vmem:[#allocation2 + $0x150] sm:$0xff]
      %v326 = vld [vmem:[#allocation2 + $0x158] sm:$0xff]
      %v327 = vld [vmem:[#allocation2 + $0x160] sm:$0xff]
      %v328 = vld [vmem:[#allocation2 + $0x168] sm:$0xff]
      %v329 = vld [vmem:[#allocation2 + $0x170] sm:$0xff]
      %v330 = vld [vmem:[#allocation2 + $0x178] sm:$0xff]
      %v331 = vld [vmem:[#allocation2 + $0x180] sm:$0xff]
      %v332 = vld [vmem:[#allocation2 + $0x188] sm:$0xff]
      %v333 = vld [vmem:[#allocation2 + $0x190] sm:$0xff]
      %v334 = vld [vmem:[#allocation2 + $0x198] sm:$0xff]
      %v335 = vld [vmem:[#allocation2 + $0x1a0] sm:$0xff]
      %v336 = vld [vmem:[#allocation2 + $0x1a8] sm:$0xff]
      %v337 = vld [vmem:[#allocation2 + $0x1b0] sm:$0xff]
      %v338 = vld [vmem:[#allocation2 + $0x1b8] sm:$0xff]
      %v339 = vld [vmem:[#allocation2 + $0x1c0] sm:$0xff]
      %v340 = vld [vmem:[#allocation2 + $0x1c8] sm:$0xff]
      %v341 = vld [vmem:[#allocation2 + $0x1d0] sm:$0xff]
      %v342 = vld [vmem:[#allocation2 + $0x1d8] sm:$0xff]
      %v343 = vld [vmem:[#allocation2 + $0x1e0] sm:$0xff]
      %v344 = vld [vmem:[#allocation2 + $0x1e8] sm:$0xff]
      %v345 = vld [vmem:[#allocation2 + $0x1f0] sm:$0xff]
      %v346 = vld [vmem:[#allocation2 + $0x1f8] sm:$0xff]
      %v347 = vld [vmem:[%s195] sm:$0xf]
      %v348 = vld [vmem:[%s195 + $0x4] sm:$0xf]
      %v349 = vld [vmem:[%s195 + $0x8] sm:$0xf]
      %v350 = vld [vmem:[%s195 + $0xc] sm:$0xf]
      %v351 = vld [vmem:[%s195 + $0x10] sm:$0xf]
      %v352 = vld [vmem:[%s195 + $0x14] sm:$0xf]
      %v353 = vld [vmem:[%s195 + $0x18] sm:$0xf]
      %v354 = vld [vmem:[%s195 + $0x1c] sm:$0xf]
      %v355 = vld [vmem:[%s195 + $0x20] sm:$0xf]
      %v356 = vld [vmem:[%s195 + $0x24] sm:$0xf]
      %v357 = vld [vmem:[%s195 + $0x28] sm:$0xf]
      %v358 = vld [vmem:[%s195 + $0x2c] sm:$0xf]
      %v359 = vld [vmem:[%s195 + $0x30] sm:$0xf]
      %v360 = vld [vmem:[%s195 + $0x34] sm:$0xf]
      %v361 = vld [vmem:[%s195 + $0x38] sm:$0xf]
      %v362 = vld [vmem:[%s195 + $0x3c] sm:$0xf]
      %v363 = vld [vmem:[%s195 + $0x40] sm:$0xf]
      %v364 = vld [vmem:[%s195 + $0x44] sm:$0xf]
      %v365 = vld [vmem:[%s195 + $0x48] sm:$0xf]
      %v366 = vld [vmem:[%s195 + $0x4c] sm:$0xf]
      %v367 = vld [vmem:[%s195 + $0x50] sm:$0xf]
      %v368 = vld [vmem:[%s195 + $0x54] sm:$0xf]
      %v369 = vld [vmem:[%s195 + $0x58] sm:$0xf]
      %v370 = vld [vmem:[%s195 + $0x5c] sm:$0xf]
      %v371 = vld [vmem:[%s195 + $0x60] sm:$0xf]
      %v372 = vld [vmem:[%s195 + $0x64] sm:$0xf]
      %v373 = vld [vmem:[%s195 + $0x68] sm:$0xf]
      %v374 = vld [vmem:[%s195 + $0x6c] sm:$0xf]
      %v375 = vld [vmem:[%s195 + $0x70] sm:$0xf]
      %v376 = vld [vmem:[%s195 + $0x74] sm:$0xf]
      %v377 = vld [vmem:[%s195 + $0x78] sm:$0xf]
      %v378 = vld [vmem:[%s195 + $0x7c] sm:$0xf]
      %v379 = vld [vmem:[%s195 + $0x80] sm:$0xf]
      %v380 = vld [vmem:[%s195 + $0x84] sm:$0xf]
      %v381 = vld [vmem:[%s195 + $0x88] sm:$0xf]
      %v382 = vld [vmem:[%s195 + $0x8c] sm:$0xf]
      %v383 = vld [vmem:[%s195 + $0x90] sm:$0xf]
      %v384 = vld [vmem:[%s195 + $0x94] sm:$0xf]
      %v385 = vld [vmem:[%s195 + $0x98] sm:$0xf]
      %v386 = vld [vmem:[%s195 + $0x9c] sm:$0xf]
      %v387 = vld [vmem:[%s195 + $0xa0] sm:$0xf]
      %v388 = vld [vmem:[%s195 + $0xa4] sm:$0xf]
      %v389 = vld [vmem:[%s195 + $0xa8] sm:$0xf]
      %v390 = vld [vmem:[%s195 + $0xac] sm:$0xf]
      %v391 = vld [vmem:[%s195 + $0xb0] sm:$0xf]
      %v392 = vld [vmem:[%s195 + $0xb4] sm:$0xf]
      %v393 = vld [vmem:[%s195 + $0xb8] sm:$0xf]
      %v394 = vld [vmem:[%s195 + $0xbc] sm:$0xf]
      %v395 = vld [vmem:[%s195 + $0xc0] sm:$0xf]
      %v396 = vld [vmem:[%s195 + $0xc4] sm:$0xf]
      %v397 = vld [vmem:[%s195 + $0xc8] sm:$0xf]
      %v398 = vld [vmem:[%s195 + $0xcc] sm:$0xf]
      %v399 = vld [vmem:[%s195 + $0xd0] sm:$0xf]
      %v400 = vld [vmem:[%s195 + $0xd4] sm:$0xf]
      %v401 = vld [vmem:[%s195 + $0xd8] sm:$0xf]
      %v402 = vld [vmem:[%s195 + $0xdc] sm:$0xf]
      %v403 = vld [vmem:[%s195 + $0xe0] sm:$0xf]
      %v404 = vld [vmem:[%s195 + $0xe4] sm:$0xf]
      %v405 = vld [vmem:[%s195 + $0xe8] sm:$0xf]
      %v406 = vld [vmem:[%s195 + $0xec] sm:$0xf]
      %v407 = vld [vmem:[%s195 + $0xf0] sm:$0xf]
      %v408 = vld [vmem:[%s195 + $0xf4] sm:$0xf]
      %v409 = vld [vmem:[%s195 + $0xf8] sm:$0xf]
      %v410 = vld [vmem:[%s195 + $0xfc] sm:$0xf]
      %v411 = vld [vmem:[%s203] sm:$0xf]
      %v476 = vunpack.c.l.b16 %v347
      %v477 = vunpack.c.l.b16 %v348
      %v478 = vunpack.c.l.b16 %v349
      %v479 = vunpack.c.l.b16 %v350
      %v480 = vunpack.c.l.b16 %v351
      %v481 = vunpack.c.l.b16 %v352
      %v482 = vunpack.c.l.b16 %v353
      %v483 = vunpack.c.l.b16 %v354
      %v484 = vunpack.c.l.b16 %v355
      %v485 = vunpack.c.l.b16 %v356
      %v486 = vunpack.c.l.b16 %v357
      %v487 = vunpack.c.l.b16 %v358
      %v488 = vunpack.c.l.b16 %v359
      %v489 = vunpack.c.l.b16 %v360
      %v490 = vunpack.c.l.b16 %v361
      %v491 = vunpack.c.l.b16 %v362
      %v492 = vunpack.c.l.b16 %v363
      %v493 = vunpack.c.l.b16 %v364
      %v494 = vunpack.c.l.b16 %v365
      %v495 = vunpack.c.l.b16 %v366
      %v496 = vunpack.c.l.b16 %v367
      %v497 = vunpack.c.l.b16 %v368
      %v498 = vunpack.c.l.b16 %v369
      %v499 = vunpack.c.l.b16 %v370
      %v500 = vunpack.c.l.b16 %v371
      %v501 = vunpack.c.l.b16 %v372
      %v502 = vunpack.c.l.b16 %v373
      %v503 = vunpack.c.l.b16 %v374
      %v504 = vunpack.c.l.b16 %v375
      %v505 = vunpack.c.l.b16 %v376
      %v506 = vunpack.c.l.b16 %v377
      %v507 = vunpack.c.l.b16 %v378
      %v508 = vunpack.c.l.b16 %v379
      %v509 = vunpack.c.l.b16 %v380
      %v510 = vunpack.c.l.b16 %v381
      %v511 = vunpack.c.l.b16 %v382
      %v512 = vunpack.c.l.b16 %v383
      %v513 = vunpack.c.l.b16 %v384
      %v514 = vunpack.c.l.b16 %v385
      %v515 = vunpack.c.l.b16 %v386
      %v516 = vunpack.c.l.b16 %v387
      %v517 = vunpack.c.l.b16 %v388
      %v518 = vunpack.c.l.b16 %v389
      %v519 = vunpack.c.l.b16 %v390
      %v520 = vunpack.c.l.b16 %v391
      %v521 = vunpack.c.l.b16 %v392
      %v522 = vunpack.c.l.b16 %v393
      %v523 = vunpack.c.l.b16 %v394
      %v524 = vunpack.c.l.b16 %v395
      %v525 = vunpack.c.l.b16 %v396
      %v526 = vunpack.c.l.b16 %v397
      %v527 = vunpack.c.l.b16 %v398
      %v528 = vunpack.c.l.b16 %v399
      %v529 = vunpack.c.l.b16 %v400
      %v530 = vunpack.c.l.b16 %v401
      %v531 = vunpack.c.l.b16 %v402
      %v532 = vunpack.c.l.b16 %v403
      %v533 = vunpack.c.l.b16 %v404
      %v534 = vunpack.c.l.b16 %v405
      %v535 = vunpack.c.l.b16 %v406
      %v536 = vunpack.c.l.b16 %v407
      %v537 = vunpack.c.l.b16 %v408
      %v538 = vunpack.c.l.b16 %v409
      %v539 = vunpack.c.l.b16 %v410
      %v540 = vpack.c.b16 %v477, %v476
      %v541 = vpack.c.b16 %v479, %v478
      %v542 = vpack.c.b16 %v481, %v480
      %v543 = vpack.c.b16 %v483, %v482
      %v544 = vpack.c.b16 %v485, %v484
      %v545 = vpack.c.b16 %v487, %v486
      %v546 = vpack.c.b16 %v489, %v488
      %v547 = vpack.c.b16 %v491, %v490
      %v548 = vpack.c.b16 %v493, %v492
      %v549 = vpack.c.b16 %v495, %v494
      %v550 = vpack.c.b16 %v497, %v496
      %v551 = vpack.c.b16 %v499, %v498
      %v552 = vpack.c.b16 %v501, %v500
      %v553 = vpack.c.b16 %v503, %v502
      %v554 = vpack.c.b16 %v505, %v504
      %v555 = vpack.c.b16 %v507, %v506
      %v556 = vpack.c.b16 %v509, %v508
      %v557 = vpack.c.b16 %v511, %v510
      %v558 = vpack.c.b16 %v513, %v512
      %v559 = vpack.c.b16 %v515, %v514
      %v560 = vpack.c.b16 %v517, %v516
      %v561 = vpack.c.b16 %v519, %v518
      %v562 = vpack.c.b16 %v521, %v520
      %v563 = vpack.c.b16 %v523, %v522
      %v564 = vpack.c.b16 %v525, %v524
      %v565 = vpack.c.b16 %v527, %v526
      %v566 = vpack.c.b16 %v529, %v528
      %v567 = vpack.c.b16 %v531, %v530
      %v568 = vpack.c.b16 %v533, %v532
      %v569 = vpack.c.b16 %v535, %v534
      %v570 = vpack.c.b16 %v537, %v536
      %v571 = vpack.c.b16 %v539, %v538
      %vm572 = vcmask 64512
      %v574 = vsel %vm572, %v540, 0
      %v577 = vsel %vm572, %v541, 0
      %v580 = vsel %vm572, %v542, 0
      %v583 = vsel %vm572, %v543, 0
      %v586 = vsel %vm572, %v544, 0
      %v589 = vsel %vm572, %v545, 0
      %v592 = vsel %vm572, %v546, 0
      %v595 = vsel %vm572, %v547, 0
      %v598 = vsel %vm572, %v548, 0
      %v601 = vsel %vm572, %v549, 0
      %v604 = vsel %vm572, %v550, 0
      %v607 = vsel %vm572, %v551, 0
      %v610 = vsel %vm572, %v552, 0
      %v613 = vsel %vm572, %v553, 0
      %v616 = vsel %vm572, %v554, 0
      %v619 = vsel %vm572, %v555, 0
      %v622 = vsel %vm572, %v556, 0
      %v625 = vsel %vm572, %v557, 0
      %v628 = vsel %vm572, %v558, 0
      %v631 = vsel %vm572, %v559, 0
      %v634 = vsel %vm572, %v560, 0
      %v637 = vsel %vm572, %v561, 0
      %v640 = vsel %vm572, %v562, 0
      %v643 = vsel %vm572, %v563, 0
      %v646 = vsel %vm572, %v564, 0
      %v649 = vsel %vm572, %v565, 0
      %v652 = vsel %vm572, %v566, 0
      %v655 = vsel %vm572, %v567, 0
      %v658 = vsel %vm572, %v568, 0
      %v661 = vsel %vm572, %v569, 0
      %v664 = vsel %vm572, %v570, 0
      %v667 = vsel %vm572, %v571, 0
      %vm669 = vcmask 1043456
      %v671 = vsel %vm669, %v411, 0
      %673 = vmatpush.bf16.msra.mxu0 0
      %674 = vmatpush.bf16.msra.mxu0 0
      %675 = vmatpush.bf16.msra.mxu0 0
      %676 = vmatpush.bf16.msra.mxu0 0
      %677 = vmatpush.bf16.msra.mxu0 0
      %678 = vmatpush.bf16.msra.mxu0 0
      %679 = vmatpush.bf16.msra.mxu0 0
      %680 = vmatpush.bf16.msra.mxu0 %v671
      %681 = vmatmul.bf16.gmra.mxu0 %v574
      %v682 = vpop.f32.mrf.mxu0
      %v683 = vadd.f32 0.0, %v682
      %v684 = vpop.f32.mrf.mxu0
      %v685 = vadd.f32 0.0, %v684
      %686 = vmatmul.bf16.gmra.mxu0 %v577
      %v687 = vpop.f32.mrf.mxu0
      %v688 = vadd.f32 0.0, %v687
      %v689 = vpop.f32.mrf.mxu0
      %v690 = vadd.f32 0.0, %v689
      %691 = vmatmul.bf16.gmra.mxu0 %v580
      %v692 = vpop.f32.mrf.mxu0
      %v693 = vadd.f32 0.0, %v692
      %v694 = vpop.f32.mrf.mxu0
      %v695 = vadd.f32 0.0, %v694
      %696 = vmatmul.bf16.gmra.mxu0 %v583
      %v697 = vpop.f32.mrf.mxu0
      %v698 = vadd.f32 0.0, %v697
      %v699 = vpop.f32.mrf.mxu0
      %v700 = vadd.f32 0.0, %v699
      %701 = vmatmul.bf16.gmra.mxu0 %v586
      %v702 = vpop.f32.mrf.mxu0
      %v703 = vadd.f32 0.0, %v702
      %v704 = vpop.f32.mrf.mxu0
      %v705 = vadd.f32 0.0, %v704
      %706 = vmatmul.bf16.gmra.mxu0 %v589
      %v707 = vpop.f32.mrf.mxu0
      %v708 = vadd.f32 0.0, %v707
      %v709 = vpop.f32.mrf.mxu0
      %v710 = vadd.f32 0.0, %v709
      %711 = vmatmul.bf16.gmra.mxu0 %v592
      %v712 = vpop.f32.mrf.mxu0
      %v713 = vadd.f32 0.0, %v712
      %v714 = vpop.f32.mrf.mxu0
      %v715 = vadd.f32 0.0, %v714
      %716 = vmatmul.bf16.gmra.mxu0 %v595
      %v717 = vpop.f32.mrf.mxu0
      %v718 = vadd.f32 0.0, %v717
      %v719 = vpop.f32.mrf.mxu0
      %v720 = vadd.f32 0.0, %v719
      %721 = vmatmul.bf16.gmra.mxu0 %v598
      %v722 = vpop.f32.mrf.mxu0
      %v723 = vadd.f32 0.0, %v722
      %v724 = vpop.f32.mrf.mxu0
      %v725 = vadd.f32 0.0, %v724
      %726 = vmatmul.bf16.gmra.mxu0 %v601
      %v727 = vpop.f32.mrf.mxu0
      %v728 = vadd.f32 0.0, %v727
      %v729 = vpop.f32.mrf.mxu0
      %v730 = vadd.f32 0.0, %v729
      %731 = vmatmul.bf16.gmra.mxu0 %v604
      %v732 = vpop.f32.mrf.mxu0
      %v733 = vadd.f32 0.0, %v732
      %v734 = vpop.f32.mrf.mxu0
      %v735 = vadd.f32 0.0, %v734
      %736 = vmatmul.bf16.gmra.mxu0 %v607
      %v737 = vpop.f32.mrf.mxu0
      %v738 = vadd.f32 0.0, %v737
      %v739 = vpop.f32.mrf.mxu0
      %v740 = vadd.f32 0.0, %v739
      %741 = vmatmul.bf16.gmra.mxu0 %v610
      %v742 = vpop.f32.mrf.mxu0
      %v743 = vadd.f32 0.0, %v742
      %v744 = vpop.f32.mrf.mxu0
      %v745 = vadd.f32 0.0, %v744
      %746 = vmatmul.bf16.gmra.mxu0 %v613
      %v747 = vpop.f32.mrf.mxu0
      %v748 = vadd.f32 0.0, %v747
      %v749 = vpop.f32.mrf.mxu0
      %v750 = vadd.f32 0.0, %v749
      %751 = vmatmul.bf16.gmra.mxu0 %v616
      %v752 = vpop.f32.mrf.mxu0
      %v753 = vadd.f32 0.0, %v752
      %v754 = vpop.f32.mrf.mxu0
      %v755 = vadd.f32 0.0, %v754
      %756 = vmatmul.bf16.gmra.mxu0 %v619
      %v757 = vpop.f32.mrf.mxu0
      %v758 = vadd.f32 0.0, %v757
      %v759 = vpop.f32.mrf.mxu0
      %v760 = vadd.f32 0.0, %v759
      %761 = vmatmul.bf16.gmra.mxu0 %v622
      %v762 = vpop.f32.mrf.mxu0
      %v763 = vadd.f32 0.0, %v762
      %v764 = vpop.f32.mrf.mxu0
      %v765 = vadd.f32 0.0, %v764
      %766 = vmatmul.bf16.gmra.mxu0 %v625
      %v767 = vpop.f32.mrf.mxu0
      %v768 = vadd.f32 0.0, %v767
      %v769 = vpop.f32.mrf.mxu0
      %v770 = vadd.f32 0.0, %v769
      %771 = vmatmul.bf16.gmra.mxu0 %v628
      %v772 = vpop.f32.mrf.mxu0
      %v773 = vadd.f32 0.0, %v772
      %v774 = vpop.f32.mrf.mxu0
      %v775 = vadd.f32 0.0, %v774
      %776 = vmatmul.bf16.gmra.mxu0 %v631
      %v777 = vpop.f32.mrf.mxu0
      %v778 = vadd.f32 0.0, %v777
      %v779 = vpop.f32.mrf.mxu0
      %v780 = vadd.f32 0.0, %v779
      %781 = vmatmul.bf16.gmra.mxu0 %v634
      %v782 = vpop.f32.mrf.mxu0
      %v783 = vadd.f32 0.0, %v782
      %v784 = vpop.f32.mrf.mxu0
      %v785 = vadd.f32 0.0, %v784
      %786 = vmatmul.bf16.gmra.mxu0 %v637
      %v787 = vpop.f32.mrf.mxu0
      %v788 = vadd.f32 0.0, %v787
      %v789 = vpop.f32.mrf.mxu0
      %v790 = vadd.f32 0.0, %v789
      %791 = vmatmul.bf16.gmra.mxu0 %v640
      %v792 = vpop.f32.mrf.mxu0
      %v793 = vadd.f32 0.0, %v792
      %v794 = vpop.f32.mrf.mxu0
      %v795 = vadd.f32 0.0, %v794
      %796 = vmatmul.bf16.gmra.mxu0 %v643
      %v797 = vpop.f32.mrf.mxu0
      %v798 = vadd.f32 0.0, %v797
      %v799 = vpop.f32.mrf.mxu0
      %v800 = vadd.f32 0.0, %v799
      %801 = vmatmul.bf16.gmra.mxu0 %v646
      %v802 = vpop.f32.mrf.mxu0
      %v803 = vadd.f32 0.0, %v802
      %v804 = vpop.f32.mrf.mxu0
      %v805 = vadd.f32 0.0, %v804
      %806 = vmatmul.bf16.gmra.mxu0 %v649
      %v807 = vpop.f32.mrf.mxu0
      %v808 = vadd.f32 0.0, %v807
      %v809 = vpop.f32.mrf.mxu0
      %v810 = vadd.f32 0.0, %v809
      %811 = vmatmul.bf16.gmra.mxu0 %v652
      %v812 = vpop.f32.mrf.mxu0
      %v813 = vadd.f32 0.0, %v812
      %v814 = vpop.f32.mrf.mxu0
      %v815 = vadd.f32 0.0, %v814
      %816 = vmatmul.bf16.gmra.mxu0 %v655
      %v817 = vpop.f32.mrf.mxu0
      %v818 = vadd.f32 0.0, %v817
      %v819 = vpop.f32.mrf.mxu0
      %v820 = vadd.f32 0.0, %v819
      %821 = vmatmul.bf16.gmra.mxu0 %v658
      %v822 = vpop.f32.mrf.mxu0
      %v823 = vadd.f32 0.0, %v822
      %v824 = vpop.f32.mrf.mxu0
      %v825 = vadd.f32 0.0, %v824
      %826 = vmatmul.bf16.gmra.mxu0 %v661
      %v827 = vpop.f32.mrf.mxu0
      %v828 = vadd.f32 0.0, %v827
      %v829 = vpop.f32.mrf.mxu0
      %v830 = vadd.f32 0.0, %v829
      %831 = vmatmul.bf16.gmra.mxu0 %v664
      %v832 = vpop.f32.mrf.mxu0
      %v833 = vadd.f32 0.0, %v832
      %v834 = vpop.f32.mrf.mxu0
      %v835 = vadd.f32 0.0, %v834
      %836 = vmatmul.bf16.gmra.mxu0 %v667
      %v837 = vpop.f32.mrf.mxu0
      %v838 = vadd.f32 0.0, %v837
      %v839 = vpop.f32.mrf.mxu0
      %v840 = vadd.f32 0.0, %v839
      %841 = vdwg.mxu0
      %v842 = vadd.f32 %v283, %v683
      %v843 = vadd.f32 %v284, %v685
      %v844 = vadd.f32 %v285, %v688
      %v845 = vadd.f32 %v286, %v690
      %v846 = vadd.f32 %v287, %v693
      %v847 = vadd.f32 %v288, %v695
      %v848 = vadd.f32 %v289, %v698
      %v849 = vadd.f32 %v290, %v700
      %v850 = vadd.f32 %v291, %v703
      %v851 = vadd.f32 %v292, %v705
      %v852 = vadd.f32 %v293, %v708
      %v853 = vadd.f32 %v294, %v710
      %v854 = vadd.f32 %v295, %v713
      %v855 = vadd.f32 %v296, %v715
      %v856 = vadd.f32 %v297, %v718
      %v857 = vadd.f32 %v298, %v720
      %v858 = vadd.f32 %v299, %v723
      %v859 = vadd.f32 %v300, %v725
      %v860 = vadd.f32 %v301, %v728
      %v861 = vadd.f32 %v302, %v730
      %v862 = vadd.f32 %v303, %v733
      %v863 = vadd.f32 %v304, %v735
      %v864 = vadd.f32 %v305, %v738
      %v865 = vadd.f32 %v306, %v740
      %v866 = vadd.f32 %v307, %v743
      %v867 = vadd.f32 %v308, %v745
      %v868 = vadd.f32 %v309, %v748
      %v869 = vadd.f32 %v310, %v750
      %v870 = vadd.f32 %v311, %v753
      %v871 = vadd.f32 %v312, %v755
      %v872 = vadd.f32 %v313, %v758
      %v873 = vadd.f32 %v314, %v760
      %v874 = vadd.f32 %v315, %v763
      %v875 = vadd.f32 %v316, %v765
      %v876 = vadd.f32 %v317, %v768
      %v877 = vadd.f32 %v318, %v770
      %v878 = vadd.f32 %v319, %v773
      %v879 = vadd.f32 %v320, %v775
      %v880 = vadd.f32 %v321, %v778
      %v881 = vadd.f32 %v322, %v780
      %v882 = vadd.f32 %v323, %v783
      %v883 = vadd.f32 %v324, %v785
      %v884 = vadd.f32 %v325, %v788
      %v885 = vadd.f32 %v326, %v790
      %v886 = vadd.f32 %v327, %v793
      %v887 = vadd.f32 %v328, %v795
      %v888 = vadd.f32 %v329, %v798
      %v889 = vadd.f32 %v330, %v800
      %v890 = vadd.f32 %v331, %v803
      %v891 = vadd.f32 %v332, %v805
      %v892 = vadd.f32 %v333, %v808
      %v893 = vadd.f32 %v334, %v810
      %v894 = vadd.f32 %v335, %v813
      %v895 = vadd.f32 %v336, %v815
      %v896 = vadd.f32 %v337, %v818
      %v897 = vadd.f32 %v338, %v820
      %v898 = vadd.f32 %v339, %v823
      %v899 = vadd.f32 %v340, %v825
      %v900 = vadd.f32 %v341, %v828
      %v901 = vadd.f32 %v342, %v830
      %v902 = vadd.f32 %v343, %v833
      %v903 = vadd.f32 %v344, %v835
      %v904 = vadd.f32 %v345, %v838
      %v905 = vadd.f32 %v346, %v840
      %vm906 = vcmask 392192
      %907 = vst.msk [vmem:[#allocation2] sm:$0xff] %vm906, %v842
      %908 = vst.msk [vmem:[#allocation2 + $0x8] sm:$0xff] %vm906, %v843
      %909 = vst.msk [vmem:[#allocation2 + $0x10] sm:$0xff] %vm906, %v844
      %910 = vst.msk [vmem:[#allocation2 + $0x18] sm:$0xff] %vm906, %v845
      %911 = vst.msk [vmem:[#allocation2 + $0x20] sm:$0xff] %vm906, %v846
      %912 = vst.msk [vmem:[#allocation2 + $0x28] sm:$0xff] %vm906, %v847
      %913 = vst.msk [vmem:[#allocation2 + $0x30] sm:$0xff] %vm906, %v848
      %914 = vst.msk [vmem:[#allocation2 + $0x38] sm:$0xff] %vm906, %v849
      %915 = vst.msk [vmem:[#allocation2 + $0x40] sm:$0xff] %vm906, %v850
      %916 = vst.msk [vmem:[#allocation2 + $0x48] sm:$0xff] %vm906, %v851
      %917 = vst.msk [vmem:[#allocation2 + $0x50] sm:$0xff] %vm906, %v852
      %918 = vst.msk [vmem:[#allocation2 + $0x58] sm:$0xff] %vm906, %v853
      %919 = vst.msk [vmem:[#allocation2 + $0x60] sm:$0xff] %vm906, %v854
      %920 = vst.msk [vmem:[#allocation2 + $0x68] sm:$0xff] %vm906, %v855
      %921 = vst.msk [vmem:[#allocation2 + $0x70] sm:$0xff] %vm906, %v856
      %922 = vst.msk [vmem:[#allocation2 + $0x78] sm:$0xff] %vm906, %v857
      %923 = vst.msk [vmem:[#allocation2 + $0x80] sm:$0xff] %vm906, %v858
      %924 = vst.msk [vmem:[#allocation2 + $0x88] sm:$0xff] %vm906, %v859
      %925 = vst.msk [vmem:[#allocation2 + $0x90] sm:$0xff] %vm906, %v860
      %926 = vst.msk [vmem:[#allocation2 + $0x98] sm:$0xff] %vm906, %v861
      %927 = vst.msk [vmem:[#allocation2 + $0xa0] sm:$0xff] %vm906, %v862
      %928 = vst.msk [vmem:[#allocation2 + $0xa8] sm:$0xff] %vm906, %v863
      %929 = vst.msk [vmem:[#allocation2 + $0xb0] sm:$0xff] %vm906, %v864
      %930 = vst.msk [vmem:[#allocation2 + $0xb8] sm:$0xff] %vm906, %v865
      %931 = vst.msk [vmem:[#allocation2 + $0xc0] sm:$0xff] %vm906, %v866
      %932 = vst.msk [vmem:[#allocation2 + $0xc8] sm:$0xff] %vm906, %v867
      %933 = vst.msk [vmem:[#allocation2 + $0xd0] sm:$0xff] %vm906, %v868
      %934 = vst.msk [vmem:[#allocation2 + $0xd8] sm:$0xff] %vm906, %v869
      %935 = vst.msk [vmem:[#allocation2 + $0xe0] sm:$0xff] %vm906, %v870
      %936 = vst.msk [vmem:[#allocation2 + $0xe8] sm:$0xff] %vm906, %v871
      %937 = vst.msk [vmem:[#allocation2 + $0xf0] sm:$0xff] %vm906, %v872
      %938 = vst.msk [vmem:[#allocation2 + $0xf8] sm:$0xff] %vm906, %v873
      %939 = vst.msk [vmem:[#allocation2 + $0x100] sm:$0xff] %vm906, %v874
      %940 = vst.msk [vmem:[#allocation2 + $0x108] sm:$0xff] %vm906, %v875
      %941 = vst.msk [vmem:[#allocation2 + $0x110] sm:$0xff] %vm906, %v876
      %942 = vst.msk [vmem:[#allocation2 + $0x118] sm:$0xff] %vm906, %v877
      %943 = vst.msk [vmem:[#allocation2 + $0x120] sm:$0xff] %vm906, %v878
      %944 = vst.msk [vmem:[#allocation2 + $0x128] sm:$0xff] %vm906, %v879
      %945 = vst.msk [vmem:[#allocation2 + $0x130] sm:$0xff] %vm906, %v880
      %946 = vst.msk [vmem:[#allocation2 + $0x138] sm:$0xff] %vm906, %v881
      %947 = vst.msk [vmem:[#allocation2 + $0x140] sm:$0xff] %vm906, %v882
      %948 = vst.msk [vmem:[#allocation2 + $0x148] sm:$0xff] %vm906, %v883
      %949 = vst.msk [vmem:[#allocation2 + $0x150] sm:$0xff] %vm906, %v884
      %950 = vst.msk [vmem:[#allocation2 + $0x158] sm:$0xff] %vm906, %v885
      %951 = vst.msk [vmem:[#allocation2 + $0x160] sm:$0xff] %vm906, %v886
      %952 = vst.msk [vmem:[#allocation2 + $0x168] sm:$0xff] %vm906, %v887
      %953 = vst.msk [vmem:[#allocation2 + $0x170] sm:$0xff] %vm906, %v888
      %954 = vst.msk [vmem:[#allocation2 + $0x178] sm:$0xff] %vm906, %v889
      %955 = vst.msk [vmem:[#allocation2 + $0x180] sm:$0xff] %vm906, %v890
      %956 = vst.msk [vmem:[#allocation2 + $0x188] sm:$0xff] %vm906, %v891
      %957 = vst.msk [vmem:[#allocation2 + $0x190] sm:$0xff] %vm906, %v892
      %958 = vst.msk [vmem:[#allocation2 + $0x198] sm:$0xff] %vm906, %v893
      %959 = vst.msk [vmem:[#allocation2 + $0x1a0] sm:$0xff] %vm906, %v894
      %960 = vst.msk [vmem:[#allocation2 + $0x1a8] sm:$0xff] %vm906, %v895
      %961 = vst.msk [vmem:[#allocation2 + $0x1b0] sm:$0xff] %vm906, %v896
      %962 = vst.msk [vmem:[#allocation2 + $0x1b8] sm:$0xff] %vm906, %v897
      %963 = vst.msk [vmem:[#allocation2 + $0x1c0] sm:$0xff] %vm906, %v898
      %964 = vst.msk [vmem:[#allocation2 + $0x1c8] sm:$0xff] %vm906, %v899
      %965 = vst.msk [vmem:[#allocation2 + $0x1d0] sm:$0xff] %vm906, %v900
      %966 = vst.msk [vmem:[#allocation2 + $0x1d8] sm:$0xff] %vm906, %v901
      %967 = vst.msk [vmem:[#allocation2 + $0x1e0] sm:$0xff] %vm906, %v902
      %968 = vst.msk [vmem:[#allocation2 + $0x1e8] sm:$0xff] %vm906, %v903
      %969 = vst.msk [vmem:[#allocation2 + $0x1f0] sm:$0xff] %vm906, %v904
      %970 = vst.msk [vmem:[#allocation2 + $0x1f8] sm:$0xff] %vm906, %v905
      %v971 = vld [vmem:[#allocation2] sm:$0xff]
      %v972 = vld [vmem:[#allocation2 + $0x8] sm:$0xff]
      %v973 = vld [vmem:[#allocation2 + $0x10] sm:$0xff]
      %v974 = vld [vmem:[#allocation2 + $0x18] sm:$0xff]
      %v975 = vld [vmem:[#allocation2 + $0x20] sm:$0xff]
      %v976 = vld [vmem:[#allocation2 + $0x28] sm:$0xff]
      %v977 = vld [vmem:[#allocation2 + $0x30] sm:$0xff]
      %v978 = vld [vmem:[#allocation2 + $0x38] sm:$0xff]
      %v979 = vld [vmem:[#allocation2 + $0x40] sm:$0xff]
      %v980 = vld [vmem:[#allocation2 + $0x48] sm:$0xff]
      %v981 = vld [vmem:[#allocation2 + $0x50] sm:$0xff]
      %v982 = vld [vmem:[#allocation2 + $0x58] sm:$0xff]
      %v983 = vld [vmem:[#allocation2 + $0x60] sm:$0xff]
      %v984 = vld [vmem:[#allocation2 + $0x68] sm:$0xff]
      %v985 = vld [vmem:[#allocation2 + $0x70] sm:$0xff]
      %v986 = vld [vmem:[#allocation2 + $0x78] sm:$0xff]
      %v987 = vld [vmem:[#allocation2 + $0x80] sm:$0xff]
      %v988 = vld [vmem:[#allocation2 + $0x88] sm:$0xff]
      %v989 = vld [vmem:[#allocation2 + $0x90] sm:$0xff]
      %v990 = vld [vmem:[#allocation2 + $0x98] sm:$0xff]
      %v991 = vld [vmem:[#allocation2 + $0xa0] sm:$0xff]
      %v992 = vld [vmem:[#allocation2 + $0xa8] sm:$0xff]
      %v993 = vld [vmem:[#allocation2 + $0xb0] sm:$0xff]
      %v994 = vld [vmem:[#allocation2 + $0xb8] sm:$0xff]
      %v995 = vld [vmem:[#allocation2 + $0xc0] sm:$0xff]
      %v996 = vld [vmem:[#allocation2 + $0xc8] sm:$0xff]
      %v997 = vld [vmem:[#allocation2 + $0xd0] sm:$0xff]
      %v998 = vld [vmem:[#allocation2 + $0xd8] sm:$0xff]
      %v999 = vld [vmem:[#allocation2 + $0xe0] sm:$0xff]
      %v1000 = vld [vmem:[#allocation2 + $0xe8] sm:$0xff]
      %v1001 = vld [vmem:[#allocation2 + $0xf0] sm:$0xff]
      %v1002 = vld [vmem:[#allocation2 + $0xf8] sm:$0xff]
      %v1003 = vld [vmem:[#allocation2 + $0x100] sm:$0xff]
      %v1004 = vld [vmem:[#allocation2 + $0x108] sm:$0xff]
      %v1005 = vld [vmem:[#allocation2 + $0x110] sm:$0xff]
      %v1006 = vld [vmem:[#allocation2 + $0x118] sm:$0xff]
      %v1007 = vld [vmem:[#allocation2 + $0x120] sm:$0xff]
      %v1008 = vld [vmem:[#allocation2 + $0x128] sm:$0xff]
      %v1009 = vld [vmem:[#allocation2 + $0x130] sm:$0xff]
      %v1010 = vld [vmem:[#allocation2 + $0x138] sm:$0xff]
      %v1011 = vld [vmem:[#allocation2 + $0x140] sm:$0xff]
      %v1012 = vld [vmem:[#allocation2 + $0x148] sm:$0xff]
      %v1013 = vld [vmem:[#allocation2 + $0x150] sm:$0xff]
      %v1014 = vld [vmem:[#allocation2 + $0x158] sm:$0xff]
      %v1015 = vld [vmem:[#allocation2 + $0x160] sm:$0xff]
      %v1016 = vld [vmem:[#allocation2 + $0x168] sm:$0xff]
      %v1017 = vld [vmem:[#allocation2 + $0x170] sm:$0xff]
      %v1018 = vld [vmem:[#allocation2 + $0x178] sm:$0xff]
      %v1019 = vld [vmem:[#allocation2 + $0x180] sm:$0xff]
      %v1020 = vld [vmem:[#allocation2 + $0x188] sm:$0xff]
      %v1021 = vld [vmem:[#allocation2 + $0x190] sm:$0xff]
      %v1022 = vld [vmem:[#allocation2 + $0x198] sm:$0xff]
      %v1023 = vld [vmem:[#allocation2 + $0x1a0] sm:$0xff]
      %v1024 = vld [vmem:[#allocation2 + $0x1a8] sm:$0xff]
      %v1025 = vld [vmem:[#allocation2 + $0x1b0] sm:$0xff]
      %v1026 = vld [vmem:[#allocation2 + $0x1b8] sm:$0xff]
      %v1027 = vld [vmem:[#allocation2 + $0x1c0] sm:$0xff]
      %v1028 = vld [vmem:[#allocation2 + $0x1c8] sm:$0xff]
      %v1029 = vld [vmem:[#allocation2 + $0x1d0] sm:$0xff]
      %v1030 = vld [vmem:[#allocation2 + $0x1d8] sm:$0xff]
      %v1031 = vld [vmem:[#allocation2 + $0x1e0] sm:$0xff]
      %v1032 = vld [vmem:[#allocation2 + $0x1e8] sm:$0xff]
      %v1033 = vld [vmem:[#allocation2 + $0x1f0] sm:$0xff]
      %v1034 = vld [vmem:[#allocation2 + $0x1f8] sm:$0xff]
      %1035 = vst.msk [vmem:[%s211] sm:$0xff] %vm906, %v971
      %1036 = vst.msk [vmem:[%s211 + $0x8] sm:$0xff] %vm906, %v972
      %1037 = vst.msk [vmem:[%s211 + $0x10] sm:$0xff] %vm906, %v973
      %1038 = vst.msk [vmem:[%s211 + $0x18] sm:$0xff] %vm906, %v974
      %1039 = vst.msk [vmem:[%s211 + $0x20] sm:$0xff] %vm906, %v975
      %1040 = vst.msk [vmem:[%s211 + $0x28] sm:$0xff] %vm906, %v976
      %1041 = vst.msk [vmem:[%s211 + $0x30] sm:$0xff] %vm906, %v977
      %1042 = vst.msk [vmem:[%s211 + $0x38] sm:$0xff] %vm906, %v978
      %1043 = vst.msk [vmem:[%s211 + $0x40] sm:$0xff] %vm906, %v979
      %1044 = vst.msk [vmem:[%s211 + $0x48] sm:$0xff] %vm906, %v980
      %1045 = vst.msk [vmem:[%s211 + $0x50] sm:$0xff] %vm906, %v981
      %1046 = vst.msk [vmem:[%s211 + $0x58] sm:$0xff] %vm906, %v982
      %1047 = vst.msk [vmem:[%s211 + $0x60] sm:$0xff] %vm906, %v983
      %1048 = vst.msk [vmem:[%s211 + $0x68] sm:$0xff] %vm906, %v984
      %1049 = vst.msk [vmem:[%s211 + $0x70] sm:$0xff] %vm906, %v985
      %1050 = vst.msk [vmem:[%s211 + $0x78] sm:$0xff] %vm906, %v986
      %1051 = vst.msk [vmem:[%s211 + $0x80] sm:$0xff] %vm906, %v987
      %1052 = vst.msk [vmem:[%s211 + $0x88] sm:$0xff] %vm906, %v988
      %1053 = vst.msk [vmem:[%s211 + $0x90] sm:$0xff] %vm906, %v989
      %1054 = vst.msk [vmem:[%s211 + $0x98] sm:$0xff] %vm906, %v990
      %1055 = vst.msk [vmem:[%s211 + $0xa0] sm:$0xff] %vm906, %v991
      %1056 = vst.msk [vmem:[%s211 + $0xa8] sm:$0xff] %vm906, %v992
      %1057 = vst.msk [vmem:[%s211 + $0xb0] sm:$0xff] %vm906, %v993
      %1058 = vst.msk [vmem:[%s211 + $0xb8] sm:$0xff] %vm906, %v994
      %1059 = vst.msk [vmem:[%s211 + $0xc0] sm:$0xff] %vm906, %v995
      %1060 = vst.msk [vmem:[%s211 + $0xc8] sm:$0xff] %vm906, %v996
      %1061 = vst.msk [vmem:[%s211 + $0xd0] sm:$0xff] %vm906, %v997
      %1062 = vst.msk [vmem:[%s211 + $0xd8] sm:$0xff] %vm906, %v998
      %1063 = vst.msk [vmem:[%s211 + $0xe0] sm:$0xff] %vm906, %v999
      %1064 = vst.msk [vmem:[%s211 + $0xe8] sm:$0xff] %vm906, %v1000
      %1065 = vst.msk [vmem:[%s211 + $0xf0] sm:$0xff] %vm906, %v1001
      %1066 = vst.msk [vmem:[%s211 + $0xf8] sm:$0xff] %vm906, %v1002
      %1067 = vst.msk [vmem:[%s211 + $0x100] sm:$0xff] %vm906, %v1003
      %1068 = vst.msk [vmem:[%s211 + $0x108] sm:$0xff] %vm906, %v1004
      %1069 = vst.msk [vmem:[%s211 + $0x110] sm:$0xff] %vm906, %v1005
      %1070 = vst.msk [vmem:[%s211 + $0x118] sm:$0xff] %vm906, %v1006
      %1071 = vst.msk [vmem:[%s211 + $0x120] sm:$0xff] %vm906, %v1007
      %1072 = vst.msk [vmem:[%s211 + $0x128] sm:$0xff] %vm906, %v1008
      %1073 = vst.msk [vmem:[%s211 + $0x130] sm:$0xff] %vm906, %v1009
      %1074 = vst.msk [vmem:[%s211 + $0x138] sm:$0xff] %vm906, %v1010
      %1075 = vst.msk [vmem:[%s211 + $0x140] sm:$0xff] %vm906, %v1011
      %1076 = vst.msk [vmem:[%s211 + $0x148] sm:$0xff] %vm906, %v1012
      %1077 = vst.msk [vmem:[%s211 + $0x150] sm:$0xff] %vm906, %v1013
      %1078 = vst.msk [vmem:[%s211 + $0x158] sm:$0xff] %vm906, %v1014
      %1079 = vst.msk [vmem:[%s211 + $0x160] sm:$0xff] %vm906, %v1015
      %1080 = vst.msk [vmem:[%s211 + $0x168] sm:$0xff] %vm906, %v1016
      %1081 = vst.msk [vmem:[%s211 + $0x170] sm:$0xff] %vm906, %v1017
      %1082 = vst.msk [vmem:[%s211 + $0x178] sm:$0xff] %vm906, %v1018
      %1083 = vst.msk [vmem:[%s211 + $0x180] sm:$0xff] %vm906, %v1019
      %1084 = vst.msk [vmem:[%s211 + $0x188] sm:$0xff] %vm906, %v1020
      %1085 = vst.msk [vmem:[%s211 + $0x190] sm:$0xff] %vm906, %v1021
      %1086 = vst.msk [vmem:[%s211 + $0x198] sm:$0xff] %vm906, %v1022
      %1087 = vst.msk [vmem:[%s211 + $0x1a0] sm:$0xff] %vm906, %v1023
      %1088 = vst.msk [vmem:[%s211 + $0x1a8] sm:$0xff] %vm906, %v1024
      %1089 = vst.msk [vmem:[%s211 + $0x1b0] sm:$0xff] %vm906, %v1025
      %1090 = vst.msk [vmem:[%s211 + $0x1b8] sm:$0xff] %vm906, %v1026
      %1091 = vst.msk [vmem:[%s211 + $0x1c0] sm:$0xff] %vm906, %v1027
      %1092 = vst.msk [vmem:[%s211 + $0x1c8] sm:$0xff] %vm906, %v1028
      %1093 = vst.msk [vmem:[%s211 + $0x1d0] sm:$0xff] %vm906, %v1029
      %1094 = vst.msk [vmem:[%s211 + $0x1d8] sm:$0xff] %vm906, %v1030
      %1095 = vst.msk [vmem:[%s211 + $0x1e0] sm:$0xff] %vm906, %v1031
      %1096 = vst.msk [vmem:[%s211 + $0x1e8] sm:$0xff] %vm906, %v1032
      %1097 = vst.msk [vmem:[%s211 + $0x1f0] sm:$0xff] %vm906, %v1033
      %1098 = vst.msk [vmem:[%s211 + $0x1f8] sm:$0xff] %vm906, %v1034
      %s1099 = smul.u32 64, %s18
      %p1100 = scmp.lt.s32.totalorder %s1099, 255
      %s1101 = scalar_select %p1100, %s1099, 255
      %p1102 = scmp.lt.s32.totalorder %s19, 0
      %s1103 = scalar_select %p1102, %s19, 0
      %s1104 = sadd.s32 %s1103, %s1101
      %s1105 = smul.addr %s1104, 8
      %s1106 = scalar_lea.vmem %s2, %s1105
      // Predicated region
      $region33: #{_lambda_.26} parent=27 // pred_check
        %p1107 = pneg %p108
      $region34: #{_lambda_.26} parent=27 // pred_check_branch
        %1109 = sbr.rel (%p1107) target = $region36
      $region35: #{_lambda_.26} parent=27 // pred_region
        %s1110 = smul.u32 64, %s18
      $region36: #{_lambda_.26} parent=27 // pred_fallthru
        _
    $region28: #{_lambda_.26} parent=5 // pred_fallthru
      _
    %p1111 = scmp.le.s32.totalorder 2, %s8
    // Predicated region
    $region37: #{_lambda_.26} parent=5 // pred_check
      %p1112 = pneg %p1111
    $region38: #{_lambda_.26} parent=5 // pred_check_branch
      %1114 = sbr.rel (%p1112) target = $region40
    $region39: #{_lambda_.26} parent=5 // pred_region
      %s1115 = ssub.s32 %s8, 2
      // Predicated region
      $region41: #{_lambda_.26} parent=39 // pred_check
        %p1116 = pneg %p114
      $region42: #{_lambda_.26} parent=39 // pred_check_branch
        %1118 = sbr.rel (%p1116) target = $region44
      $region43: #{_lambda_.26} parent=39 // pred_region
        %s1119 = smul.u32 64, %s21
        %p1120 = scmp.lt.s32.totalorder %s1119, 255
        %s1121 = scalar_select %p1120, %s1119, 255
        %p1122 = scmp.lt.s32.totalorder %s22, 0
        %s1123 = scalar_select %p1122, %s22, 0
        %s1124 = sadd.s32 %s1123, %s1121
        %s1125 = smul.addr %s1124, 8
        %s1126 = scalar_lea.vmem %s2, %s1125
      $region44: #{_lambda_.26} parent=39 // pred_fallthru
        _
    $region40: #{_lambda_.26} parent=5 // pred_fallthru
      _
  $region6: #{_lambda_.26} parent=0 // loop_footer
    %s12 = sadd.s32 1, %s8
  $region7: #{_lambda_.26} parent=0 // loop_footer_branch
    %7 = sbr.rel target = $region3
  $region8: #{_lambda_.26} parent=0 // loop_exit
    _

// kernel: _lambda_.27
$region0: #{_lambda_.27}
  #allocation0 [shape = 'u32[]', space=smem, size = 0x4, offset = 0x4, fixed_abs, tag = 'smem constant byte address 0x4 - core index']
  #allocation1 [shape = 'u32[72,128]{1,0:T(1,128)}', space=vmem, size = 0x9000, scoped, tag = 'internal scratch']
  %s0 = inlined_call_operand.vmem [shape: f32[24,1024], index: 0, kind: input, shape index: {}]
  %s1 = inlined_call_operand.vmem [shape: f32[24,1024], index: 1, kind: output, shape index: {}]
  %s2 = sld [smem:[#allocation0]]
  $region14: #{_lambda_.27} parent=0
    _
  %s4 = ssub.s32 1, %s2
  %s5 = scalar_select 0, %s4, %s2
  // Predicated region
  $region2: #{_lambda_.27} parent=0 // pred_check
    _
  $region3: #{_lambda_.27} parent=0 // pred_check_branch
    %7 = sbr.rel (0) target = $region5
  $region4: #{_lambda_.27} parent=0 // pred_region
    _
  $region5: #{_lambda_.27} parent=0 // pred_fallthru
    _
  %v8 = vld [vmem:[%s0] sm:$0xff]
  %v9 = vld [vmem:[%s0 + $0x8] sm:$0xff]
  %v10 = vld [vmem:[%s0 + $0x10] sm:$0xff]
  %v11 = vld [vmem:[%s0 + $0x18] sm:$0xff]
  %v12 = vld [vmem:[%s0 + $0x20] sm:$0xff]
  %v13 = vld [vmem:[%s0 + $0x28] sm:$0xff]
  %v14 = vld [vmem:[%s0 + $0x30] sm:$0xff]
  %v15 = vld [vmem:[%s0 + $0x38] sm:$0xff]
  %v16 = vld [vmem:[%s0 + $0x40] sm:$0xff]
  %v17 = vld [vmem:[%s0 + $0x48] sm:$0xff]
  %v18 = vld [vmem:[%s0 + $0x50] sm:$0xff]
  %v19 = vld [vmem:[%s0 + $0x58] sm:$0xff]
  %v20 = vld [vmem:[%s0 + $0x60] sm:$0xff]
  %v21 = vld [vmem:[%s0 + $0x68] sm:$0xff]
  %v22 = vld [vmem:[%s0 + $0x70] sm:$0xff]
  %v23 = vld [vmem:[%s0 + $0x78] sm:$0xff]
  %v24 = vld [vmem:[%s0 + $0x80] sm:$0xff]
  %v25 = vld [vmem:[%s0 + $0x88] sm:$0xff]
  %v26 = vld [vmem:[%s0 + $0x90] sm:$0xff]
  %v27 = vld [vmem:[%s0 + $0x98] sm:$0xff]
  %v28 = vld [vmem:[%s0 + $0xa0] sm:$0xff]
  %v29 = vld [vmem:[%s0 + $0xa8] sm:$0xff]
  %v30 = vld [vmem:[%s0 + $0xb0] sm:$0xff]
  %v31 = vld [vmem:[%s0 + $0xb8] sm:$0xff]
  %v32 = vtanh.pop %v8
  %v33 = vtanh.pop %v9
  %v34 = vtanh.pop %v10
  %v35 = vtanh.pop %v11
  %v36 = vtanh.pop %v12
  %v37 = vtanh.pop %v13
  %v38 = vtanh.pop %v14
  %v39 = vtanh.pop %v15
  %v40 = vtanh.pop %v16
  %v41 = vtanh.pop %v17
  %v42 = vtanh.pop %v18
  %v43 = vtanh.pop %v19
  %v44 = vtanh.pop %v20
  %v45 = vtanh.pop %v21
  %v46 = vtanh.pop %v22
  %v47 = vtanh.pop %v23
  %v48 = vtanh.pop %v24
  %v49 = vtanh.pop %v25
  %v50 = vtanh.pop %v26
  %v51 = vtanh.pop %v27
  %v52 = vtanh.pop %v28
  %v53 = vtanh.pop %v29
  %v54 = vtanh.pop %v30
  %v55 = vtanh.pop %v31
  %56 = vst [vmem:[%s1] sm:$0xff] %v32
  %57 = vst [vmem:[%s1 + $0x8] sm:$0xff] %v33
  %58 = vst [vmem:[%s1 + $0x10] sm:$0xff] %v34
  %59 = vst [vmem:[%s1 + $0x18] sm:$0xff] %v35
  %60 = vst [vmem:[%s1 + $0x20] sm:$0xff] %v36
  %61 = vst [vmem:[%s1 + $0x28] sm:$0xff] %v37
  %62 = vst [vmem:[%s1 + $0x30] sm:$0xff] %v38
  %63 = vst [vmem:[%s1 + $0x38] sm:$0xff] %v39
  %64 = vst [vmem:[%s1 + $0x40] sm:$0xff] %v40
  %65 = vst [vmem:[%s1 + $0x48] sm:$0xff] %v41
  %66 = vst [vmem:[%s1 + $0x50] sm:$0xff] %v42
  %67 = vst [vmem:[%s1 + $0x58] sm:$0xff] %v43
  %68 = vst [vmem:[%s1 + $0x60] sm:$0xff] %v44
  %69 = vst [vmem:[%s1 + $0x68] sm:$0xff] %v45
  %70 = vst [vmem:[%s1 + $0x70] sm:$0xff] %v46
  %71 = vst [vmem:[%s1 + $0x78] sm:$0xff] %v47
  %72 = vst [vmem:[%s1 + $0x80] sm:$0xff] %v48
  %73 = vst [vmem:[%s1 + $0x88] sm:$0xff] %v49
  %74 = vst [vmem:[%s1 + $0x90] sm:$0xff] %v50
  %75 = vst [vmem:[%s1 + $0x98] sm:$0xff] %v51
  %76 = vst [vmem:[%s1 + $0xa0] sm:$0xff] %v52
  %77 = vst [vmem:[%s1 + $0xa8] sm:$0xff] %v53
  %78 = vst [vmem:[%s1 + $0xb0] sm:$0xff] %v54
  %79 = vst [vmem:[%s1 + $0xb8] sm:$0xff] %v55
  // Predicated region
  $region6: #{_lambda_.27} parent=0 // pred_check
    _
  $region7: #{_lambda_.27} parent=0 // pred_check_branch
    %81 = sbr.rel (0) target = $region9
  $region8: #{_lambda_.27} parent=0 // pred_region
    _
  $region9: #{_lambda_.27} parent=0 // pred_fallthru
    _
  // Predicated region
  $region10: #{_lambda_.27} parent=0 // pred_check
    _
  $region11: #{_lambda_.27} parent=0 // pred_check_branch
    %83 = sbr.rel (0) target = $region13
  $region12: #{_lambda_.27} parent=0 // pred_region
    _
  $region13: #{_lambda_.27} parent=0 // pred_fallthru
    _

</llo_original>
